<compile_context>
chip_gen: v7x
topology: tpu7x:2x2x1
jax: 0.10.0
libtpu: 0.0.40
codegen_flags: <defaults>
</compile_context>

<pallas_src>
import jax
import jax.numpy as jnp
from jax.experimental import pallas as pl
from jax.experimental.pallas import tpu as pltpu

# --- model hyper-parameters (match nn.Module defaults) ---
OBS_LEN = 8
PRED_LEN = 12
FEATURE_DIM = 2
EMBED_DIM = 16
HIDDEN_DIM = 32          # encoder_dim == decoder_dim == 32 (no enc2dec layer)
GATE_DIM = 4 * HIDDEN_DIM


def _scaled_sigmoid(z):
    # sigmoid(x) = 0.5*tanh(0.5*x) + 0.5 ; the 0.5 input scale is pre-folded into the
    # i/f/o gate columns of the weights/biases, so only the output affine remains here.
    return 0.5 * jnp.tanh(z) + 0.5


def _gates_to_hc(gates, c):
    H = HIDDEN_DIM
    i = _scaled_sigmoid(gates[:, 0 * H:1 * H])
    f = _scaled_sigmoid(gates[:, 1 * H:2 * H])
    g = jnp.tanh(gates[:, 2 * H:3 * H])
    o = _scaled_sigmoid(gates[:, 3 * H:4 * H])
    c_new = f * c + i * g
    h_new = o * jnp.tanh(c_new)
    return h_new, c_new


def trajectory_kernel(x_ref, mask_ref,
                      wenc_ref, benc_ref, whhe_ref,
                      wcat_ref, bdec_ref,
                      wout_ref, bout_ref,
                      pred_ref):
    TN = x_ref.shape[0]
    H = HIDDEN_DIM
    G = GATE_DIM

    # bf16 MXU operands; f32 accumulation + f32 recurrent state.
    x_bf = x_ref[...].astype(jnp.bfloat16)
    whh_e = whhe_ref[...]       # (32, 128)  bf16
    wcat = wcat_ref[...]        # (34, 128)  bf16 (decoder input-side fusion)
    wout = wout_ref[...]        # (32, 2)    bf16

    # Hoisted bias broadcasts (JAX does not CSE broadcast_in_dim inside unrolled loops).
    bdec_b = jnp.broadcast_to(bdec_ref[...], (TN, G))
    bout_b = jnp.broadcast_to(bout_ref[...], (TN, FEATURE_DIM))

    # All 8 encoder input-side gate pre-activations in a single MXU matmul:
    # x (TN,16)bf16 @ block-diag folded weight (16, 8*128)bf16 -> f32, + folded bias.
    x_gates = (jnp.dot(x_bf, wenc_ref[...],
                       preferred_element_type=jnp.float32)
               + benc_ref[...])

    # ----- encoder: only the recurrent h-matmul stays on the serial chain -----
    h = jnp.zeros((TN, H), jnp.float32)
    c = jnp.zeros((TN, H), jnp.float32)
    for t in range(OBS_LEN):                                 # static, fully unrolled
        gates = (x_gates[:, t * G:(t + 1) * G]
                 + jnp.dot(h.astype(jnp.bfloat16), whh_e,
                           preferred_element_type=jnp.float32))
        h, c = _gates_to_hc(gates, c)

    # ----- decoder: h carried over, c re-initialized, autoregressive feedback -----
    c = jnp.zeros((TN, H), jnp.float32)
    x_cur = x_bf[:, FEATURE_DIM * (OBS_LEN - 1):FEATURE_DIM * OBS_LEN]  # last obs pos
    for j in range(PRED_LEN):                                # static, fully unrolled
        xh = jnp.concatenate([x_cur, h.astype(jnp.bfloat16)], axis=-1)   # (TN, 34)
        gates = (jnp.dot(xh, wcat, preferred_element_type=jnp.float32)
                 + bdec_b)
        h, c = _gates_to_hc(gates, c)
        x_out = jnp.maximum(
            jnp.dot(h.astype(jnp.bfloat16), wout,
                    preferred_element_type=jnp.float32) + bout_b, 0.0)
        x_out = x_out * mask_ref[:, FEATURE_DIM * j:FEATURE_DIM * (j + 1)]
        pred_ref[:, FEATURE_DIM * j:FEATURE_DIM * (j + 1)] = x_out
        x_cur = x_out.astype(jnp.bfloat16)


_PARAM_ORDER = ("wee", "bee", "wde", "bde",
                "wih_e", "whh_e", "be",
                "wih_d", "whh_d", "bd",
                "wout", "bout")


def make_params(key):
    """Deterministic, PyTorch-style uniform init (biases folded: b_ih + b_hh)."""
    ks = jax.random.split(key, len(_PARAM_ORDER))

    def unif(k, shape, fan_in):
        bound = 1.0 / float(jnp.sqrt(jnp.asarray(fan_in, jnp.float32)))
        return jax.random.uniform(k, shape, jnp.float32, -bound, bound)

    return {
        # encoder_embedding / decoder_embedding : Linear(2 -> 16)
        "wee": unif(ks[0], (FEATURE_DIM, EMBED_DIM), FEATURE_DIM),
        "bee": unif(ks[1], (1, EMBED_DIM), FEATURE_DIM),
        "wde": unif(ks[2], (FEATURE_DIM, EMBED_DIM), FEATURE_DIM),
        "bde": unif(ks[3], (1, EMBED_DIM), FEATURE_DIM),
        # encoder LSTM(16 -> 32): W_ih^T (16,128), W_hh^T (32,128), bias (1,128)
        "wih_e": unif(ks[4], (EMBED_DIM, GATE_DIM), HIDDEN_DIM),
        "whh_e": unif(ks[5], (HIDDEN_DIM, GATE_DIM), HIDDEN_DIM),
        "be": unif(ks[6], (1, GATE_DIM), HIDDEN_DIM),
        # decoder LSTM(16 -> 32)
        "wih_d": unif(ks[7], (EMBED_DIM, GATE_DIM), HIDDEN_DIM),
        "whh_d": unif(ks[8], (HIDDEN_DIM, GATE_DIM), HIDDEN_DIM),
        "bd": unif(ks[9], (1, GATE_DIM), HIDDEN_DIM),
        # out: Linear(32 -> 2) + ReLU
        "wout": unif(ks[10], (HIDDEN_DIM, FEATURE_DIM), HIDDEN_DIM),
        "bout": unif(ks[11], (1, FEATURE_DIM), HIDDEN_DIM),
    }


def _fold_params(params):
    """Fold embedding Linears into the LSTM input weights, build the block-diagonal
    encoder weight (all 8 obs steps in one matmul), fold the 0.5 sigmoid input scale
    into the i/f/o gate columns, fuse the decoder input-side weights, cast to bf16."""
    H = HIDDEN_DIM
    # sigmoid(z) = 0.5*tanh(0.5*z)+0.5 -> fold 0.5 into i/f/o columns (g stays 1.0).
    scale = jnp.concatenate([jnp.full((H,), 0.5, jnp.float32),
                             jnp.full((H,), 0.5, jnp.float32),
                             jnp.ones((H,), jnp.float32),
                             jnp.full((H,), 0.5, jnp.float32)])[None, :]   # (1, 4H)

    w_fold_e = jnp.dot(params["wee"], params["wih_e"]) * scale                  # (2, 4H)
    b_fold_e = (jnp.dot(params["bee"], params["wih_e"]) + params["be"]) * scale  # (1, 4H)
    w_fold_d = jnp.dot(params["wde"], params["wih_d"]) * scale                  # (2, 4H)
    b_fold_d = (jnp.dot(params["bde"], params["wih_d"]) + params["bd"]) * scale  # (1, 4H)
    whh_e = params["whh_e"] * scale                                             # (32, 4H)
    whh_d = params["whh_d"] * scale                                             # (32, 4H)

    wenc_all = jnp.zeros((OBS_LEN * FEATURE_DIM, OBS_LEN * GATE_DIM), jnp.float32)
    for t in range(OBS_LEN):
        wenc_all = wenc_all.at[FEATURE_DIM * t:FEATURE_DIM * (t + 1),
                               GATE_DIM * t:GATE_DIM * (t + 1)].set(w_fold_e)
    benc_all = jnp.tile(b_fold_e, (1, OBS_LEN))                                 # (1, 8*4H)

    # Decoder fusion: gates = concat([x_cur, h], -1) @ vstack(w_fold_d, whh_d) + b.
    wcat_d = jnp.concatenate([w_fold_d, whh_d], axis=0)                         # (34, 4H)

    bf16 = jnp.bfloat16
    return (wenc_all.astype(bf16), benc_all,
            whh_e.astype(bf16),
            wcat_d.astype(bf16), b_fold_d,
            params["wout"].astype(bf16), params["bout"])


def _round_up(n, m):
    return ((n + m - 1) // m) * m


def trajectory_generator_forward(x, pedestrians, dmat, bmat, hmat,
                                 input_mask, output_mask, params,
                                 mean=None, var=None, block_rows=1024):
    """Mirrors TrajectoryGenerator.forward. In the non-spatial / non-temporal /
    non-generative configuration, dmat/bmat/hmat/input_mask/mean/var do not
    influence the output, so only x and output_mask reach the kernel."""
    del pedestrians, dmat, bmat, hmat, input_mask, mean, var
    B, P, T, F = x.shape
    N = B * P

    # Lane-dense layouts (feature/time on the lane axis).
    x_flat = x.reshape(N, T * F).astype(jnp.float32)                       # (N, 16)
    mask_flat = jnp.repeat(
        output_mask.reshape(N, PRED_LEN).astype(jnp.float32),
        FEATURE_DIM, axis=-1)                                              # (N, 24)

    weights = _fold_params(params)

    # Row-block size: large blocks (serial-chain amortization), but guarantee >=2
    # grid blocks when N allows so the "parallel" axis shards across both v7x TCs.
    rows_half = _round_up(max(1, pl.cdiv(N, 2)), 8)
    TN = max(8, min(block_rows, rows_half))
    n_blocks = pl.cdiv(N, TN)
    N_pad = n_blocks * TN
    if N_pad != N:
        x_flat = jnp.pad(x_flat, ((0, N_pad - N), (0, 0)))
        mask_flat = jnp.pad(mask_flat, ((0, N_pad - N), (0, 0)))

    def row_block(cols):
        return pl.BlockSpec((TN, cols), lambda i: (i, 0))

    def full_block(w):
        return pl.BlockSpec(w.shape, lambda i: (0,) * w.ndim)

    in_specs = ([row_block(T * F), row_block(PRED_LEN * FEATURE_DIM)]
                + [full_block(w) for w in weights])
    out_spec = row_block(PRED_LEN * FEATURE_DIM)

    flops_per_row = 2 * (T * F * OBS_LEN * GATE_DIM
                         + OBS_LEN * HIDDEN_DIM * GATE_DIM
                         + PRED_LEN * ((FEATURE_DIM + HIDDEN_DIM) * GATE_DIM
                                       + HIDDEN_DIM * FEATURE_DIM))
    trans_per_row = (OBS_LEN + PRED_LEN) * 5 * HIDDEN_DIM
    weight_bytes = sum(int(w.size) * w.dtype.itemsize for w in weights)
    bytes_accessed = int(N_pad) * (T * F + 2 * PRED_LEN * FEATURE_DIM) * 4 + weight_bytes

    pred = pl.pallas_call(
        trajectory_kernel,
        out_shape=jax.ShapeDtypeStruct((N_pad, PRED_LEN * FEATURE_DIM), jnp.float32),
        grid_spec=pltpu.PrefetchScalarGridSpec(
            num_scalar_prefetch=0,
            grid=(n_blocks,),
            in_specs=in_specs,
            out_specs=out_spec),
        compiler_params=pltpu.CompilerParams(
            dimension_semantics=("parallel",),
            vmem_limit_bytes=48 * 1024 * 1024),
        cost_estimate=pl.CostEstimate(
            flops=int(N_pad) * flops_per_row,
            transcendentals=int(N_pad) * trans_per_row,
            bytes_accessed=int(bytes_accessed)),
    )(x_flat, mask_flat, *weights)

    return pred[:N].reshape(B, P, PRED_LEN, FEATURE_DIM)


def reference_forward(x, output_mask, params):
    """Pure-JAX f32 reference mirroring the PyTorch forward (vanilla config, unfolded)."""
    B, P, T, F = x.shape
    N = B * P
    xf = x.reshape(N, T, F).astype(jnp.float32)
    mf = output_mask.reshape(N, PRED_LEN).astype(jnp.float32)

    def step(emb, h, c, wih, whh, b):
        gates = emb @ wih + h @ whh + b
        H = HIDDEN_DIM
        i = jax.nn.sigmoid(gates[:, :H])
        f = jax.nn.sigmoid(gates[:, H:2 * H])
        g = jnp.tanh(gates[:, 2 * H:3 * H])
        o = jax.nn.sigmoid(gates[:, 3 * H:])
        c = f * c + i * g
        return o * jnp.tanh(c), c

    h = jnp.zeros((N, HIDDEN_DIM), jnp.float32)
    c = jnp.zeros((N, HIDDEN_DIM), jnp.float32)
    for t in range(OBS_LEN):
        emb = xf[:, t, :] @ params["wee"] + params["bee"]
        h, c = step(emb, h, c, params["wih_e"], params["whh_e"], params["be"])
    c = jnp.zeros((N, HIDDEN_DIM), jnp.float32)
    xc = xf[:, -1, :]
    preds = []
    for j in range(PRED_LEN):
        emb = xc @ params["wde"] + params["bde"]
        h, c = step(emb, h, c, params["wih_d"], params["whh_d"], params["bd"])
        xo = jnp.maximum(h @ params["wout"] + params["bout"], 0.0)
        xo = xo * mf[:, j][:, None]
        preds.append(xo)
        xc = xo
    return jnp.stack(preds, axis=1).reshape(B, P, PRED_LEN, 2)


if __name__ == "__main__":
    key = jax.random.PRNGKey(0)
    k_x, k_mask, k_params, k_x2, k_mask2 = jax.random.split(key, 5)

    B, P = 2, 4   # batch_size, num_pedestrians
    x = jax.random.normal(k_x, (B, P, OBS_LEN, FEATURE_DIM), jnp.float32)
    dmat = jnp.zeros((B, P, OBS_LEN, P), jnp.float32)
    bmat = jnp.zeros((B, P, OBS_LEN, P), jnp.float32)
    hmat = jnp.zeros((B, P, OBS_LEN, P), jnp.float32)
    input_mask = jnp.ones((B, P, OBS_LEN), jnp.float32)
    output_mask = (jax.random.uniform(k_mask, (B, P, PRED_LEN)) > 0.1).astype(jnp.float32)
    mean = jnp.zeros((B, 1, FEATURE_DIM), jnp.float32)
    var = jnp.ones((B, 1, FEATURE_DIM), jnp.float32)

    params = make_params(k_params)

    pred = trajectory_generator_forward(
        x, P, dmat, bmat, hmat, input_mask, output_mask, params, mean=mean, var=var)
    pred = jax.block_until_ready(pred)

    ref = reference_forward(x, output_mask, params)
    assert pred.shape == (B, P, PRED_LEN, 2)
    assert bool(jnp.all(jnp.isfinite(pred)))
    # Tolerance widened vs the all-f32 version: bf16 MXU operands over the 20-step
    # recurrence (accumulation stays f32); still tight enough to catch structural bugs.
    assert jnp.allclose(pred, ref, rtol=3e-2, atol=3e-2), (
        float(jnp.max(jnp.abs(pred - ref))))

    # Second check: exercises the multi-block grid + row-padding path.
    B2, P2 = 3, 5   # N = 15 -> TN = 8, grid = (2,), 1 padded row
    x2 = jax.random.normal(k_x2, (B2, P2, OBS_LEN, FEATURE_DIM), jnp.float32)
    om2 = (jax.random.uniform(k_mask2, (B2, P2, PRED_LEN)) > 0.1).astype(jnp.float32)
    pred2 = trajectory_generator_forward(
        x2, P2,
        jnp.zeros((B2, P2, OBS_LEN, P2), jnp.float32),
        jnp.zeros((B2, P2, OBS_LEN, P2), jnp.float32),
        jnp.zeros((B2, P2, OBS_LEN, P2), jnp.float32),
        jnp.ones((B2, P2, OBS_LEN), jnp.float32), om2, params,
        mean=jnp.zeros((B2, 1, FEATURE_DIM), jnp.float32),
        var=jnp.ones((B2, 1, FEATURE_DIM), jnp.float32),
        block_rows=8)
    pred2 = jax.block_until_ready(pred2)
    ref2 = reference_forward(x2, om2, params)
    assert jnp.allclose(pred2, ref2, rtol=3e-2, atol=3e-2), (
        float(jnp.max(jnp.abs(pred2 - ref2))))

    print("KERNEL_OK")
</pallas_src>

<mosaic_0001>
module attributes {stable_mosaic.version = 11 : i64} {
  func.func @trajectory_kernel(%arg0: i32, %arg1: memref<8x16xf32, #tpu.memory_space<vmem>>, %arg2: memref<8x24xf32, #tpu.memory_space<vmem>>, %arg3: memref<16x1024xbf16, #tpu.memory_space<vmem>>, %arg4: memref<1x1024xf32, #tpu.memory_space<vmem>>, %arg5: memref<32x128xbf16, #tpu.memory_space<vmem>>, %arg6: memref<34x128xbf16, #tpu.memory_space<vmem>>, %arg7: memref<1x128xf32, #tpu.memory_space<vmem>>, %arg8: memref<32x2xbf16, #tpu.memory_space<vmem>>, %arg9: memref<1x2xf32, #tpu.memory_space<vmem>>, %arg10: memref<8x24xf32, #tpu.memory_space<vmem>>) attributes {dimension_semantics = [#tpu.dimension_semantics<parallel>], iteration_bounds = array<i64: 1>, scalar_prefetch = 0 : i64, scratch_operands = 0 : i64, tpu.core_type = #tpu.core_type<tc>, window_params = [{transform_indices = @transform_0, window_bounds = array<i64: 8, 16>}, {transform_indices = @transform_1, window_bounds = array<i64: 8, 24>}, {pipeline_mode = #tpu.pipeline_mode<synchronous>, transform_indices = @transform_2, window_bounds = array<i64: 16, 1024>}, {pipeline_mode = #tpu.pipeline_mode<synchronous>, transform_indices = @transform_3, window_bounds = array<i64: 1, 1024>}, {pipeline_mode = #tpu.pipeline_mode<synchronous>, transform_indices = @transform_4, window_bounds = array<i64: 32, 128>}, {pipeline_mode = #tpu.pipeline_mode<synchronous>, transform_indices = @transform_5, window_bounds = array<i64: 34, 128>}, {pipeline_mode = #tpu.pipeline_mode<synchronous>, transform_indices = @transform_6, window_bounds = array<i64: 1, 128>}, {pipeline_mode = #tpu.pipeline_mode<synchronous>, transform_indices = @transform_7, window_bounds = array<i64: 32, 2>}, {pipeline_mode = #tpu.pipeline_mode<synchronous>, transform_indices = @transform_8, window_bounds = array<i64: 1, 2>}, {transform_indices = @transform_9, window_bounds = array<i64: 8, 24>}]} {
    %c0 = arith.constant 0 : index
    %c0_0 = arith.constant 0 : index
    %0 = vector.load %arg1[%c0, %c0_0] : memref<8x16xf32, #tpu.memory_space<vmem>>, vector<8x16xf32>
    %1 = arith.truncf %0 : vector<8x16xf32> to vector<8x16xbf16>
    %c0_1 = arith.constant 0 : index
    %c0_2 = arith.constant 0 : index
    %2 = vector.load %arg5[%c0_1, %c0_2] : memref<32x128xbf16, #tpu.memory_space<vmem>>, vector<32x128xbf16>
    %c0_3 = arith.constant 0 : index
    %c0_4 = arith.constant 0 : index
    %3 = vector.load %arg6[%c0_3, %c0_4] : memref<34x128xbf16, #tpu.memory_space<vmem>>, vector<34x128xbf16>
    %c0_5 = arith.constant 0 : index
    %c0_6 = arith.constant 0 : index
    %4 = vector.load %arg8[%c0_5, %c0_6] : memref<32x2xbf16, #tpu.memory_space<vmem>>, vector<32x2xbf16>
    %c0_7 = arith.constant 0 : index
    %c0_8 = arith.constant 0 : index
    %5 = vector.load %arg7[%c0_7, %c0_8] : memref<1x128xf32, #tpu.memory_space<vmem>>, vector<1x128xf32>
    %6 = vector.shape_cast %5 : vector<1x128xf32> to vector<1x128xf32>
    %7 = vector.broadcast %6 : vector<1x128xf32> to vector<8x128xf32>
    %c0_9 = arith.constant 0 : index
    %c0_10 = arith.constant 0 : index
    %8 = vector.load %arg9[%c0_9, %c0_10] : memref<1x2xf32, #tpu.memory_space<vmem>>, vector<1x2xf32>
    %9 = vector.shape_cast %8 : vector<1x2xf32> to vector<1x2xf32>
    %10 = vector.broadcast %9 : vector<1x2xf32> to vector<8x2xf32>
    %c0_11 = arith.constant 0 : index
    %c0_12 = arith.constant 0 : index
    %11 = vector.load %arg3[%c0_11, %c0_12] : memref<16x1024xbf16, #tpu.memory_space<vmem>>, vector<16x1024xbf16>
    %cst = arith.constant dense<0.000000e+00> : vector<8x1024xf32>
    %12 = tpu.matmul %1, %11, %cst {dimension_numbers = #tpu.dot_dimension_numbers<[1], [0], [0], [1], [0, 0, 1, 1], [], []>} : vector<8x16xbf16>, vector<16x1024xbf16>, vector<8x1024xf32> -> vector<8x1024xf32>
    %c0_13 = arith.constant 0 : index
    %c0_14 = arith.constant 0 : index
    %13 = vector.load %arg4[%c0_13, %c0_14] : memref<1x1024xf32, #tpu.memory_space<vmem>>, vector<1x1024xf32>
    %14 = vector.broadcast %13 : vector<1x1024xf32> to vector<8x1024xf32>
    %15 = arith.addf %12, %14 : vector<8x1024xf32>
    %cst_15 = arith.constant 0.000000e+00 : f32
    %16 = vector.broadcast %cst_15 : f32 to vector<8x32xf32>
    %cst_16 = arith.constant 0.000000e+00 : f32
    %17 = vector.broadcast %cst_16 : f32 to vector<8x32xf32>
    %18 = vector.extract_strided_slice %15 {offsets = [0, 0], sizes = [8, 128], strides = [1, 1]} : vector<8x1024xf32> to vector<8x128xf32>
    %19 = arith.truncf %16 : vector<8x32xf32> to vector<8x32xbf16>
    %cst_17 = arith.constant dense<0.000000e+00> : vector<8x128xf32>
    %20 = tpu.matmul %19, %2, %cst_17 {dimension_numbers = #tpu.dot_dimension_numbers<[1], [0], [0], [1], [0, 0, 1, 1], [], []>} : vector<8x32xbf16>, vector<32x128xbf16>, vector<8x128xf32> -> vector<8x128xf32>
    %21 = arith.addf %18, %20 : vector<8x128xf32>
    %22 = vector.extract_strided_slice %21 {offsets = [0, 0], sizes = [8, 32], strides = [1, 1]} : vector<8x128xf32> to vector<8x32xf32>
    %23 = math.tanh %22 : vector<8x32xf32>
    %cst_18 = arith.constant 5.000000e-01 : f32
    %24 = vector.broadcast %cst_18 : f32 to vector<8x32xf32>
    %25 = arith.mulf %24, %23 : vector<8x32xf32>
    %cst_19 = arith.constant 5.000000e-01 : f32
    %26 = vector.broadcast %cst_19 : f32 to vector<8x32xf32>
    %27 = arith.addf %25, %26 : vector<8x32xf32>
    %28 = vector.extract_strided_slice %21 {offsets = [0, 32], sizes = [8, 32], strides = [1, 1]} : vector<8x128xf32> to vector<8x32xf32>
    %29 = math.tanh %28 : vector<8x32xf32>
    %cst_20 = arith.constant 5.000000e-01 : f32
    %30 = vector.broadcast %cst_20 : f32 to vector<8x32xf32>
    %31 = arith.mulf %30, %29 : vector<8x32xf32>
    %cst_21 = arith.constant 5.000000e-01 : f32
    %32 = vector.broadcast %cst_21 : f32 to vector<8x32xf32>
    %33 = arith.addf %31, %32 : vector<8x32xf32>
    %34 = vector.extract_strided_slice %21 {offsets = [0, 64], sizes = [8, 32], strides = [1, 1]} : vector<8x128xf32> to vector<8x32xf32>
    %35 = math.tanh %34 : vector<8x32xf32>
    %36 = vector.extract_strided_slice %21 {offsets = [0, 96], sizes = [8, 32], strides = [1, 1]} : vector<8x128xf32> to vector<8x32xf32>
    %37 = math.tanh %36 : vector<8x32xf32>
    %cst_22 = arith.constant 5.000000e-01 : f32
    %38 = vector.broadcast %cst_22 : f32 to vector<8x32xf32>
    %39 = arith.mulf %38, %37 : vector<8x32xf32>
    %cst_23 = arith.constant 5.000000e-01 : f32
    %40 = vector.broadcast %cst_23 : f32 to vector<8x32xf32>
    %41 = arith.addf %39, %40 : vector<8x32xf32>
    %42 = arith.mulf %33, %17 : vector<8x32xf32>
    %43 = arith.mulf %27, %35 : vector<8x32xf32>
    %44 = arith.addf %42, %43 : vector<8x32xf32>
    %45 = math.tanh %44 : vector<8x32xf32>
    %46 = arith.mulf %41, %45 : vector<8x32xf32>
    %47 = vector.extract_strided_slice %15 {offsets = [0, 128], sizes = [8, 128], strides = [1, 1]} : vector<8x1024xf32> to vector<8x128xf32>
    %48 = arith.truncf %46 : vector<8x32xf32> to vector<8x32xbf16>
    %cst_24 = arith.constant dense<0.000000e+00> : vector<8x128xf32>
    %49 = tpu.matmul %48, %2, %cst_24 {dimension_numbers = #tpu.dot_dimension_numbers<[1], [0], [0], [1], [0, 0, 1, 1], [], []>} : vector<8x32xbf16>, vector<32x128xbf16>, vector<8x128xf32> -> vector<8x128xf32>
    %50 = arith.addf %47, %49 : vector<8x128xf32>
    %51 = vector.extract_strided_slice %50 {offsets = [0, 0], sizes = [8, 32], strides = [1, 1]} : vector<8x128xf32> to vector<8x32xf32>
    %52 = math.tanh %51 : vector<8x32xf32>
    %cst_25 = arith.constant 5.000000e-01 : f32
    %53 = vector.broadcast %cst_25 : f32 to vector<8x32xf32>
    %54 = arith.mulf %53, %52 : vector<8x32xf32>
    %cst_26 = arith.constant 5.000000e-01 : f32
    %55 = vector.broadcast %cst_26 : f32 to vector<8x32xf32>
    %56 = arith.addf %54, %55 : vector<8x32xf32>
    %57 = vector.extract_strided_slice %50 {offsets = [0, 32], sizes = [8, 32], strides = [1, 1]} : vector<8x128xf32> to vector<8x32xf32>
    %58 = math.tanh %57 : vector<8x32xf32>
    %cst_27 = arith.constant 5.000000e-01 : f32
    %59 = vector.broadcast %cst_27 : f32 to vector<8x32xf32>
    %60 = arith.mulf %59, %58 : vector<8x32xf32>
    %cst_28 = arith.constant 5.000000e-01 : f32
    %61 = vector.broadcast %cst_28 : f32 to vector<8x32xf32>
    %62 = arith.addf %60, %61 : vector<8x32xf32>
    %63 = vector.extract_strided_slice %50 {offsets = [0, 64], sizes = [8, 32], strides = [1, 1]} : vector<8x128xf32> to vector<8x32xf32>
    %64 = math.tanh %63 : vector<8x32xf32>
    %65 = vector.extract_strided_slice %50 {offsets = [0, 96], sizes = [8, 32], strides = [1, 1]} : vector<8x128xf32> to vector<8x32xf32>
    %66 = math.tanh %65 : vector<8x32xf32>
    %cst_29 = arith.constant 5.000000e-01 : f32
    %67 = vector.broadcast %cst_29 : f32 to vector<8x32xf32>
    %68 = arith.mulf %67, %66 : vector<8x32xf32>
    %cst_30 = arith.constant 5.000000e-01 : f32
    %69 = vector.broadcast %cst_30 : f32 to vector<8x32xf32>
    %70 = arith.addf %68, %69 : vector<8x32xf32>
    %71 = arith.mulf %62, %44 : vector<8x32xf32>
    %72 = arith.mulf %56, %64 : vector<8x32xf32>
    %73 = arith.addf %71, %72 : vector<8x32xf32>
    %74 = math.tanh %73 : vector<8x32xf32>
    %75 = arith.mulf %70, %74 : vector<8x32xf32>
    %76 = vector.extract_strided_slice %15 {offsets = [0, 256], sizes = [8, 128], strides = [1, 1]} : vector<8x1024xf32> to vector<8x128xf32>
    %77 = arith.truncf %75 : vector<8x32xf32> to vector<8x32xbf16>
    %cst_31 = arith.constant dense<0.000000e+00> : vector<8x128xf32>
    %78 = tpu.matmul %77, %2, %cst_31 {dimension_numbers = #tpu.dot_dimension_numbers<[1], [0], [0], [1], [0, 0, 1, 1], [], []>} : vector<8x32xbf16>, vector<32x128xbf16>, vector<8x128xf32> -> vector<8x128xf32>
    %79 = arith.addf %76, %78 : vector<8x128xf32>
    %80 = vector.extract_strided_slice %79 {offsets = [0, 0], sizes = [8, 32], strides = [1, 1]} : vector<8x128xf32> to vector<8x32xf32>
    %81 = math.tanh %80 : vector<8x32xf32>
    %cst_32 = arith.constant 5.000000e-01 : f32
    %82 = vector.broadcast %cst_32 : f32 to vector<8x32xf32>
    %83 = arith.mulf %82, %81 : vector<8x32xf32>
    %cst_33 = arith.constant 5.000000e-01 : f32
    %84 = vector.broadcast %cst_33 : f32 to vector<8x32xf32>
    %85 = arith.addf %83, %84 : vector<8x32xf32>
    %86 = vector.extract_strided_slice %79 {offsets = [0, 32], sizes = [8, 32], strides = [1, 1]} : vector<8x128xf32> to vector<8x32xf32>
    %87 = math.tanh %86 : vector<8x32xf32>
    %cst_34 = arith.constant 5.000000e-01 : f32
    %88 = vector.broadcast %cst_34 : f32 to vector<8x32xf32>
    %89 = arith.mulf %88, %87 : vector<8x32xf32>
    %cst_35 = arith.constant 5.000000e-01 : f32
    %90 = vector.broadcast %cst_35 : f32 to vector<8x32xf32>
    %91 = arith.addf %89, %90 : vector<8x32xf32>
    %92 = vector.extract_strided_slice %79 {offsets = [0, 64], sizes = [8, 32], strides = [1, 1]} : vector<8x128xf32> to vector<8x32xf32>
    %93 = math.tanh %92 : vector<8x32xf32>
    %94 = vector.extract_strided_slice %79 {offsets = [0, 96], sizes = [8, 32], strides = [1, 1]} : vector<8x128xf32> to vector<8x32xf32>
    %95 = math.tanh %94 : vector<8x32xf32>
    %cst_36 = arith.constant 5.000000e-01 : f32
    %96 = vector.broadcast %cst_36 : f32 to vector<8x32xf32>
    %97 = arith.mulf %96, %95 : vector<8x32xf32>
    %cst_37 = arith.constant 5.000000e-01 : f32
    %98 = vector.broadcast %cst_37 : f32 to vector<8x32xf32>
    %99 = arith.addf %97, %98 : vector<8x32xf32>
    %100 = arith.mulf %91, %73 : vector<8x32xf32>
    %101 = arith.mulf %85, %93 : vector<8x32xf32>
    %102 = arith.addf %100, %101 : vector<8x32xf32>
    %103 = math.tanh %102 : vector<8x32xf32>
    %104 = arith.mulf %99, %103 : vector<8x32xf32>
    %105 = vector.extract_strided_slice %15 {offsets = [0, 384], sizes = [8, 128], strides = [1, 1]} : vector<8x1024xf32> to vector<8x128xf32>
    %106 = arith.truncf %104 : vector<8x32xf32> to vector<8x32xbf16>
    %cst_38 = arith.constant dense<0.000000e+00> : vector<8x128xf32>
    %107 = tpu.matmul %106, %2, %cst_38 {dimension_numbers = #tpu.dot_dimension_numbers<[1], [0], [0], [1], [0, 0, 1, 1], [], []>} : vector<8x32xbf16>, vector<32x128xbf16>, vector<8x128xf32> -> vector<8x128xf32>
    %108 = arith.addf %105, %107 : vector<8x128xf32>
    %109 = vector.extract_strided_slice %108 {offsets = [0, 0], sizes = [8, 32], strides = [1, 1]} : vector<8x128xf32> to vector<8x32xf32>
    %110 = math.tanh %109 : vector<8x32xf32>
    %cst_39 = arith.constant 5.000000e-01 : f32
    %111 = vector.broadcast %cst_39 : f32 to vector<8x32xf32>
    %112 = arith.mulf %111, %110 : vector<8x32xf32>
    %cst_40 = arith.constant 5.000000e-01 : f32
    %113 = vector.broadcast %cst_40 : f32 to vector<8x32xf32>
    %114 = arith.addf %112, %113 : vector<8x32xf32>
    %115 = vector.extract_strided_slice %108 {offsets = [0, 32], sizes = [8, 32], strides = [1, 1]} : vector<8x128xf32> to vector<8x32xf32>
    %116 = math.tanh %115 : vector<8x32xf32>
    %cst_41 = arith.constant 5.000000e-01 : f32
    %117 = vector.broadcast %cst_41 : f32 to vector<8x32xf32>
    %118 = arith.mulf %117, %116 : vector<8x32xf32>
    %cst_42 = arith.constant 5.000000e-01 : f32
    %119 = vector.broadcast %cst_42 : f32 to vector<8x32xf32>
    %120 = arith.addf %118, %119 : vector<8x32xf32>
    %121 = vector.extract_strided_slice %108 {offsets = [0, 64], sizes = [8, 32], strides = [1, 1]} : vector<8x128xf32> to vector<8x32xf32>
    %122 = math.tanh %121 : vector<8x32xf32>
    %123 = vector.extract_strided_slice %108 {offsets = [0, 96], sizes = [8, 32], strides = [1, 1]} : vector<8x128xf32> to vector<8x32xf32>
    %124 = math.tanh %123 : vector<8x32xf32>
    %cst_43 = arith.constant 5.000000e-01 : f32
    %125 = vector.broadcast %cst_43 : f32 to vector<8x32xf32>
    %126 = arith.mulf %125, %124 : vector<8x32xf32>
    %cst_44 = arith.constant 5.000000e-01 : f32
    %127 = vector.broadcast %cst_44 : f32 to vector<8x32xf32>
    %128 = arith.addf %126, %127 : vector<8x32xf32>
    %129 = arith.mulf %120, %102 : vector<8x32xf32>
    %130 = arith.mulf %114, %122 : vector<8x32xf32>
    %131 = arith.addf %129, %130 : vector<8x32xf32>
    %132 = math.tanh %131 : vector<8x32xf32>
    %133 = arith.mulf %128, %132 : vector<8x32xf32>
    %134 = vector.extract_strided_slice %15 {offsets = [0, 512], sizes = [8, 128], strides = [1, 1]} : vector<8x1024xf32> to vector<8x128xf32>
    %135 = arith.truncf %133 : vector<8x32xf32> to vector<8x32xbf16>
    %cst_45 = arith.constant dense<0.000000e+00> : vector<8x128xf32>
    %136 = tpu.matmul %135, %2, %cst_45 {dimension_numbers = #tpu.dot_dimension_numbers<[1], [0], [0], [1], [0, 0, 1, 1], [], []>} : vector<8x32xbf16>, vector<32x128xbf16>, vector<8x128xf32> -> vector<8x128xf32>
    %137 = arith.addf %134, %136 : vector<8x128xf32>
    %138 = vector.extract_strided_slice %137 {offsets = [0, 0], sizes = [8, 32], strides = [1, 1]} : vector<8x128xf32> to vector<8x32xf32>
    %139 = math.tanh %138 : vector<8x32xf32>
    %cst_46 = arith.constant 5.000000e-01 : f32
    %140 = vector.broadcast %cst_46 : f32 to vector<8x32xf32>
    %141 = arith.mulf %140, %139 : vector<8x32xf32>
    %cst_47 = arith.constant 5.000000e-01 : f32
    %142 = vector.broadcast %cst_47 : f32 to vector<8x32xf32>
    %143 = arith.addf %141, %142 : vector<8x32xf32>
    %144 = vector.extract_strided_slice %137 {offsets = [0, 32], sizes = [8, 32], strides = [1, 1]} : vector<8x128xf32> to vector<8x32xf32>
    %145 = math.tanh %144 : vector<8x32xf32>
    %cst_48 = arith.constant 5.000000e-01 : f32
    %146 = vector.broadcast %cst_48 : f32 to vector<8x32xf32>
    %147 = arith.mulf %146, %145 : vector<8x32xf32>
    %cst_49 = arith.constant 5.000000e-01 : f32
    %148 = vector.broadcast %cst_49 : f32 to vector<8x32xf32>
    %149 = arith.addf %147, %148 : vector<8x32xf32>
    %150 = vector.extract_strided_slice %137 {offsets = [0, 64], sizes = [8, 32], strides = [1, 1]} : vector<8x128xf32> to vector<8x32xf32>
    %151 = math.tanh %150 : vector<8x32xf32>
    %152 = vector.extract_strided_slice %137 {offsets = [0, 96], sizes = [8, 32], strides = [1, 1]} : vector<8x128xf32> to vector<8x32xf32>
    %153 = math.tanh %152 : vector<8x32xf32>
    %cst_50 = arith.constant 5.000000e-01 : f32
    %154 = vector.broadcast %cst_50 : f32 to vector<8x32xf32>
    %155 = arith.mulf %154, %153 : vector<8x32xf32>
    %cst_51 = arith.constant 5.000000e-01 : f32
    %156 = vector.broadcast %cst_51 : f32 to vector<8x32xf32>
    %157 = arith.addf %155, %156 : vector<8x32xf32>
    %158 = arith.mulf %149, %131 : vector<8x32xf32>
    %159 = arith.mulf %143, %151 : vector<8x32xf32>
    %160 = arith.addf %158, %159 : vector<8x32xf32>
    %161 = math.tanh %160 : vector<8x32xf32>
    %162 = arith.mulf %157, %161 : vector<8x32xf32>
    %163 = vector.extract_strided_slice %15 {offsets = [0, 640], sizes = [8, 128], strides = [1, 1]} : vector<8x1024xf32> to vector<8x128xf32>
    %164 = arith.truncf %162 : vector<8x32xf32> to vector<8x32xbf16>
    %cst_52 = arith.constant dense<0.000000e+00> : vector<8x128xf32>
    %165 = tpu.matmul %164, %2, %cst_52 {dimension_numbers = #tpu.dot_dimension_numbers<[1], [0], [0], [1], [0, 0, 1, 1], [], []>} : vector<8x32xbf16>, vector<32x128xbf16>, vector<8x128xf32> -> vector<8x128xf32>
    %166 = arith.addf %163, %165 : vector<8x128xf32>
    %167 = vector.extract_strided_slice %166 {offsets = [0, 0], sizes = [8, 32], strides = [1, 1]} : vector<8x128xf32> to vector<8x32xf32>
    %168 = math.tanh %167 : vector<8x32xf32>
    %cst_53 = arith.constant 5.000000e-01 : f32
    %169 = vector.broadcast %cst_53 : f32 to vector<8x32xf32>
    %170 = arith.mulf %169, %168 : vector<8x32xf32>
    %cst_54 = arith.constant 5.000000e-01 : f32
    %171 = vector.broadcast %cst_54 : f32 to vector<8x32xf32>
    %172 = arith.addf %170, %171 : vector<8x32xf32>
    %173 = vector.extract_strided_slice %166 {offsets = [0, 32], sizes = [8, 32], strides = [1, 1]} : vector<8x128xf32> to vector<8x32xf32>
    %174 = math.tanh %173 : vector<8x32xf32>
    %cst_55 = arith.constant 5.000000e-01 : f32
    %175 = vector.broadcast %cst_55 : f32 to vector<8x32xf32>
    %176 = arith.mulf %175, %174 : vector<8x32xf32>
    %cst_56 = arith.constant 5.000000e-01 : f32
    %177 = vector.broadcast %cst_56 : f32 to vector<8x32xf32>
    %178 = arith.addf %176, %177 : vector<8x32xf32>
    %179 = vector.extract_strided_slice %166 {offsets = [0, 64], sizes = [8, 32], strides = [1, 1]} : vector<8x128xf32> to vector<8x32xf32>
    %180 = math.tanh %179 : vector<8x32xf32>
    %181 = vector.extract_strided_slice %166 {offsets = [0, 96], sizes = [8, 32], strides = [1, 1]} : vector<8x128xf32> to vector<8x32xf32>
    %182 = math.tanh %181 : vector<8x32xf32>
    %cst_57 = arith.constant 5.000000e-01 : f32
    %183 = vector.broadcast %cst_57 : f32 to vector<8x32xf32>
    %184 = arith.mulf %183, %182 : vector<8x32xf32>
    %cst_58 = arith.constant 5.000000e-01 : f32
    %185 = vector.broadcast %cst_58 : f32 to vector<8x32xf32>
    %186 = arith.addf %184, %185 : vector<8x32xf32>
    %187 = arith.mulf %178, %160 : vector<8x32xf32>
    %188 = arith.mulf %172, %180 : vector<8x32xf32>
    %189 = arith.addf %187, %188 : vector<8x32xf32>
    %190 = math.tanh %189 : vector<8x32xf32>
    %191 = arith.mulf %186, %190 : vector<8x32xf32>
    %192 = vector.extract_strided_slice %15 {offsets = [0, 768], sizes = [8, 128], strides = [1, 1]} : vector<8x1024xf32> to vector<8x128xf32>
    %193 = arith.truncf %191 : vector<8x32xf32> to vector<8x32xbf16>
    %cst_59 = arith.constant dense<0.000000e+00> : vector<8x128xf32>
    %194 = tpu.matmul %193, %2, %cst_59 {dimension_numbers = #tpu.dot_dimension_numbers<[1], [0], [0], [1], [0, 0, 1, 1], [], []>} : vector<8x32xbf16>, vector<32x128xbf16>, vector<8x128xf32> -> vector<8x128xf32>
    %195 = arith.addf %192, %194 : vector<8x128xf32>
    %196 = vector.extract_strided_slice %195 {offsets = [0, 0], sizes = [8, 32], strides = [1, 1]} : vector<8x128xf32> to vector<8x32xf32>
    %197 = math.tanh %196 : vector<8x32xf32>
    %cst_60 = arith.constant 5.000000e-01 : f32
    %198 = vector.broadcast %cst_60 : f32 to vector<8x32xf32>
    %199 = arith.mulf %198, %197 : vector<8x32xf32>
    %cst_61 = arith.constant 5.000000e-01 : f32
    %200 = vector.broadcast %cst_61 : f32 to vector<8x32xf32>
    %201 = arith.addf %199, %200 : vector<8x32xf32>
    %202 = vector.extract_strided_slice %195 {offsets = [0, 32], sizes = [8, 32], strides = [1, 1]} : vector<8x128xf32> to vector<8x32xf32>
    %203 = math.tanh %202 : vector<8x32xf32>
    %cst_62 = arith.constant 5.000000e-01 : f32
    %204 = vector.broadcast %cst_62 : f32 to vector<8x32xf32>
    %205 = arith.mulf %204, %203 : vector<8x32xf32>
    %cst_63 = arith.constant 5.000000e-01 : f32
    %206 = vector.broadcast %cst_63 : f32 to vector<8x32xf32>
    %207 = arith.addf %205, %206 : vector<8x32xf32>
    %208 = vector.extract_strided_slice %195 {offsets = [0, 64], sizes = [8, 32], strides = [1, 1]} : vector<8x128xf32> to vector<8x32xf32>
    %209 = math.tanh %208 : vector<8x32xf32>
    %210 = vector.extract_strided_slice %195 {offsets = [0, 96], sizes = [8, 32], strides = [1, 1]} : vector<8x128xf32> to vector<8x32xf32>
    %211 = math.tanh %210 : vector<8x32xf32>
    %cst_64 = arith.constant 5.000000e-01 : f32
    %212 = vector.broadcast %cst_64 : f32 to vector<8x32xf32>
    %213 = arith.mulf %212, %211 : vector<8x32xf32>
    %cst_65 = arith.constant 5.000000e-01 : f32
    %214 = vector.broadcast %cst_65 : f32 to vector<8x32xf32>
    %215 = arith.addf %213, %214 : vector<8x32xf32>
    %216 = arith.mulf %207, %189 : vector<8x32xf32>
    %217 = arith.mulf %201, %209 : vector<8x32xf32>
    %218 = arith.addf %216, %217 : vector<8x32xf32>
    %219 = math.tanh %218 : vector<8x32xf32>
    %220 = arith.mulf %215, %219 : vector<8x32xf32>
    %221 = vector.extract_strided_slice %15 {offsets = [0, 896], sizes = [8, 128], strides = [1, 1]} : vector<8x1024xf32> to vector<8x128xf32>
    %222 = arith.truncf %220 : vector<8x32xf32> to vector<8x32xbf16>
    %cst_66 = arith.constant dense<0.000000e+00> : vector<8x128xf32>
    %223 = tpu.matmul %222, %2, %cst_66 {dimension_numbers = #tpu.dot_dimension_numbers<[1], [0], [0], [1], [0, 0, 1, 1], [], []>} : vector<8x32xbf16>, vector<32x128xbf16>, vector<8x128xf32> -> vector<8x128xf32>
    %224 = arith.addf %221, %223 : vector<8x128xf32>
    %225 = vector.extract_strided_slice %224 {offsets = [0, 0], sizes = [8, 32], strides = [1, 1]} : vector<8x128xf32> to vector<8x32xf32>
    %226 = math.tanh %225 : vector<8x32xf32>
    %cst_67 = arith.constant 5.000000e-01 : f32
    %227 = vector.broadcast %cst_67 : f32 to vector<8x32xf32>
    %228 = arith.mulf %227, %226 : vector<8x32xf32>
    %cst_68 = arith.constant 5.000000e-01 : f32
    %229 = vector.broadcast %cst_68 : f32 to vector<8x32xf32>
    %230 = arith.addf %228, %229 : vector<8x32xf32>
    %231 = vector.extract_strided_slice %224 {offsets = [0, 32], sizes = [8, 32], strides = [1, 1]} : vector<8x128xf32> to vector<8x32xf32>
    %232 = math.tanh %231 : vector<8x32xf32>
    %cst_69 = arith.constant 5.000000e-01 : f32
    %233 = vector.broadcast %cst_69 : f32 to vector<8x32xf32>
    %234 = arith.mulf %233, %232 : vector<8x32xf32>
    %cst_70 = arith.constant 5.000000e-01 : f32
    %235 = vector.broadcast %cst_70 : f32 to vector<8x32xf32>
    %236 = arith.addf %234, %235 : vector<8x32xf32>
    %237 = vector.extract_strided_slice %224 {offsets = [0, 64], sizes = [8, 32], strides = [1, 1]} : vector<8x128xf32> to vector<8x32xf32>
    %238 = math.tanh %237 : vector<8x32xf32>
    %239 = vector.extract_strided_slice %224 {offsets = [0, 96], sizes = [8, 32], strides = [1, 1]} : vector<8x128xf32> to vector<8x32xf32>
    %240 = math.tanh %239 : vector<8x32xf32>
    %cst_71 = arith.constant 5.000000e-01 : f32
    %241 = vector.broadcast %cst_71 : f32 to vector<8x32xf32>
    %242 = arith.mulf %241, %240 : vector<8x32xf32>
    %cst_72 = arith.constant 5.000000e-01 : f32
    %243 = vector.broadcast %cst_72 : f32 to vector<8x32xf32>
    %244 = arith.addf %242, %243 : vector<8x32xf32>
    %245 = arith.mulf %236, %218 : vector<8x32xf32>
    %246 = arith.mulf %230, %238 : vector<8x32xf32>
    %247 = arith.addf %245, %246 : vector<8x32xf32>
    %248 = math.tanh %247 : vector<8x32xf32>
    %249 = arith.mulf %244, %248 : vector<8x32xf32>
    %cst_73 = arith.constant 0.000000e+00 : f32
    %250 = vector.broadcast %cst_73 : f32 to vector<8x32xf32>
    %251 = vector.extract_strided_slice %1 {offsets = [0, 14], sizes = [8, 2], strides = [1, 1]} : vector<8x16xbf16> to vector<8x2xbf16>
    %252 = arith.truncf %249 : vector<8x32xf32> to vector<8x32xbf16>
    %253 = tpu.concatenate %251, %252 in 1 : vector<8x2xbf16>, vector<8x32xbf16> -> vector<8x34xbf16>
    %cst_74 = arith.constant dense<0.000000e+00> : vector<8x128xf32>
    %254 = tpu.matmul %253, %3, %cst_74 {dimension_numbers = #tpu.dot_dimension_numbers<[1], [0], [0], [1], [0, 0, 1, 1], [], []>} : vector<8x34xbf16>, vector<34x128xbf16>, vector<8x128xf32> -> vector<8x128xf32>
    %255 = arith.addf %254, %7 : vector<8x128xf32>
    %256 = vector.extract_strided_slice %255 {offsets = [0, 0], sizes = [8, 32], strides = [1, 1]} : vector<8x128xf32> to vector<8x32xf32>
    %257 = math.tanh %256 : vector<8x32xf32>
    %cst_75 = arith.constant 5.000000e-01 : f32
    %258 = vector.broadcast %cst_75 : f32 to vector<8x32xf32>
    %259 = arith.mulf %258, %257 : vector<8x32xf32>
    %cst_76 = arith.constant 5.000000e-01 : f32
    %260 = vector.broadcast %cst_76 : f32 to vector<8x32xf32>
    %261 = arith.addf %259, %260 : vector<8x32xf32>
    %262 = vector.extract_strided_slice %255 {offsets = [0, 32], sizes = [8, 32], strides = [1, 1]} : vector<8x128xf32> to vector<8x32xf32>
    %263 = math.tanh %262 : vector<8x32xf32>
    %cst_77 = arith.constant 5.000000e-01 : f32
    %264 = vector.broadcast %cst_77 : f32 to vector<8x32xf32>
    %265 = arith.mulf %264, %263 : vector<8x32xf32>
    %cst_78 = arith.constant 5.000000e-01 : f32
    %266 = vector.broadcast %cst_78 : f32 to vector<8x32xf32>
    %267 = arith.addf %265, %266 : vector<8x32xf32>
    %268 = vector.extract_strided_slice %255 {offsets = [0, 64], sizes = [8, 32], strides = [1, 1]} : vector<8x128xf32> to vector<8x32xf32>
    %269 = math.tanh %268 : vector<8x32xf32>
    %270 = vector.extract_strided_slice %255 {offsets = [0, 96], sizes = [8, 32], strides = [1, 1]} : vector<8x128xf32> to vector<8x32xf32>
    %271 = math.tanh %270 : vector<8x32xf32>
    %cst_79 = arith.constant 5.000000e-01 : f32
    %272 = vector.broadcast %cst_79 : f32 to vector<8x32xf32>
    %273 = arith.mulf %272, %271 : vector<8x32xf32>
    %cst_80 = arith.constant 5.000000e-01 : f32
    %274 = vector.broadcast %cst_80 : f32 to vector<8x32xf32>
    %275 = arith.addf %273, %274 : vector<8x32xf32>
    %276 = arith.mulf %267, %250 : vector<8x32xf32>
    %277 = arith.mulf %261, %269 : vector<8x32xf32>
    %278 = arith.addf %276, %277 : vector<8x32xf32>
    %279 = math.tanh %278 : vector<8x32xf32>
    %280 = arith.mulf %275, %279 : vector<8x32xf32>
    %281 = arith.truncf %280 : vector<8x32xf32> to vector<8x32xbf16>
    %cst_81 = arith.constant dense<0.000000e+00> : vector<8x2xf32>
    %282 = tpu.matmul %281, %4, %cst_81 {dimension_numbers = #tpu.dot_dimension_numbers<[1], [0], [0], [1], [0, 0, 1, 1], [], []>} : vector<8x32xbf16>, vector<32x2xbf16>, vector<8x2xf32> -> vector<8x2xf32>
    %283 = arith.addf %282, %10 : vector<8x2xf32>
    %cst_82 = arith.constant 0.000000e+00 : f32
    %284 = vector.broadcast %cst_82 : f32 to vector<8x2xf32>
    %285 = arith.maximumf %283, %284 : vector<8x2xf32>
    %c0_83 = arith.constant 0 : index
    %c0_84 = arith.constant 0 : index
    %286 = vector.load %arg2[%c0_83, %c0_84] : memref<8x24xf32, #tpu.memory_space<vmem>>, vector<8x2xf32>
    %287 = arith.mulf %285, %286 : vector<8x2xf32>
    %c0_85 = arith.constant 0 : index
    %c0_86 = arith.constant 0 : index
    %288 = vector.load %arg10[%c0_85, %c0_86] : memref<8x24xf32, #tpu.memory_space<vmem>>, vector<8x2xf32>
    tpu.vector_store %arg10[%c0_85, %c0_86], %287 {strides = array<i32>} : memref<8x24xf32, #tpu.memory_space<vmem>>, vector<8x2xf32>,
    %289 = arith.truncf %287 : vector<8x2xf32> to vector<8x2xbf16>
    %290 = arith.truncf %280 : vector<8x32xf32> to vector<8x32xbf16>
    %291 = tpu.concatenate %289, %290 in 1 : vector<8x2xbf16>, vector<8x32xbf16> -> vector<8x34xbf16>
    %cst_87 = arith.constant dense<0.000000e+00> : vector<8x128xf32>
    %292 = tpu.matmul %291, %3, %cst_87 {dimension_numbers = #tpu.dot_dimension_numbers<[1], [0], [0], [1], [0, 0, 1, 1], [], []>} : vector<8x34xbf16>, vector<34x128xbf16>, vector<8x128xf32> -> vector<8x128xf32>
    %293 = arith.addf %292, %7 : vector<8x128xf32>
    %294 = vector.extract_strided_slice %293 {offsets = [0, 0], sizes = [8, 32], strides = [1, 1]} : vector<8x128xf32> to vector<8x32xf32>
    %295 = math.tanh %294 : vector<8x32xf32>
    %cst_88 = arith.constant 5.000000e-01 : f32
    %296 = vector.broadcast %cst_88 : f32 to vector<8x32xf32>
    %297 = arith.mulf %296, %295 : vector<8x32xf32>
    %cst_89 = arith.constant 5.000000e-01 : f32
    %298 = vector.broadcast %cst_89 : f32 to vector<8x32xf32>
    %299 = arith.addf %297, %298 : vector<8x32xf32>
    %300 = vector.extract_strided_slice %293 {offsets = [0, 32], sizes = [8, 32], strides = [1, 1]} : vector<8x128xf32> to vector<8x32xf32>
    %301 = math.tanh %300 : vector<8x32xf32>
    %cst_90 = arith.constant 5.000000e-01 : f32
    %302 = vector.broadcast %cst_90 : f32 to vector<8x32xf32>
    %303 = arith.mulf %302, %301 : vector<8x32xf32>
    %cst_91 = arith.constant 5.000000e-01 : f32
    %304 = vector.broadcast %cst_91 : f32 to vector<8x32xf32>
    %305 = arith.addf %303, %304 : vector<8x32xf32>
    %306 = vector.extract_strided_slice %293 {offsets = [0, 64], sizes = [8, 32], strides = [1, 1]} : vector<8x128xf32> to vector<8x32xf32>
    %307 = math.tanh %306 : vector<8x32xf32>
    %308 = vector.extract_strided_slice %293 {offsets = [0, 96], sizes = [8, 32], strides = [1, 1]} : vector<8x128xf32> to vector<8x32xf32>
    %309 = math.tanh %308 : vector<8x32xf32>
    %cst_92 = arith.constant 5.000000e-01 : f32
    %310 = vector.broadcast %cst_92 : f32 to vector<8x32xf32>
    %311 = arith.mulf %310, %309 : vector<8x32xf32>
    %cst_93 = arith.constant 5.000000e-01 : f32
    %312 = vector.broadcast %cst_93 : f32 to vector<8x32xf32>
    %313 = arith.addf %311, %312 : vector<8x32xf32>
    %314 = arith.mulf %305, %278 : vector<8x32xf32>
    %315 = arith.mulf %299, %307 : vector<8x32xf32>
    %316 = arith.addf %314, %315 : vector<8x32xf32>
    %317 = math.tanh %316 : vector<8x32xf32>
    %318 = arith.mulf %313, %317 : vector<8x32xf32>
    %319 = arith.truncf %318 : vector<8x32xf32> to vector<8x32xbf16>
    %cst_94 = arith.constant dense<0.000000e+00> : vector<8x2xf32>
    %320 = tpu.matmul %319, %4, %cst_94 {dimension_numbers = #tpu.dot_dimension_numbers<[1], [0], [0], [1], [0, 0, 1, 1], [], []>} : vector<8x32xbf16>, vector<32x2xbf16>, vector<8x2xf32> -> vector<8x2xf32>
    %321 = arith.addf %320, %10 : vector<8x2xf32>
    %cst_95 = arith.constant 0.000000e+00 : f32
    %322 = vector.broadcast %cst_95 : f32 to vector<8x2xf32>
    %323 = arith.maximumf %321, %322 : vector<8x2xf32>
    %c0_96 = arith.constant 0 : index
    %c2 = arith.constant 2 : index
    %324 = vector.load %arg2[%c0_96, %c2] : memref<8x24xf32, #tpu.memory_space<vmem>>, vector<8x2xf32>
    %325 = arith.mulf %323, %324 : vector<8x2xf32>
    %c0_97 = arith.constant 0 : index
    %c2_98 = arith.constant 2 : index
    %326 = vector.load %arg10[%c0_97, %c2_98] : memref<8x24xf32, #tpu.memory_space<vmem>>, vector<8x2xf32>
    tpu.vector_store %arg10[%c0_97, %c2_98], %325 {strides = array<i32>} : memref<8x24xf32, #tpu.memory_space<vmem>>, vector<8x2xf32>,
    %327 = arith.truncf %325 : vector<8x2xf32> to vector<8x2xbf16>
    %328 = arith.truncf %318 : vector<8x32xf32> to vector<8x32xbf16>
    %329 = tpu.concatenate %327, %328 in 1 : vector<8x2xbf16>, vector<8x32xbf16> -> vector<8x34xbf16>
    %cst_99 = arith.constant dense<0.000000e+00> : vector<8x128xf32>
    %330 = tpu.matmul %329, %3, %cst_99 {dimension_numbers = #tpu.dot_dimension_numbers<[1], [0], [0], [1], [0, 0, 1, 1], [], []>} : vector<8x34xbf16>, vector<34x128xbf16>, vector<8x128xf32> -> vector<8x128xf32>
    %331 = arith.addf %330, %7 : vector<8x128xf32>
    %332 = vector.extract_strided_slice %331 {offsets = [0, 0], sizes = [8, 32], strides = [1, 1]} : vector<8x128xf32> to vector<8x32xf32>
    %333 = math.tanh %332 : vector<8x32xf32>
    %cst_100 = arith.constant 5.000000e-01 : f32
    %334 = vector.broadcast %cst_100 : f32 to vector<8x32xf32>
    %335 = arith.mulf %334, %333 : vector<8x32xf32>
    %cst_101 = arith.constant 5.000000e-01 : f32
    %336 = vector.broadcast %cst_101 : f32 to vector<8x32xf32>
    %337 = arith.addf %335, %336 : vector<8x32xf32>
    %338 = vector.extract_strided_slice %331 {offsets = [0, 32], sizes = [8, 32], strides = [1, 1]} : vector<8x128xf32> to vector<8x32xf32>
    %339 = math.tanh %338 : vector<8x32xf32>
    %cst_102 = arith.constant 5.000000e-01 : f32
    %340 = vector.broadcast %cst_102 : f32 to vector<8x32xf32>
    %341 = arith.mulf %340, %339 : vector<8x32xf32>
    %cst_103 = arith.constant 5.000000e-01 : f32
    %342 = vector.broadcast %cst_103 : f32 to vector<8x32xf32>
    %343 = arith.addf %341, %342 : vector<8x32xf32>
    %344 = vector.extract_strided_slice %331 {offsets = [0, 64], sizes = [8, 32], strides = [1, 1]} : vector<8x128xf32> to vector<8x32xf32>
    %345 = math.tanh %344 : vector<8x32xf32>
    %346 = vector.extract_strided_slice %331 {offsets = [0, 96], sizes = [8, 32], strides = [1, 1]} : vector<8x128xf32> to vector<8x32xf32>
    %347 = math.tanh %346 : vector<8x32xf32>
    %cst_104 = arith.constant 5.000000e-01 : f32
    %348 = vector.broadcast %cst_104 : f32 to vector<8x32xf32>
    %349 = arith.mulf %348, %347 : vector<8x32xf32>
    %cst_105 = arith.constant 5.000000e-01 : f32
    %350 = vector.broadcast %cst_105 : f32 to vector<8x32xf32>
    %351 = arith.addf %349, %350 : vector<8x32xf32>
    %352 = arith.mulf %343, %316 : vector<8x32xf32>
    %353 = arith.mulf %337, %345 : vector<8x32xf32>
    %354 = arith.addf %352, %353 : vector<8x32xf32>
    %355 = math.tanh %354 : vector<8x32xf32>
    %356 = arith.mulf %351, %355 : vector<8x32xf32>
    %357 = arith.truncf %356 : vector<8x32xf32> to vector<8x32xbf16>
    %cst_106 = arith.constant dense<0.000000e+00> : vector<8x2xf32>
    %358 = tpu.matmul %357, %4, %cst_106 {dimension_numbers = #tpu.dot_dimension_numbers<[1], [0], [0], [1], [0, 0, 1, 1], [], []>} : vector<8x32xbf16>, vector<32x2xbf16>, vector<8x2xf32> -> vector<8x2xf32>
    %359 = arith.addf %358, %10 : vector<8x2xf32>
    %cst_107 = arith.constant 0.000000e+00 : f32
    %360 = vector.broadcast %cst_107 : f32 to vector<8x2xf32>
    %361 = arith.maximumf %359, %360 : vector<8x2xf32>
    %c0_108 = arith.constant 0 : index
    %c4 = arith.constant 4 : index
    %362 = vector.load %arg2[%c0_108, %c4] : memref<8x24xf32, #tpu.memory_space<vmem>>, vector<8x2xf32>
    %363 = arith.mulf %361, %362 : vector<8x2xf32>
    %c0_109 = arith.constant 0 : index
    %c4_110 = arith.constant 4 : index
    %364 = vector.load %arg10[%c0_109, %c4_110] : memref<8x24xf32, #tpu.memory_space<vmem>>, vector<8x2xf32>
    tpu.vector_store %arg10[%c0_109, %c4_110], %363 {strides = array<i32>} : memref<8x24xf32, #tpu.memory_space<vmem>>, vector<8x2xf32>,
    %365 = arith.truncf %363 : vector<8x2xf32> to vector<8x2xbf16>
    %366 = arith.truncf %356 : vector<8x32xf32> to vector<8x32xbf16>
    %367 = tpu.concatenate %365, %366 in 1 : vector<8x2xbf16>, vector<8x32xbf16> -> vector<8x34xbf16>
    %cst_111 = arith.constant dense<0.000000e+00> : vector<8x128xf32>
    %368 = tpu.matmul %367, %3, %cst_111 {dimension_numbers = #tpu.dot_dimension_numbers<[1], [0], [0], [1], [0, 0, 1, 1], [], []>} : vector<8x34xbf16>, vector<34x128xbf16>, vector<8x128xf32> -> vector<8x128xf32>
    %369 = arith.addf %368, %7 : vector<8x128xf32>
    %370 = vector.extract_strided_slice %369 {offsets = [0, 0], sizes = [8, 32], strides = [1, 1]} : vector<8x128xf32> to vector<8x32xf32>
    %371 = math.tanh %370 : vector<8x32xf32>
    %cst_112 = arith.constant 5.000000e-01 : f32
    %372 = vector.broadcast %cst_112 : f32 to vector<8x32xf32>
    %373 = arith.mulf %372, %371 : vector<8x32xf32>
    %cst_113 = arith.constant 5.000000e-01 : f32
    %374 = vector.broadcast %cst_113 : f32 to vector<8x32xf32>
    %375 = arith.addf %373, %374 : vector<8x32xf32>
    %376 = vector.extract_strided_slice %369 {offsets = [0, 32], sizes = [8, 32], strides = [1, 1]} : vector<8x128xf32> to vector<8x32xf32>
    %377 = math.tanh %376 : vector<8x32xf32>
    %cst_114 = arith.constant 5.000000e-01 : f32
    %378 = vector.broadcast %cst_114 : f32 to vector<8x32xf32>
    %379 = arith.mulf %378, %377 : vector<8x32xf32>
    %cst_115 = arith.constant 5.000000e-01 : f32
    %380 = vector.broadcast %cst_115 : f32 to vector<8x32xf32>
    %381 = arith.addf %379, %380 : vector<8x32xf32>
    %382 = vector.extract_strided_slice %369 {offsets = [0, 64], sizes = [8, 32], strides = [1, 1]} : vector<8x128xf32> to vector<8x32xf32>
    %383 = math.tanh %382 : vector<8x32xf32>
    %384 = vector.extract_strided_slice %369 {offsets = [0, 96], sizes = [8, 32], strides = [1, 1]} : vector<8x128xf32> to vector<8x32xf32>
    %385 = math.tanh %384 : vector<8x32xf32>
    %cst_116 = arith.constant 5.000000e-01 : f32
    %386 = vector.broadcast %cst_116 : f32 to vector<8x32xf32>
    %387 = arith.mulf %386, %385 : vector<8x32xf32>
    %cst_117 = arith.constant 5.000000e-01 : f32
    %388 = vector.broadcast %cst_117 : f32 to vector<8x32xf32>
    %389 = arith.addf %387, %388 : vector<8x32xf32>
    %390 = arith.mulf %381, %354 : vector<8x32xf32>
    %391 = arith.mulf %375, %383 : vector<8x32xf32>
    %392 = arith.addf %390, %391 : vector<8x32xf32>
    %393 = math.tanh %392 : vector<8x32xf32>
    %394 = arith.mulf %389, %393 : vector<8x32xf32>
    %395 = arith.truncf %394 : vector<8x32xf32> to vector<8x32xbf16>
    %cst_118 = arith.constant dense<0.000000e+00> : vector<8x2xf32>
    %396 = tpu.matmul %395, %4, %cst_118 {dimension_numbers = #tpu.dot_dimension_numbers<[1], [0], [0], [1], [0, 0, 1, 1], [], []>} : vector<8x32xbf16>, vector<32x2xbf16>, vector<8x2xf32> -> vector<8x2xf32>
    %397 = arith.addf %396, %10 : vector<8x2xf32>
    %cst_119 = arith.constant 0.000000e+00 : f32
    %398 = vector.broadcast %cst_119 : f32 to vector<8x2xf32>
    %399 = arith.maximumf %397, %398 : vector<8x2xf32>
    %c0_120 = arith.constant 0 : index
    %c6 = arith.constant 6 : index
    %400 = vector.load %arg2[%c0_120, %c6] : memref<8x24xf32, #tpu.memory_space<vmem>>, vector<8x2xf32>
    %401 = arith.mulf %399, %400 : vector<8x2xf32>
    %c0_121 = arith.constant 0 : index
    %c6_122 = arith.constant 6 : index
    %402 = vector.load %arg10[%c0_121, %c6_122] : memref<8x24xf32, #tpu.memory_space<vmem>>, vector<8x2xf32>
    tpu.vector_store %arg10[%c0_121, %c6_122], %401 {strides = array<i32>} : memref<8x24xf32, #tpu.memory_space<vmem>>, vector<8x2xf32>,
    %403 = arith.truncf %401 : vector<8x2xf32> to vector<8x2xbf16>
    %404 = arith.truncf %394 : vector<8x32xf32> to vector<8x32xbf16>
    %405 = tpu.concatenate %403, %404 in 1 : vector<8x2xbf16>, vector<8x32xbf16> -> vector<8x34xbf16>
    %cst_123 = arith.constant dense<0.000000e+00> : vector<8x128xf32>
    %406 = tpu.matmul %405, %3, %cst_123 {dimension_numbers = #tpu.dot_dimension_numbers<[1], [0], [0], [1], [0, 0, 1, 1], [], []>} : vector<8x34xbf16>, vector<34x128xbf16>, vector<8x128xf32> -> vector<8x128xf32>
    %407 = arith.addf %406, %7 : vector<8x128xf32>
    %408 = vector.extract_strided_slice %407 {offsets = [0, 0], sizes = [8, 32], strides = [1, 1]} : vector<8x128xf32> to vector<8x32xf32>
    %409 = math.tanh %408 : vector<8x32xf32>
    %cst_124 = arith.constant 5.000000e-01 : f32
    %410 = vector.broadcast %cst_124 : f32 to vector<8x32xf32>
    %411 = arith.mulf %410, %409 : vector<8x32xf32>
    %cst_125 = arith.constant 5.000000e-01 : f32
    %412 = vector.broadcast %cst_125 : f32 to vector<8x32xf32>
    %413 = arith.addf %411, %412 : vector<8x32xf32>
    %414 = vector.extract_strided_slice %407 {offsets = [0, 32], sizes = [8, 32], strides = [1, 1]} : vector<8x128xf32> to vector<8x32xf32>
    %415 = math.tanh %414 : vector<8x32xf32>
    %cst_126 = arith.constant 5.000000e-01 : f32
    %416 = vector.broadcast %cst_126 : f32 to vector<8x32xf32>
    %417 = arith.mulf %416, %415 : vector<8x32xf32>
    %cst_127 = arith.constant 5.000000e-01 : f32
    %418 = vector.broadcast %cst_127 : f32 to vector<8x32xf32>
    %419 = arith.addf %417, %418 : vector<8x32xf32>
    %420 = vector.extract_strided_slice %407 {offsets = [0, 64], sizes = [8, 32], strides = [1, 1]} : vector<8x128xf32> to vector<8x32xf32>
    %421 = math.tanh %420 : vector<8x32xf32>
    %422 = vector.extract_strided_slice %407 {offsets = [0, 96], sizes = [8, 32], strides = [1, 1]} : vector<8x128xf32> to vector<8x32xf32>
    %423 = math.tanh %422 : vector<8x32xf32>
    %cst_128 = arith.constant 5.000000e-01 : f32
    %424 = vector.broadcast %cst_128 : f32 to vector<8x32xf32>
    %425 = arith.mulf %424, %423 : vector<8x32xf32>
    %cst_129 = arith.constant 5.000000e-01 : f32
    %426 = vector.broadcast %cst_129 : f32 to vector<8x32xf32>
    %427 = arith.addf %425, %426 : vector<8x32xf32>
    %428 = arith.mulf %419, %392 : vector<8x32xf32>
    %429 = arith.mulf %413, %421 : vector<8x32xf32>
    %430 = arith.addf %428, %429 : vector<8x32xf32>
    %431 = math.tanh %430 : vector<8x32xf32>
    %432 = arith.mulf %427, %431 : vector<8x32xf32>
    %433 = arith.truncf %432 : vector<8x32xf32> to vector<8x32xbf16>
    %cst_130 = arith.constant dense<0.000000e+00> : vector<8x2xf32>
    %434 = tpu.matmul %433, %4, %cst_130 {dimension_numbers = #tpu.dot_dimension_numbers<[1], [0], [0], [1], [0, 0, 1, 1], [], []>} : vector<8x32xbf16>, vector<32x2xbf16>, vector<8x2xf32> -> vector<8x2xf32>
    %435 = arith.addf %434, %10 : vector<8x2xf32>
    %cst_131 = arith.constant 0.000000e+00 : f32
    %436 = vector.broadcast %cst_131 : f32 to vector<8x2xf32>
    %437 = arith.maximumf %435, %436 : vector<8x2xf32>
    %c0_132 = arith.constant 0 : index
    %c8 = arith.constant 8 : index
    %438 = vector.load %arg2[%c0_132, %c8] : memref<8x24xf32, #tpu.memory_space<vmem>>, vector<8x2xf32>
    %439 = arith.mulf %437, %438 : vector<8x2xf32>
    %c0_133 = arith.constant 0 : index
    %c8_134 = arith.constant 8 : index
    %440 = vector.load %arg10[%c0_133, %c8_134] : memref<8x24xf32, #tpu.memory_space<vmem>>, vector<8x2xf32>
    tpu.vector_store %arg10[%c0_133, %c8_134], %439 {strides = array<i32>} : memref<8x24xf32, #tpu.memory_space<vmem>>, vector<8x2xf32>,
    %441 = arith.truncf %439 : vector<8x2xf32> to vector<8x2xbf16>
    %442 = arith.truncf %432 : vector<8x32xf32> to vector<8x32xbf16>
    %443 = tpu.concatenate %441, %442 in 1 : vector<8x2xbf16>, vector<8x32xbf16> -> vector<8x34xbf16>
    %cst_135 = arith.constant dense<0.000000e+00> : vector<8x128xf32>
    %444 = tpu.matmul %443, %3, %cst_135 {dimension_numbers = #tpu.dot_dimension_numbers<[1], [0], [0], [1], [0, 0, 1, 1], [], []>} : vector<8x34xbf16>, vector<34x128xbf16>, vector<8x128xf32> -> vector<8x128xf32>
    %445 = arith.addf %444, %7 : vector<8x128xf32>
    %446 = vector.extract_strided_slice %445 {offsets = [0, 0], sizes = [8, 32], strides = [1, 1]} : vector<8x128xf32> to vector<8x32xf32>
    %447 = math.tanh %446 : vector<8x32xf32>
    %cst_136 = arith.constant 5.000000e-01 : f32
    %448 = vector.broadcast %cst_136 : f32 to vector<8x32xf32>
    %449 = arith.mulf %448, %447 : vector<8x32xf32>
    %cst_137 = arith.constant 5.000000e-01 : f32
    %450 = vector.broadcast %cst_137 : f32 to vector<8x32xf32>
    %451 = arith.addf %449, %450 : vector<8x32xf32>
    %452 = vector.extract_strided_slice %445 {offsets = [0, 32], sizes = [8, 32], strides = [1, 1]} : vector<8x128xf32> to vector<8x32xf32>
    %453 = math.tanh %452 : vector<8x32xf32>
    %cst_138 = arith.constant 5.000000e-01 : f32
    %454 = vector.broadcast %cst_138 : f32 to vector<8x32xf32>
    %455 = arith.mulf %454, %453 : vector<8x32xf32>
    %cst_139 = arith.constant 5.000000e-01 : f32
    %456 = vector.broadcast %cst_139 : f32 to vector<8x32xf32>
    %457 = arith.addf %455, %456 : vector<8x32xf32>
    %458 = vector.extract_strided_slice %445 {offsets = [0, 64], sizes = [8, 32], strides = [1, 1]} : vector<8x128xf32> to vector<8x32xf32>
    %459 = math.tanh %458 : vector<8x32xf32>
    %460 = vector.extract_strided_slice %445 {offsets = [0, 96], sizes = [8, 32], strides = [1, 1]} : vector<8x128xf32> to vector<8x32xf32>
    %461 = math.tanh %460 : vector<8x32xf32>
    %cst_140 = arith.constant 5.000000e-01 : f32
    %462 = vector.broadcast %cst_140 : f32 to vector<8x32xf32>
    %463 = arith.mulf %462, %461 : vector<8x32xf32>
    %cst_141 = arith.constant 5.000000e-01 : f32
    %464 = vector.broadcast %cst_141 : f32 to vector<8x32xf32>
    %465 = arith.addf %463, %464 : vector<8x32xf32>
    %466 = arith.mulf %457, %430 : vector<8x32xf32>
    %467 = arith.mulf %451, %459 : vector<8x32xf32>
    %468 = arith.addf %466, %467 : vector<8x32xf32>
    %469 = math.tanh %468 : vector<8x32xf32>
    %470 = arith.mulf %465, %469 : vector<8x32xf32>
    %471 = arith.truncf %470 : vector<8x32xf32> to vector<8x32xbf16>
    %cst_142 = arith.constant dense<0.000000e+00> : vector<8x2xf32>
    %472 = tpu.matmul %471, %4, %cst_142 {dimension_numbers = #tpu.dot_dimension_numbers<[1], [0], [0], [1], [0, 0, 1, 1], [], []>} : vector<8x32xbf16>, vector<32x2xbf16>, vector<8x2xf32> -> vector<8x2xf32>
    %473 = arith.addf %472, %10 : vector<8x2xf32>
    %cst_143 = arith.constant 0.000000e+00 : f32
    %474 = vector.broadcast %cst_143 : f32 to vector<8x2xf32>
    %475 = arith.maximumf %473, %474 : vector<8x2xf32>
    %c0_144 = arith.constant 0 : index
    %c10 = arith.constant 10 : index
    %476 = vector.load %arg2[%c0_144, %c10] : memref<8x24xf32, #tpu.memory_space<vmem>>, vector<8x2xf32>
    %477 = arith.mulf %475, %476 : vector<8x2xf32>
    %c0_145 = arith.constant 0 : index
    %c10_146 = arith.constant 10 : index
    %478 = vector.load %arg10[%c0_145, %c10_146] : memref<8x24xf32, #tpu.memory_space<vmem>>, vector<8x2xf32>
    tpu.vector_store %arg10[%c0_145, %c10_146], %477 {strides = array<i32>} : memref<8x24xf32, #tpu.memory_space<vmem>>, vector<8x2xf32>,
    %479 = arith.truncf %477 : vector<8x2xf32> to vector<8x2xbf16>
    %480 = arith.truncf %470 : vector<8x32xf32> to vector<8x32xbf16>
    %481 = tpu.concatenate %479, %480 in 1 : vector<8x2xbf16>, vector<8x32xbf16> -> vector<8x34xbf16>
    %cst_147 = arith.constant dense<0.000000e+00> : vector<8x128xf32>
    %482 = tpu.matmul %481, %3, %cst_147 {dimension_numbers = #tpu.dot_dimension_numbers<[1], [0], [0], [1], [0, 0, 1, 1], [], []>} : vector<8x34xbf16>, vector<34x128xbf16>, vector<8x128xf32> -> vector<8x128xf32>
    %483 = arith.addf %482, %7 : vector<8x128xf32>
    %484 = vector.extract_strided_slice %483 {offsets = [0, 0], sizes = [8, 32], strides = [1, 1]} : vector<8x128xf32> to vector<8x32xf32>
    %485 = math.tanh %484 : vector<8x32xf32>
    %cst_148 = arith.constant 5.000000e-01 : f32
    %486 = vector.broadcast %cst_148 : f32 to vector<8x32xf32>
    %487 = arith.mulf %486, %485 : vector<8x32xf32>
    %cst_149 = arith.constant 5.000000e-01 : f32
    %488 = vector.broadcast %cst_149 : f32 to vector<8x32xf32>
    %489 = arith.addf %487, %488 : vector<8x32xf32>
    %490 = vector.extract_strided_slice %483 {offsets = [0, 32], sizes = [8, 32], strides = [1, 1]} : vector<8x128xf32> to vector<8x32xf32>
    %491 = math.tanh %490 : vector<8x32xf32>
    %cst_150 = arith.constant 5.000000e-01 : f32
    %492 = vector.broadcast %cst_150 : f32 to vector<8x32xf32>
    %493 = arith.mulf %492, %491 : vector<8x32xf32>
    %cst_151 = arith.constant 5.000000e-01 : f32
    %494 = vector.broadcast %cst_151 : f32 to vector<8x32xf32>
    %495 = arith.addf %493, %494 : vector<8x32xf32>
    %496 = vector.extract_strided_slice %483 {offsets = [0, 64], sizes = [8, 32], strides = [1, 1]} : vector<8x128xf32> to vector<8x32xf32>
    %497 = math.tanh %496 : vector<8x32xf32>
    %498 = vector.extract_strided_slice %483 {offsets = [0, 96], sizes = [8, 32], strides = [1, 1]} : vector<8x128xf32> to vector<8x32xf32>
    %499 = math.tanh %498 : vector<8x32xf32>
    %cst_152 = arith.constant 5.000000e-01 : f32
    %500 = vector.broadcast %cst_152 : f32 to vector<8x32xf32>
    %501 = arith.mulf %500, %499 : vector<8x32xf32>
    %cst_153 = arith.constant 5.000000e-01 : f32
    %502 = vector.broadcast %cst_153 : f32 to vector<8x32xf32>
    %503 = arith.addf %501, %502 : vector<8x32xf32>
    %504 = arith.mulf %495, %468 : vector<8x32xf32>
    %505 = arith.mulf %489, %497 : vector<8x32xf32>
    %506 = arith.addf %504, %505 : vector<8x32xf32>
    %507 = math.tanh %506 : vector<8x32xf32>
    %508 = arith.mulf %503, %507 : vector<8x32xf32>
    %509 = arith.truncf %508 : vector<8x32xf32> to vector<8x32xbf16>
    %cst_154 = arith.constant dense<0.000000e+00> : vector<8x2xf32>
    %510 = tpu.matmul %509, %4, %cst_154 {dimension_numbers = #tpu.dot_dimension_numbers<[1], [0], [0], [1], [0, 0, 1, 1], [], []>} : vector<8x32xbf16>, vector<32x2xbf16>, vector<8x2xf32> -> vector<8x2xf32>
    %511 = arith.addf %510, %10 : vector<8x2xf32>
    %cst_155 = arith.constant 0.000000e+00 : f32
    %512 = vector.broadcast %cst_155 : f32 to vector<8x2xf32>
    %513 = arith.maximumf %511, %512 : vector<8x2xf32>
    %c0_156 = arith.constant 0 : index
    %c12 = arith.constant 12 : index
    %514 = vector.load %arg2[%c0_156, %c12] : memref<8x24xf32, #tpu.memory_space<vmem>>, vector<8x2xf32>
    %515 = arith.mulf %513, %514 : vector<8x2xf32>
    %c0_157 = arith.constant 0 : index
    %c12_158 = arith.constant 12 : index
    %516 = vector.load %arg10[%c0_157, %c12_158] : memref<8x24xf32, #tpu.memory_space<vmem>>, vector<8x2xf32>
    tpu.vector_store %arg10[%c0_157, %c12_158], %515 {strides = array<i32>} : memref<8x24xf32, #tpu.memory_space<vmem>>, vector<8x2xf32>,
    %517 = arith.truncf %515 : vector<8x2xf32> to vector<8x2xbf16>
    %518 = arith.truncf %508 : vector<8x32xf32> to vector<8x32xbf16>
    %519 = tpu.concatenate %517, %518 in 1 : vector<8x2xbf16>, vector<8x32xbf16> -> vector<8x34xbf16>
    %cst_159 = arith.constant dense<0.000000e+00> : vector<8x128xf32>
    %520 = tpu.matmul %519, %3, %cst_159 {dimension_numbers = #tpu.dot_dimension_numbers<[1], [0], [0], [1], [0, 0, 1, 1], [], []>} : vector<8x34xbf16>, vector<34x128xbf16>, vector<8x128xf32> -> vector<8x128xf32>
    %521 = arith.addf %520, %7 : vector<8x128xf32>
    %522 = vector.extract_strided_slice %521 {offsets = [0, 0], sizes = [8, 32], strides = [1, 1]} : vector<8x128xf32> to vector<8x32xf32>
    %523 = math.tanh %522 : vector<8x32xf32>
    %cst_160 = arith.constant 5.000000e-01 : f32
    %524 = vector.broadcast %cst_160 : f32 to vector<8x32xf32>
    %525 = arith.mulf %524, %523 : vector<8x32xf32>
    %cst_161 = arith.constant 5.000000e-01 : f32
    %526 = vector.broadcast %cst_161 : f32 to vector<8x32xf32>
    %527 = arith.addf %525, %526 : vector<8x32xf32>
    %528 = vector.extract_strided_slice %521 {offsets = [0, 32], sizes = [8, 32], strides = [1, 1]} : vector<8x128xf32> to vector<8x32xf32>
    %529 = math.tanh %528 : vector<8x32xf32>
    %cst_162 = arith.constant 5.000000e-01 : f32
    %530 = vector.broadcast %cst_162 : f32 to vector<8x32xf32>
    %531 = arith.mulf %530, %529 : vector<8x32xf32>
    %cst_163 = arith.constant 5.000000e-01 : f32
    %532 = vector.broadcast %cst_163 : f32 to vector<8x32xf32>
    %533 = arith.addf %531, %532 : vector<8x32xf32>
    %534 = vector.extract_strided_slice %521 {offsets = [0, 64], sizes = [8, 32], strides = [1, 1]} : vector<8x128xf32> to vector<8x32xf32>
    %535 = math.tanh %534 : vector<8x32xf32>
    %536 = vector.extract_strided_slice %521 {offsets = [0, 96], sizes = [8, 32], strides = [1, 1]} : vector<8x128xf32> to vector<8x32xf32>
    %537 = math.tanh %536 : vector<8x32xf32>
    %cst_164 = arith.constant 5.000000e-01 : f32
    %538 = vector.broadcast %cst_164 : f32 to vector<8x32xf32>
    %539 = arith.mulf %538, %537 : vector<8x32xf32>
    %cst_165 = arith.constant 5.000000e-01 : f32
    %540 = vector.broadcast %cst_165 : f32 to vector<8x32xf32>
    %541 = arith.addf %539, %540 : vector<8x32xf32>
    %542 = arith.mulf %533, %506 : vector<8x32xf32>
    %543 = arith.mulf %527, %535 : vector<8x32xf32>
    %544 = arith.addf %542, %543 : vector<8x32xf32>
    %545 = math.tanh %544 : vector<8x32xf32>
    %546 = arith.mulf %541, %545 : vector<8x32xf32>
    %547 = arith.truncf %546 : vector<8x32xf32> to vector<8x32xbf16>
    %cst_166 = arith.constant dense<0.000000e+00> : vector<8x2xf32>
    %548 = tpu.matmul %547, %4, %cst_166 {dimension_numbers = #tpu.dot_dimension_numbers<[1], [0], [0], [1], [0, 0, 1, 1], [], []>} : vector<8x32xbf16>, vector<32x2xbf16>, vector<8x2xf32> -> vector<8x2xf32>
    %549 = arith.addf %548, %10 : vector<8x2xf32>
    %cst_167 = arith.constant 0.000000e+00 : f32
    %550 = vector.broadcast %cst_167 : f32 to vector<8x2xf32>
    %551 = arith.maximumf %549, %550 : vector<8x2xf32>
    %c0_168 = arith.constant 0 : index
    %c14 = arith.constant 14 : index
    %552 = vector.load %arg2[%c0_168, %c14] : memref<8x24xf32, #tpu.memory_space<vmem>>, vector<8x2xf32>
    %553 = arith.mulf %551, %552 : vector<8x2xf32>
    %c0_169 = arith.constant 0 : index
    %c14_170 = arith.constant 14 : index
    %554 = vector.load %arg10[%c0_169, %c14_170] : memref<8x24xf32, #tpu.memory_space<vmem>>, vector<8x2xf32>
    tpu.vector_store %arg10[%c0_169, %c14_170], %553 {strides = array<i32>} : memref<8x24xf32, #tpu.memory_space<vmem>>, vector<8x2xf32>,
    %555 = arith.truncf %553 : vector<8x2xf32> to vector<8x2xbf16>
    %556 = arith.truncf %546 : vector<8x32xf32> to vector<8x32xbf16>
    %557 = tpu.concatenate %555, %556 in 1 : vector<8x2xbf16>, vector<8x32xbf16> -> vector<8x34xbf16>
    %cst_171 = arith.constant dense<0.000000e+00> : vector<8x128xf32>
    %558 = tpu.matmul %557, %3, %cst_171 {dimension_numbers = #tpu.dot_dimension_numbers<[1], [0], [0], [1], [0, 0, 1, 1], [], []>} : vector<8x34xbf16>, vector<34x128xbf16>, vector<8x128xf32> -> vector<8x128xf32>
    %559 = arith.addf %558, %7 : vector<8x128xf32>
    %560 = vector.extract_strided_slice %559 {offsets = [0, 0], sizes = [8, 32], strides = [1, 1]} : vector<8x128xf32> to vector<8x32xf32>
    %561 = math.tanh %560 : vector<8x32xf32>
    %cst_172 = arith.constant 5.000000e-01 : f32
    %562 = vector.broadcast %cst_172 : f32 to vector<8x32xf32>
    %563 = arith.mulf %562, %561 : vector<8x32xf32>
    %cst_173 = arith.constant 5.000000e-01 : f32
    %564 = vector.broadcast %cst_173 : f32 to vector<8x32xf32>
    %565 = arith.addf %563, %564 : vector<8x32xf32>
    %566 = vector.extract_strided_slice %559 {offsets = [0, 32], sizes = [8, 32], strides = [1, 1]} : vector<8x128xf32> to vector<8x32xf32>
    %567 = math.tanh %566 : vector<8x32xf32>
    %cst_174 = arith.constant 5.000000e-01 : f32
    %568 = vector.broadcast %cst_174 : f32 to vector<8x32xf32>
    %569 = arith.mulf %568, %567 : vector<8x32xf32>
    %cst_175 = arith.constant 5.000000e-01 : f32
    %570 = vector.broadcast %cst_175 : f32 to vector<8x32xf32>
    %571 = arith.addf %569, %570 : vector<8x32xf32>
    %572 = vector.extract_strided_slice %559 {offsets = [0, 64], sizes = [8, 32], strides = [1, 1]} : vector<8x128xf32> to vector<8x32xf32>
    %573 = math.tanh %572 : vector<8x32xf32>
    %574 = vector.extract_strided_slice %559 {offsets = [0, 96], sizes = [8, 32], strides = [1, 1]} : vector<8x128xf32> to vector<8x32xf32>
    %575 = math.tanh %574 : vector<8x32xf32>
    %cst_176 = arith.constant 5.000000e-01 : f32
    %576 = vector.broadcast %cst_176 : f32 to vector<8x32xf32>
    %577 = arith.mulf %576, %575 : vector<8x32xf32>
    %cst_177 = arith.constant 5.000000e-01 : f32
    %578 = vector.broadcast %cst_177 : f32 to vector<8x32xf32>
    %579 = arith.addf %577, %578 : vector<8x32xf32>
    %580 = arith.mulf %571, %544 : vector<8x32xf32>
    %581 = arith.mulf %565, %573 : vector<8x32xf32>
    %582 = arith.addf %580, %581 : vector<8x32xf32>
    %583 = math.tanh %582 : vector<8x32xf32>
    %584 = arith.mulf %579, %583 : vector<8x32xf32>
    %585 = arith.truncf %584 : vector<8x32xf32> to vector<8x32xbf16>
    %cst_178 = arith.constant dense<0.000000e+00> : vector<8x2xf32>
    %586 = tpu.matmul %585, %4, %cst_178 {dimension_numbers = #tpu.dot_dimension_numbers<[1], [0], [0], [1], [0, 0, 1, 1], [], []>} : vector<8x32xbf16>, vector<32x2xbf16>, vector<8x2xf32> -> vector<8x2xf32>
    %587 = arith.addf %586, %10 : vector<8x2xf32>
    %cst_179 = arith.constant 0.000000e+00 : f32
    %588 = vector.broadcast %cst_179 : f32 to vector<8x2xf32>
    %589 = arith.maximumf %587, %588 : vector<8x2xf32>
    %c0_180 = arith.constant 0 : index
    %c16 = arith.constant 16 : index
    %590 = vector.load %arg2[%c0_180, %c16] : memref<8x24xf32, #tpu.memory_space<vmem>>, vector<8x2xf32>
    %591 = arith.mulf %589, %590 : vector<8x2xf32>
    %c0_181 = arith.constant 0 : index
    %c16_182 = arith.constant 16 : index
    %592 = vector.load %arg10[%c0_181, %c16_182] : memref<8x24xf32, #tpu.memory_space<vmem>>, vector<8x2xf32>
    tpu.vector_store %arg10[%c0_181, %c16_182], %591 {strides = array<i32>} : memref<8x24xf32, #tpu.memory_space<vmem>>, vector<8x2xf32>,
    %593 = arith.truncf %591 : vector<8x2xf32> to vector<8x2xbf16>
    %594 = arith.truncf %584 : vector<8x32xf32> to vector<8x32xbf16>
    %595 = tpu.concatenate %593, %594 in 1 : vector<8x2xbf16>, vector<8x32xbf16> -> vector<8x34xbf16>
    %cst_183 = arith.constant dense<0.000000e+00> : vector<8x128xf32>
    %596 = tpu.matmul %595, %3, %cst_183 {dimension_numbers = #tpu.dot_dimension_numbers<[1], [0], [0], [1], [0, 0, 1, 1], [], []>} : vector<8x34xbf16>, vector<34x128xbf16>, vector<8x128xf32> -> vector<8x128xf32>
    %597 = arith.addf %596, %7 : vector<8x128xf32>
    %598 = vector.extract_strided_slice %597 {offsets = [0, 0], sizes = [8, 32], strides = [1, 1]} : vector<8x128xf32> to vector<8x32xf32>
    %599 = math.tanh %598 : vector<8x32xf32>
    %cst_184 = arith.constant 5.000000e-01 : f32
    %600 = vector.broadcast %cst_184 : f32 to vector<8x32xf32>
    %601 = arith.mulf %600, %599 : vector<8x32xf32>
    %cst_185 = arith.constant 5.000000e-01 : f32
    %602 = vector.broadcast %cst_185 : f32 to vector<8x32xf32>
    %603 = arith.addf %601, %602 : vector<8x32xf32>
    %604 = vector.extract_strided_slice %597 {offsets = [0, 32], sizes = [8, 32], strides = [1, 1]} : vector<8x128xf32> to vector<8x32xf32>
    %605 = math.tanh %604 : vector<8x32xf32>
    %cst_186 = arith.constant 5.000000e-01 : f32
    %606 = vector.broadcast %cst_186 : f32 to vector<8x32xf32>
    %607 = arith.mulf %606, %605 : vector<8x32xf32>
    %cst_187 = arith.constant 5.000000e-01 : f32
    %608 = vector.broadcast %cst_187 : f32 to vector<8x32xf32>
    %609 = arith.addf %607, %608 : vector<8x32xf32>
    %610 = vector.extract_strided_slice %597 {offsets = [0, 64], sizes = [8, 32], strides = [1, 1]} : vector<8x128xf32> to vector<8x32xf32>
    %611 = math.tanh %610 : vector<8x32xf32>
    %612 = vector.extract_strided_slice %597 {offsets = [0, 96], sizes = [8, 32], strides = [1, 1]} : vector<8x128xf32> to vector<8x32xf32>
    %613 = math.tanh %612 : vector<8x32xf32>
    %cst_188 = arith.constant 5.000000e-01 : f32
    %614 = vector.broadcast %cst_188 : f32 to vector<8x32xf32>
    %615 = arith.mulf %614, %613 : vector<8x32xf32>
    %cst_189 = arith.constant 5.000000e-01 : f32
    %616 = vector.broadcast %cst_189 : f32 to vector<8x32xf32>
    %617 = arith.addf %615, %616 : vector<8x32xf32>
    %618 = arith.mulf %609, %582 : vector<8x32xf32>
    %619 = arith.mulf %603, %611 : vector<8x32xf32>
    %620 = arith.addf %618, %619 : vector<8x32xf32>
    %621 = math.tanh %620 : vector<8x32xf32>
    %622 = arith.mulf %617, %621 : vector<8x32xf32>
    %623 = arith.truncf %622 : vector<8x32xf32> to vector<8x32xbf16>
    %cst_190 = arith.constant dense<0.000000e+00> : vector<8x2xf32>
    %624 = tpu.matmul %623, %4, %cst_190 {dimension_numbers = #tpu.dot_dimension_numbers<[1], [0], [0], [1], [0, 0, 1, 1], [], []>} : vector<8x32xbf16>, vector<32x2xbf16>, vector<8x2xf32> -> vector<8x2xf32>
    %625 = arith.addf %624, %10 : vector<8x2xf32>
    %cst_191 = arith.constant 0.000000e+00 : f32
    %626 = vector.broadcast %cst_191 : f32 to vector<8x2xf32>
    %627 = arith.maximumf %625, %626 : vector<8x2xf32>
    %c0_192 = arith.constant 0 : index
    %c18 = arith.constant 18 : index
    %628 = vector.load %arg2[%c0_192, %c18] : memref<8x24xf32, #tpu.memory_space<vmem>>, vector<8x2xf32>
    %629 = arith.mulf %627, %628 : vector<8x2xf32>
    %c0_193 = arith.constant 0 : index
    %c18_194 = arith.constant 18 : index
    %630 = vector.load %arg10[%c0_193, %c18_194] : memref<8x24xf32, #tpu.memory_space<vmem>>, vector<8x2xf32>
    tpu.vector_store %arg10[%c0_193, %c18_194], %629 {strides = array<i32>} : memref<8x24xf32, #tpu.memory_space<vmem>>, vector<8x2xf32>,
    %631 = arith.truncf %629 : vector<8x2xf32> to vector<8x2xbf16>
    %632 = arith.truncf %622 : vector<8x32xf32> to vector<8x32xbf16>
    %633 = tpu.concatenate %631, %632 in 1 : vector<8x2xbf16>, vector<8x32xbf16> -> vector<8x34xbf16>
    %cst_195 = arith.constant dense<0.000000e+00> : vector<8x128xf32>
    %634 = tpu.matmul %633, %3, %cst_195 {dimension_numbers = #tpu.dot_dimension_numbers<[1], [0], [0], [1], [0, 0, 1, 1], [], []>} : vector<8x34xbf16>, vector<34x128xbf16>, vector<8x128xf32> -> vector<8x128xf32>
    %635 = arith.addf %634, %7 : vector<8x128xf32>
    %636 = vector.extract_strided_slice %635 {offsets = [0, 0], sizes = [8, 32], strides = [1, 1]} : vector<8x128xf32> to vector<8x32xf32>
    %637 = math.tanh %636 : vector<8x32xf32>
    %cst_196 = arith.constant 5.000000e-01 : f32
    %638 = vector.broadcast %cst_196 : f32 to vector<8x32xf32>
    %639 = arith.mulf %638, %637 : vector<8x32xf32>
    %cst_197 = arith.constant 5.000000e-01 : f32
    %640 = vector.broadcast %cst_197 : f32 to vector<8x32xf32>
    %641 = arith.addf %639, %640 : vector<8x32xf32>
    %642 = vector.extract_strided_slice %635 {offsets = [0, 32], sizes = [8, 32], strides = [1, 1]} : vector<8x128xf32> to vector<8x32xf32>
    %643 = math.tanh %642 : vector<8x32xf32>
    %cst_198 = arith.constant 5.000000e-01 : f32
    %644 = vector.broadcast %cst_198 : f32 to vector<8x32xf32>
    %645 = arith.mulf %644, %643 : vector<8x32xf32>
    %cst_199 = arith.constant 5.000000e-01 : f32
    %646 = vector.broadcast %cst_199 : f32 to vector<8x32xf32>
    %647 = arith.addf %645, %646 : vector<8x32xf32>
    %648 = vector.extract_strided_slice %635 {offsets = [0, 64], sizes = [8, 32], strides = [1, 1]} : vector<8x128xf32> to vector<8x32xf32>
    %649 = math.tanh %648 : vector<8x32xf32>
    %650 = vector.extract_strided_slice %635 {offsets = [0, 96], sizes = [8, 32], strides = [1, 1]} : vector<8x128xf32> to vector<8x32xf32>
    %651 = math.tanh %650 : vector<8x32xf32>
    %cst_200 = arith.constant 5.000000e-01 : f32
    %652 = vector.broadcast %cst_200 : f32 to vector<8x32xf32>
    %653 = arith.mulf %652, %651 : vector<8x32xf32>
    %cst_201 = arith.constant 5.000000e-01 : f32
    %654 = vector.broadcast %cst_201 : f32 to vector<8x32xf32>
    %655 = arith.addf %653, %654 : vector<8x32xf32>
    %656 = arith.mulf %647, %620 : vector<8x32xf32>
    %657 = arith.mulf %641, %649 : vector<8x32xf32>
    %658 = arith.addf %656, %657 : vector<8x32xf32>
    %659 = math.tanh %658 : vector<8x32xf32>
    %660 = arith.mulf %655, %659 : vector<8x32xf32>
    %661 = arith.truncf %660 : vector<8x32xf32> to vector<8x32xbf16>
    %cst_202 = arith.constant dense<0.000000e+00> : vector<8x2xf32>
    %662 = tpu.matmul %661, %4, %cst_202 {dimension_numbers = #tpu.dot_dimension_numbers<[1], [0], [0], [1], [0, 0, 1, 1], [], []>} : vector<8x32xbf16>, vector<32x2xbf16>, vector<8x2xf32> -> vector<8x2xf32>
    %663 = arith.addf %662, %10 : vector<8x2xf32>
    %cst_203 = arith.constant 0.000000e+00 : f32
    %664 = vector.broadcast %cst_203 : f32 to vector<8x2xf32>
    %665 = arith.maximumf %663, %664 : vector<8x2xf32>
    %c0_204 = arith.constant 0 : index
    %c20 = arith.constant 20 : index
    %666 = vector.load %arg2[%c0_204, %c20] : memref<8x24xf32, #tpu.memory_space<vmem>>, vector<8x2xf32>
    %667 = arith.mulf %665, %666 : vector<8x2xf32>
    %c0_205 = arith.constant 0 : index
    %c20_206 = arith.constant 20 : index
    %668 = vector.load %arg10[%c0_205, %c20_206] : memref<8x24xf32, #tpu.memory_space<vmem>>, vector<8x2xf32>
    tpu.vector_store %arg10[%c0_205, %c20_206], %667 {strides = array<i32>} : memref<8x24xf32, #tpu.memory_space<vmem>>, vector<8x2xf32>,
    %669 = arith.truncf %667 : vector<8x2xf32> to vector<8x2xbf16>
    %670 = arith.truncf %660 : vector<8x32xf32> to vector<8x32xbf16>
    %671 = tpu.concatenate %669, %670 in 1 : vector<8x2xbf16>, vector<8x32xbf16> -> vector<8x34xbf16>
    %cst_207 = arith.constant dense<0.000000e+00> : vector<8x128xf32>
    %672 = tpu.matmul %671, %3, %cst_207 {dimension_numbers = #tpu.dot_dimension_numbers<[1], [0], [0], [1], [0, 0, 1, 1], [], []>} : vector<8x34xbf16>, vector<34x128xbf16>, vector<8x128xf32> -> vector<8x128xf32>
    %673 = arith.addf %672, %7 : vector<8x128xf32>
    %674 = vector.extract_strided_slice %673 {offsets = [0, 0], sizes = [8, 32], strides = [1, 1]} : vector<8x128xf32> to vector<8x32xf32>
    %675 = math.tanh %674 : vector<8x32xf32>
    %cst_208 = arith.constant 5.000000e-01 : f32
    %676 = vector.broadcast %cst_208 : f32 to vector<8x32xf32>
    %677 = arith.mulf %676, %675 : vector<8x32xf32>
    %cst_209 = arith.constant 5.000000e-01 : f32
    %678 = vector.broadcast %cst_209 : f32 to vector<8x32xf32>
    %679 = arith.addf %677, %678 : vector<8x32xf32>
    %680 = vector.extract_strided_slice %673 {offsets = [0, 32], sizes = [8, 32], strides = [1, 1]} : vector<8x128xf32> to vector<8x32xf32>
    %681 = math.tanh %680 : vector<8x32xf32>
    %cst_210 = arith.constant 5.000000e-01 : f32
    %682 = vector.broadcast %cst_210 : f32 to vector<8x32xf32>
    %683 = arith.mulf %682, %681 : vector<8x32xf32>
    %cst_211 = arith.constant 5.000000e-01 : f32
    %684 = vector.broadcast %cst_211 : f32 to vector<8x32xf32>
    %685 = arith.addf %683, %684 : vector<8x32xf32>
    %686 = vector.extract_strided_slice %673 {offsets = [0, 64], sizes = [8, 32], strides = [1, 1]} : vector<8x128xf32> to vector<8x32xf32>
    %687 = math.tanh %686 : vector<8x32xf32>
    %688 = vector.extract_strided_slice %673 {offsets = [0, 96], sizes = [8, 32], strides = [1, 1]} : vector<8x128xf32> to vector<8x32xf32>
    %689 = math.tanh %688 : vector<8x32xf32>
    %cst_212 = arith.constant 5.000000e-01 : f32
    %690 = vector.broadcast %cst_212 : f32 to vector<8x32xf32>
    %691 = arith.mulf %690, %689 : vector<8x32xf32>
    %cst_213 = arith.constant 5.000000e-01 : f32
    %692 = vector.broadcast %cst_213 : f32 to vector<8x32xf32>
    %693 = arith.addf %691, %692 : vector<8x32xf32>
    %694 = arith.mulf %685, %658 : vector<8x32xf32>
    %695 = arith.mulf %679, %687 : vector<8x32xf32>
    %696 = arith.addf %694, %695 : vector<8x32xf32>
    %697 = math.tanh %696 : vector<8x32xf32>
    %698 = arith.mulf %693, %697 : vector<8x32xf32>
    %699 = arith.truncf %698 : vector<8x32xf32> to vector<8x32xbf16>
    %cst_214 = arith.constant dense<0.000000e+00> : vector<8x2xf32>
    %700 = tpu.matmul %699, %4, %cst_214 {dimension_numbers = #tpu.dot_dimension_numbers<[1], [0], [0], [1], [0, 0, 1, 1], [], []>} : vector<8x32xbf16>, vector<32x2xbf16>, vector<8x2xf32> -> vector<8x2xf32>
    %701 = arith.addf %700, %10 : vector<8x2xf32>
    %cst_215 = arith.constant 0.000000e+00 : f32
    %702 = vector.broadcast %cst_215 : f32 to vector<8x2xf32>
    %703 = arith.maximumf %701, %702 : vector<8x2xf32>
    %c0_216 = arith.constant 0 : index
    %c22 = arith.constant 22 : index
    %704 = vector.load %arg2[%c0_216, %c22] : memref<8x24xf32, #tpu.memory_space<vmem>>, vector<8x2xf32>
    %705 = arith.mulf %703, %704 : vector<8x2xf32>
    %c0_217 = arith.constant 0 : index
    %c22_218 = arith.constant 22 : index
    %706 = vector.load %arg10[%c0_217, %c22_218] : memref<8x24xf32, #tpu.memory_space<vmem>>, vector<8x2xf32>
    tpu.vector_store %arg10[%c0_217, %c22_218], %705 {strides = array<i32>} : memref<8x24xf32, #tpu.memory_space<vmem>>, vector<8x2xf32>,
    return
  }
  func.func @transform_0(%arg0: i32) -> (i32, i32) {
    %c0_i32 = arith.constant 0 : i32
    %c0_i32_0 = arith.constant 0 : i32
    return %arg0, %c0_i32 : i32, i32
  }
  func.func @transform_1(%arg0: i32) -> (i32, i32) {
    %c0_i32 = arith.constant 0 : i32
    %c0_i32_0 = arith.constant 0 : i32
    return %arg0, %c0_i32 : i32, i32
  }
  func.func @transform_2(%arg0: i32) -> (i32, i32) {
    %c0_i32 = arith.constant 0 : i32
    %c0_i32_0 = arith.constant 0 : i32
    %c0_i32_1 = arith.constant 0 : i32
    return %c0_i32, %c0_i32_0 : i32, i32
  }
  func.func @transform_3(%arg0: i32) -> (i32, i32) {
    %c0_i32 = arith.constant 0 : i32
    %c0_i32_0 = arith.constant 0 : i32
    %c0_i32_1 = arith.constant 0 : i32
    return %c0_i32, %c0_i32_0 : i32, i32
  }
  func.func @transform_4(%arg0: i32) -> (i32, i32) {
    %c0_i32 = arith.constant 0 : i32
    %c0_i32_0 = arith.constant 0 : i32
    %c0_i32_1 = arith.constant 0 : i32
    return %c0_i32, %c0_i32_0 : i32, i32
  }
  func.func @transform_5(%arg0: i32) -> (i32, i32) {
    %c0_i32 = arith.constant 0 : i32
    %c0_i32_0 = arith.constant 0 : i32
    %c0_i32_1 = arith.constant 0 : i32
    return %c0_i32, %c0_i32_0 : i32, i32
  }
  func.func @transform_6(%arg0: i32) -> (i32, i32) {
    %c0_i32 = arith.constant 0 : i32
    %c0_i32_0 = arith.constant 0 : i32
    %c0_i32_1 = arith.constant 0 : i32
    return %c0_i32, %c0_i32_0 : i32, i32
  }
  func.func @transform_7(%arg0: i32) -> (i32, i32) {
    %c0_i32 = arith.constant 0 : i32
    %c0_i32_0 = arith.constant 0 : i32
    %c0_i32_1 = arith.constant 0 : i32
    return %c0_i32, %c0_i32_0 : i32, i32
  }
  func.func @transform_8(%arg0: i32) -> (i32, i32) {
    %c0_i32 = arith.constant 0 : i32
    %c0_i32_0 = arith.constant 0 : i32
    %c0_i32_1 = arith.constant 0 : i32
    return %c0_i32, %c0_i32_0 : i32, i32
  }
  func.func @transform_9(%arg0: i32) -> (i32, i32) {
    %c0_i32 = arith.constant 0 : i32
    %c0_i32_0 = arith.constant 0 : i32
    return %arg0, %c0_i32 : i32, i32
  }
}

</mosaic_0001>

<llo_original>
// kernel: tpu_custom_call.1
$region0: #{tpu_custom_call.1}
  #allocation0 [shape = 'u32[]', space=smem, size = 0x4, offset = 0x4, fixed_abs, tag = 'smem constant byte address 0x4 - core index']
  #allocation1 [shape = 'u32[144,128]{1,0:T(1,128)}', space=vmem, size = 0x12000, scoped, tag = 'internal scratch']
  %s0 = inlined_call_operand.vmem [shape: f32[8,16], index: 0, kind: input, shape index: {}]
  %s1 = inlined_call_operand.hbm [shape: f32[8,24], index: 1, kind: input, shape index: {}]
  %s2 = inlined_call_operand.hbm [shape: bf16[16,1024], index: 2, kind: input, shape index: {}]
  %s3 = inlined_call_operand.hbm [shape: f32[1,1024], index: 3, kind: input, shape index: {}]
  %s4 = inlined_call_operand.hbm [shape: bf16[32,128], index: 4, kind: input, shape index: {}]
  %s5 = inlined_call_operand.vmem [shape: bf16[34,128], index: 5, kind: input, shape index: {}]
  %s6 = inlined_call_operand.vmem [shape: f32[1,128], index: 6, kind: input, shape index: {}]
  %s7 = inlined_call_operand.vmem [shape: bf16[32,2], index: 7, kind: input, shape index: {}]
  %s8 = inlined_call_operand.vmem [shape: f32[1,2], index: 8, kind: input, shape index: {}]
  %s9 = inlined_call_operand.hbm [shape: f32[8,24], index: 9, kind: output, shape index: {}]
  %s10 = sld [smem:[#allocation0]]
  $region62: #{tpu_custom_call.1} parent=0
    _
  %s12 = ssub.s32 1, %s10
  %s13 = scalar_select 0, %s12, %s10
  $region1: #{tpu_custom_call.1} parent=0
    #allocation2 [shape = 'u8[4096]{0}', space=vmem, size = 0x1000, scoped, tag = 'input window, operand 1, single buffered']
    #allocation3 [shape = 's32[1]{0}', space=sflag, size = 0x4, scoped, tag = 'scoped memory for tpu_custom_call.1']
    #allocation4 [shape = 's32[1]{0}', space=sflag, size = 0x4, scoped, tag = 'scoped memory for tpu_custom_call.1']
    #allocation5 [shape = 'u8[32768]{0}', space=vmem, size = 0x8000, scoped, tag = 'input window, operand 2, single buffered']
    #allocation6 [shape = 's32[1]{0}', space=sflag, size = 0x4, scoped, tag = 'scoped memory for tpu_custom_call.1']
    #allocation7 [shape = 'u8[4096]{0}', space=vmem, size = 0x1000, scoped, tag = 'input window, operand 3, single buffered']
    #allocation8 [shape = 'u8[8192]{0}', space=vmem, size = 0x2000, scoped, tag = 'input window, operand 4, single buffered']
    #allocation9 [shape = 's32[1]{0}', space=sflag, size = 0x4, scoped, tag = 'scoped memory for tpu_custom_call.1']
    #allocation10 [shape = 'u8[4096]{0}', space=vmem, size = 0x1000, scoped, tag = 'output window, operand 0, single buffered']
    %14 = vsyncpa [#allocation3], 0
    %15 = vsyncpa [#allocation6], 0
    %16 = vsyncpa [#allocation9], 0
    %17 = vsyncpa [#allocation4], 0
    // Predicated region
    $region2: #{tpu_custom_call.1} parent=1 // pred_check
      _
    $region3: #{tpu_custom_call.1} parent=1 // pred_check_branch
      %19 = sbr.rel (0) target = $region5
    $region4: #{tpu_custom_call.1} parent=1 // pred_region
      _
    $region5: #{tpu_custom_call.1} parent=1 // pred_fallthru
      _
    // Predicated region
    $region6: #{tpu_custom_call.1} parent=1 // pred_check
      _
    $region7: #{tpu_custom_call.1} parent=1 // pred_check_branch
      %21 = sbr.rel (0) target = $region9
    $region8: #{tpu_custom_call.1} parent=1 // pred_region
      %s23 = ssub.s32 128, 128
      %24 = vsyncadd [#allocation3], %s23
      %s26 = sshll.u32 [#allocation2], 4
      %s27 = int_to_ptr.vmem [resolvable:$true] %s26
      %29 = dma.hbm_to_vmem [thread:$0]  %s1, 128, %s27, [#allocation3]
    $region9: #{tpu_custom_call.1} parent=1 // pred_fallthru
      _
    // Predicated region
    $region10: #{tpu_custom_call.1} parent=1 // pred_check
      _
    $region11: #{tpu_custom_call.1} parent=1 // pred_check_branch
      %31 = sbr.rel (0) target = $region13
    $region12: #{tpu_custom_call.1} parent=1 // pred_region
      %s33 = ssub.s32 1024, 1024
      %34 = vsyncadd [#allocation6], %s33
      %s35 = sshll.u32 [#allocation5], 4
      %s36 = int_to_ptr.vmem [resolvable:$true] %s35
      %41 = dma.hbm_to_vmem [thread:$0]  %s2, 1024, %s36, [#allocation6], 512, 512, 32
    $region13: #{tpu_custom_call.1} parent=1 // pred_fallthru
      _
    // Predicated region
    $region14: #{tpu_custom_call.1} parent=1 // pred_check
      _
    $region15: #{tpu_custom_call.1} parent=1 // pred_check_branch
      %43 = sbr.rel (0) target = $region17
    $region16: #{tpu_custom_call.1} parent=1 // pred_region
      %s45 = ssub.s32 128, 128
      %46 = vsyncadd [#allocation6], %s45
      %s48 = sshll.u32 [#allocation7], 4
      %s49 = int_to_ptr.vmem [resolvable:$true] %s48
      %51 = dma.hbm_to_vmem [thread:$0]  %s3, 128, %s49, [#allocation6]
    $region17: #{tpu_custom_call.1} parent=1 // pred_fallthru
      _
    // Predicated region
    $region18: #{tpu_custom_call.1} parent=1 // pred_check
      _
    $region19: #{tpu_custom_call.1} parent=1 // pred_check_branch
      %53 = sbr.rel (0) target = $region21
    $region20: #{tpu_custom_call.1} parent=1 // pred_region
      %s55 = ssub.s32 256, 256
      %56 = vsyncadd [#allocation9], %s55
      %s57 = sshll.u32 [#allocation8], 4
      %s58 = int_to_ptr.vmem [resolvable:$true] %s57
      %63 = dma.hbm_to_vmem [thread:$0]  %s4, 256, %s58, [#allocation9], 64, 64, 4
    $region21: #{tpu_custom_call.1} parent=1 // pred_fallthru
      _
    // Predicated region
    $region22: #{tpu_custom_call.1} parent=1 // pred_check
      _
    $region23: #{tpu_custom_call.1} parent=1 // pred_check_branch
      %65 = sbr.rel (0) target = $region25
    $region24: #{tpu_custom_call.1} parent=1 // pred_region
      _
    $region25: #{tpu_custom_call.1} parent=1 // pred_fallthru
      _
    // Predicated region
    $region26: #{tpu_custom_call.1} parent=1 // pred_check
      _
    $region27: #{tpu_custom_call.1} parent=1 // pred_check_branch
      %67 = sbr.rel (0) target = $region29
    $region28: #{tpu_custom_call.1} parent=1 // pred_region
      _
    $region29: #{tpu_custom_call.1} parent=1 // pred_fallthru
      _
    // Predicated region
    $region30: #{tpu_custom_call.1} parent=1 // pred_check
      _
    $region31: #{tpu_custom_call.1} parent=1 // pred_check_branch
      %69 = sbr.rel (0) target = $region33
    $region32: #{tpu_custom_call.1} parent=1 // pred_region
      _
    $region33: #{tpu_custom_call.1} parent=1 // pred_fallthru
      _
    // Predicated region
    $region34: #{tpu_custom_call.1} parent=1 // pred_check
      _
    $region35: #{tpu_custom_call.1} parent=1 // pred_check_branch
      %71 = sbr.rel (0) target = $region37
    $region36: #{tpu_custom_call.1} parent=1 // pred_region
      _
    $region37: #{tpu_custom_call.1} parent=1 // pred_fallthru
      _
    // Predicated region
    $region38: #{tpu_custom_call.1} parent=1 // pred_check
      _
    $region39: #{tpu_custom_call.1} parent=1 // pred_check_branch
      %73 = sbr.rel (0) target = $region41
    $region40: #{tpu_custom_call.1} parent=1 // pred_region
      %74 = dma.done [#allocation3], 128
    $region41: #{tpu_custom_call.1} parent=1 // pred_fallthru
      _
    // Predicated region
    $region42: #{tpu_custom_call.1} parent=1 // pred_check
      _
    $region43: #{tpu_custom_call.1} parent=1 // pred_check_branch
      %76 = sbr.rel (0) target = $region45
    $region44: #{tpu_custom_call.1} parent=1 // pred_region
      %77 = dma.done [#allocation6], 1024
    $region45: #{tpu_custom_call.1} parent=1 // pred_fallthru
      _
    // Predicated region
    $region46: #{tpu_custom_call.1} parent=1 // pred_check
      _
    $region47: #{tpu_custom_call.1} parent=1 // pred_check_branch
      %79 = sbr.rel (0) target = $region49
    $region48: #{tpu_custom_call.1} parent=1 // pred_region
      %80 = dma.done [#allocation6], 128
    $region49: #{tpu_custom_call.1} parent=1 // pred_fallthru
      _
    // Predicated region
    $region50: #{tpu_custom_call.1} parent=1 // pred_check
      _
    $region51: #{tpu_custom_call.1} parent=1 // pred_check_branch
      %82 = sbr.rel (0) target = $region53
    $region52: #{tpu_custom_call.1} parent=1 // pred_region
      %83 = dma.done [#allocation9], 256
    $region53: #{tpu_custom_call.1} parent=1 // pred_fallthru
      _
    %v85 = vld [vmem:[%s0] sm:$0xff]
    %v86 = vpack.c.bf16 %v85, %v85
    %v87 = vld [vmem:[#allocation8] sm:$0xf]
    %v88 = vld [vmem:[#allocation8 + $0x4] sm:$0xf]
    %v89 = vld [vmem:[#allocation8 + $0x8] sm:$0xf]
    %v90 = vld [vmem:[#allocation8 + $0xc] sm:$0xf]
    %v91 = vld [vmem:[%s5] sm:$0xf]
    %v92 = vld [vmem:[%s5 + $0x4] sm:$0xf]
    %v93 = vld [vmem:[%s5 + $0x8] sm:$0xf]
    %v94 = vld [vmem:[%s5 + $0xc] sm:$0xf]
    %v95 = vld [vmem:[%s5 + $0x10] sm:$0x1]
    %v96 = vld [vmem:[%s7] sm:$0xf]
    %v97 = vld [vmem:[%s7 + $0x4] sm:$0xf]
    %v98 = vld [vmem:[%s7 + $0x8] sm:$0xf]
    %v99 = vld [vmem:[%s7 + $0xc] sm:$0xf]
    %v100 = vld [vmem:[%s6] sm:$0x1]
    %v102 = vlaneseq
    %v103 = vshrl.u32 %v102, 7
    %v104 = vsub.s32 0, %v103
    %v105 = vrot.slane %v100, %v104
    %v107 = vld [vmem:[%s8] sm:$0x1]
    %v109 = vlaneseq
    %v110 = vshrl.u32 %v109, 7
    %v111 = vsub.s32 0, %v110
    %v112 = vrot.slane %v107, %v111
    %v114 = vld [vmem:[#allocation5] sm:$0xff]
    %v115 = vld [vmem:[#allocation5 + $0x8] sm:$0xff]
    %v116 = vld [vmem:[#allocation5 + $0x10] sm:$0xff]
    %v117 = vld [vmem:[#allocation5 + $0x18] sm:$0xff]
    %v118 = vld [vmem:[#allocation5 + $0x20] sm:$0xff]
    %v119 = vld [vmem:[#allocation5 + $0x28] sm:$0xff]
    %v120 = vld [vmem:[#allocation5 + $0x30] sm:$0xff]
    %v121 = vld [vmem:[#allocation5 + $0x38] sm:$0xff]
    %v122 = vld [vmem:[#allocation7] sm:$0xff]
    %v124 = vlaneseq
    %v125 = vshrl.u32 %v124, 7
    %v126 = vsub.s32 0, %v125
    %v127 = vrot.slane %v122, %v126
    %v128 = vlaneseq
    %v129 = vshrl.u32 %v128, 7
    %v130 = vsub.s32 1, %v129
    %v131 = vrot.slane %v122, %v130
    %v132 = vlaneseq
    %v133 = vshrl.u32 %v132, 7
    %v134 = vsub.s32 2, %v133
    %v135 = vrot.slane %v122, %v134
    %v136 = vlaneseq
    %v137 = vshrl.u32 %v136, 7
    %v138 = vsub.s32 3, %v137
    %v139 = vrot.slane %v122, %v138
    %v140 = vlaneseq
    %v141 = vshrl.u32 %v140, 7
    %v142 = vsub.s32 4, %v141
    %v143 = vrot.slane %v122, %v142
    %v144 = vlaneseq
    %v145 = vshrl.u32 %v144, 7
    %v146 = vsub.s32 5, %v145
    %v147 = vrot.slane %v122, %v146
    %v148 = vlaneseq
    %v149 = vshrl.u32 %v148, 7
    %v150 = vsub.s32 6, %v149
    %v151 = vrot.slane %v122, %v150
    %v152 = vlaneseq
    %v153 = vshrl.u32 %v152, 7
    %v154 = vsub.s32 7, %v153
    %v155 = vrot.slane %v122, %v154
    %v172 = vunpack.c.l.b16 %v114
    %v173 = vunpack.c.h.b16 %v114
    %v174 = vunpack.c.l.b16 %v115
    %v175 = vunpack.c.h.b16 %v115
    %v176 = vunpack.c.l.b16 %v116
    %v177 = vunpack.c.h.b16 %v116
    %v178 = vunpack.c.l.b16 %v117
    %v179 = vunpack.c.h.b16 %v117
    %v180 = vunpack.c.l.b16 %v118
    %v181 = vunpack.c.h.b16 %v118
    %v182 = vunpack.c.l.b16 %v119
    %v183 = vunpack.c.h.b16 %v119
    %v184 = vunpack.c.l.b16 %v120
    %v185 = vunpack.c.h.b16 %v120
    %v186 = vunpack.c.l.b16 %v121
    %v187 = vunpack.c.h.b16 %v121
    %v188 = vpack.c.b16 %v180, %v172
    %v189 = vpack.c.b16 %v181, %v173
    %v190 = vpack.c.b16 %v182, %v174
    %v191 = vpack.c.b16 %v183, %v175
    %v192 = vpack.c.b16 %v184, %v176
    %v193 = vpack.c.b16 %v185, %v177
    %v194 = vpack.c.b16 %v186, %v178
    %v195 = vpack.c.b16 %v187, %v179
    %vm204 = vcmask 130048
    %v206 = vsel %vm204, %v86, 0
    %208 = vmatprep.subr.bf16.mxu0 %v189
    %209 = vmatpush1.bf16.msra.mxu0 %v188
    %210 = vmatprep.subr.bf16.mxu0 0
    %211 = vmatpush1.bf16.msra.mxu0 0
    %212 = vmatprep.subr.bf16.mxu0 0
    %213 = vmatpush1.bf16.msra.mxu0 0
    %214 = vmatprep.subr.bf16.mxu0 0
    %215 = vmatpush1.bf16.msra.mxu0 0
    %216 = vmatprep.subr.bf16.mxu0 0
    %217 = vmatpush1.bf16.msra.mxu0 0
    %218 = vmatprep.subr.bf16.mxu0 0
    %219 = vmatpush1.bf16.msra.mxu0 0
    %220 = vmatprep.subr.bf16.mxu0 0
    %221 = vmatpush1.bf16.msra.mxu0 0
    %222 = vmatprep.subr.bf16.mxu0 0
    %223 = vmatpush1.bf16.msra.mxu0 0
    %224 = vmatprep.subr.bf16.mxu0 0
    %225 = vmatpush1.bf16.msra.mxu0 0
    %226 = vmatprep.subr.bf16.mxu0 0
    %227 = vmatpush1.bf16.msra.mxu0 0
    %228 = vmatprep.subr.bf16.mxu0 0
    %229 = vmatpush1.bf16.msra.mxu0 0
    %230 = vmatprep.subr.bf16.mxu0 0
    %231 = vmatpush1.bf16.msra.mxu0 0
    %232 = vmatprep.subr.bf16.mxu0 0
    %233 = vmatpush1.bf16.msra.mxu0 0
    %234 = vmatprep.subr.bf16.mxu0 0
    %235 = vmatpush1.bf16.msra.mxu0 0
    %236 = vmatprep.subr.bf16.mxu0 0
    %237 = vmatpush1.bf16.msra.mxu0 0
    %238 = vmatprep.subr.bf16.mxu0 0
    %239 = vmatpush1.bf16.msra.mxu0 0
    %240 = vmatprep.mubr.bf16.mxu0 0
    %241 = vmatmul.mubr.bf16.gmra.mrb[0].mxu0 %v206
    %v242 = vpop.f32.mrb[0].mxu0
    %v243 = vadd.f32 %v127, %v242
    %v244 = vpop.f32.mrb[0].mxu0
    %v245 = vadd.f32 %v131, %v244
    %v246 = vpop.f32.mrb[0].mxu0
    %v247 = vpop.f32.mrb[0].mxu0
    %248 = vdwg.mxu0
    %249 = vmatprep.subr.bf16.mxu0 %v191
    %250 = vmatpush1.bf16.msra.mxu0 %v190
    %251 = vmatprep.subr.bf16.mxu0 0
    %252 = vmatpush1.bf16.msra.mxu0 0
    %253 = vmatprep.subr.bf16.mxu0 0
    %254 = vmatpush1.bf16.msra.mxu0 0
    %255 = vmatprep.subr.bf16.mxu0 0
    %256 = vmatpush1.bf16.msra.mxu0 0
    %257 = vmatprep.subr.bf16.mxu0 0
    %258 = vmatpush1.bf16.msra.mxu0 0
    %259 = vmatprep.subr.bf16.mxu0 0
    %260 = vmatpush1.bf16.msra.mxu0 0
    %261 = vmatprep.subr.bf16.mxu0 0
    %262 = vmatpush1.bf16.msra.mxu0 0
    %263 = vmatprep.subr.bf16.mxu0 0
    %264 = vmatpush1.bf16.msra.mxu0 0
    %265 = vmatprep.subr.bf16.mxu0 0
    %266 = vmatpush1.bf16.msra.mxu0 0
    %267 = vmatprep.subr.bf16.mxu0 0
    %268 = vmatpush1.bf16.msra.mxu0 0
    %269 = vmatprep.subr.bf16.mxu0 0
    %270 = vmatpush1.bf16.msra.mxu0 0
    %271 = vmatprep.subr.bf16.mxu0 0
    %272 = vmatpush1.bf16.msra.mxu0 0
    %273 = vmatprep.subr.bf16.mxu0 0
    %274 = vmatpush1.bf16.msra.mxu0 0
    %275 = vmatprep.subr.bf16.mxu0 0
    %276 = vmatpush1.bf16.msra.mxu0 0
    %277 = vmatprep.subr.bf16.mxu0 0
    %278 = vmatpush1.bf16.msra.mxu0 0
    %279 = vmatprep.subr.bf16.mxu0 0
    %280 = vmatpush1.bf16.msra.mxu0 0
    %281 = vmatprep.mubr.bf16.mxu0 0
    %282 = vmatmul.mubr.bf16.gmra.mrb[0].mxu0 %v206
    %v283 = vpop.f32.mrb[0].mxu0
    %v284 = vadd.f32 %v135, %v283
    %v285 = vpop.f32.mrb[0].mxu0
    %v286 = vadd.f32 %v139, %v285
    %v287 = vpop.f32.mrb[0].mxu0
    %v288 = vpop.f32.mrb[0].mxu0
    %289 = vdwg.mxu0
    %290 = vmatprep.subr.bf16.mxu0 %v193
    %291 = vmatpush1.bf16.msra.mxu0 %v192
    %292 = vmatprep.subr.bf16.mxu0 0
    %293 = vmatpush1.bf16.msra.mxu0 0
    %294 = vmatprep.subr.bf16.mxu0 0
    %295 = vmatpush1.bf16.msra.mxu0 0
    %296 = vmatprep.subr.bf16.mxu0 0
    %297 = vmatpush1.bf16.msra.mxu0 0
    %298 = vmatprep.subr.bf16.mxu0 0
    %299 = vmatpush1.bf16.msra.mxu0 0
    %300 = vmatprep.subr.bf16.mxu0 0
    %301 = vmatpush1.bf16.msra.mxu0 0
    %302 = vmatprep.subr.bf16.mxu0 0
    %303 = vmatpush1.bf16.msra.mxu0 0
    %304 = vmatprep.subr.bf16.mxu0 0
    %305 = vmatpush1.bf16.msra.mxu0 0
    %306 = vmatprep.subr.bf16.mxu0 0
    %307 = vmatpush1.bf16.msra.mxu0 0
    %308 = vmatprep.subr.bf16.mxu0 0
    %309 = vmatpush1.bf16.msra.mxu0 0
    %310 = vmatprep.subr.bf16.mxu0 0
    %311 = vmatpush1.bf16.msra.mxu0 0
    %312 = vmatprep.subr.bf16.mxu0 0
    %313 = vmatpush1.bf16.msra.mxu0 0
    %314 = vmatprep.subr.bf16.mxu0 0
    %315 = vmatpush1.bf16.msra.mxu0 0
    %316 = vmatprep.subr.bf16.mxu0 0
    %317 = vmatpush1.bf16.msra.mxu0 0
    %318 = vmatprep.subr.bf16.mxu0 0
    %319 = vmatpush1.bf16.msra.mxu0 0
    %320 = vmatprep.subr.bf16.mxu0 0
    %321 = vmatpush1.bf16.msra.mxu0 0
    %322 = vmatprep.mubr.bf16.mxu0 0
    %323 = vmatmul.mubr.bf16.gmra.mrb[0].mxu0 %v206
    %v324 = vpop.f32.mrb[0].mxu0
    %v325 = vadd.f32 %v143, %v324
    %v326 = vpop.f32.mrb[0].mxu0
    %v327 = vadd.f32 %v147, %v326
    %v328 = vpop.f32.mrb[0].mxu0
    %v329 = vpop.f32.mrb[0].mxu0
    %330 = vdwg.mxu0
    %331 = vmatprep.subr.bf16.mxu0 %v195
    %332 = vmatpush1.bf16.msra.mxu0 %v194
    %333 = vmatprep.subr.bf16.mxu0 0
    %334 = vmatpush1.bf16.msra.mxu0 0
    %335 = vmatprep.subr.bf16.mxu0 0
    %336 = vmatpush1.bf16.msra.mxu0 0
    %337 = vmatprep.subr.bf16.mxu0 0
    %338 = vmatpush1.bf16.msra.mxu0 0
    %339 = vmatprep.subr.bf16.mxu0 0
    %340 = vmatpush1.bf16.msra.mxu0 0
    %341 = vmatprep.subr.bf16.mxu0 0
    %342 = vmatpush1.bf16.msra.mxu0 0
    %343 = vmatprep.subr.bf16.mxu0 0
    %344 = vmatpush1.bf16.msra.mxu0 0
    %345 = vmatprep.subr.bf16.mxu0 0
    %346 = vmatpush1.bf16.msra.mxu0 0
    %347 = vmatprep.subr.bf16.mxu0 0
    %348 = vmatpush1.bf16.msra.mxu0 0
    %349 = vmatprep.subr.bf16.mxu0 0
    %350 = vmatpush1.bf16.msra.mxu0 0
    %351 = vmatprep.subr.bf16.mxu0 0
    %352 = vmatpush1.bf16.msra.mxu0 0
    %353 = vmatprep.subr.bf16.mxu0 0
    %354 = vmatpush1.bf16.msra.mxu0 0
    %355 = vmatprep.subr.bf16.mxu0 0
    %356 = vmatpush1.bf16.msra.mxu0 0
    %357 = vmatprep.subr.bf16.mxu0 0
    %358 = vmatpush1.bf16.msra.mxu0 0
    %359 = vmatprep.subr.bf16.mxu0 0
    %360 = vmatpush1.bf16.msra.mxu0 0
    %361 = vmatprep.subr.bf16.mxu0 0
    %362 = vmatpush1.bf16.msra.mxu0 0
    %363 = vmatprep.mubr.bf16.mxu0 0
    %364 = vmatmul.mubr.bf16.gmra.mrb[0].mxu0 %v206
    %v365 = vpop.f32.mrb[0].mxu0
    %v366 = vadd.f32 %v151, %v365
    %v367 = vpop.f32.mrb[0].mxu0
    %v368 = vadd.f32 %v155, %v367
    %v369 = vpop.f32.mrb[0].mxu0
    %v370 = vpop.f32.mrb[0].mxu0
    %371 = vdwg.mxu0
    %v376 = vunpack.c.l.b16 %v87
    %v377 = vunpack.c.l.b16 %v88
    %v378 = vunpack.c.l.b16 %v89
    %v379 = vunpack.c.l.b16 %v90
    %v380 = vpack.c.b16 %v377, %v376
    %v381 = vpack.c.b16 %v379, %v378
    %vm384 = vcmask 261120
    %v386 = vsel %vm384, 0, 0
    %388 = vmatprep.subr.bf16.mxu0 0
    %389 = vmatpush1.bf16.msra.mxu0 %v380
    %390 = vmatprep.subr.bf16.mxu0 0
    %391 = vmatpush1.bf16.msra.mxu0 %v381
    %392 = vmatprep.subr.bf16.mxu0 0
    %393 = vmatpush1.bf16.msra.mxu0 0
    %394 = vmatprep.subr.bf16.mxu0 0
    %395 = vmatpush1.bf16.msra.mxu0 0
    %396 = vmatprep.subr.bf16.mxu0 0
    %397 = vmatpush1.bf16.msra.mxu0 0
    %398 = vmatprep.subr.bf16.mxu0 0
    %399 = vmatpush1.bf16.msra.mxu0 0
    %400 = vmatprep.subr.bf16.mxu0 0
    %401 = vmatpush1.bf16.msra.mxu0 0
    %402 = vmatprep.subr.bf16.mxu0 0
    %403 = vmatpush1.bf16.msra.mxu0 0
    %404 = vmatprep.subr.bf16.mxu0 0
    %405 = vmatpush1.bf16.msra.mxu0 0
    %406 = vmatprep.subr.bf16.mxu0 0
    %407 = vmatpush1.bf16.msra.mxu0 0
    %408 = vmatprep.subr.bf16.mxu0 0
    %409 = vmatpush1.bf16.msra.mxu0 0
    %410 = vmatprep.subr.bf16.mxu0 0
    %411 = vmatpush1.bf16.msra.mxu0 0
    %412 = vmatprep.subr.bf16.mxu0 0
    %413 = vmatpush1.bf16.msra.mxu0 0
    %414 = vmatprep.subr.bf16.mxu0 0
    %415 = vmatpush1.bf16.msra.mxu0 0
    %416 = vmatprep.subr.bf16.mxu0 0
    %417 = vmatpush1.bf16.msra.mxu0 0
    %418 = vmatprep.subr.bf16.mxu0 0
    %419 = vmatpush1.bf16.msra.mxu0 0
    %420 = vmatprep.mubr.bf16.mxu0 0
    %421 = vmatmul.mubr.bf16.gmra.mrb[0].mxu0 %v386
    %v422 = vpop.f32.mrb[0].mxu0
    %v423 = vadd.f32 0.0, %v422
    %v424 = vpop.f32.mrb[0].mxu0
    %v425 = vpop.f32.mrb[0].mxu0
    %v426 = vpop.f32.mrb[0].mxu0
    %427 = vdwg.mxu0
    %v428 = vadd.f32 %v243, %v423
    %v429 = vtanh.pop %v428
    %v430 = vmul.f32 %v429, 0.5
    %v431 = vadd.f32 %v430, 0.5
    %v432 = vmul.f32 %v431, 0.0
    %434 = vrot.lane.b32.xlu0 %v429, 64
    %v435 = vpop.permute.xlu0 %434
    %v437 = vmul.f32 %v431, %v435
    %439 = vrot.lane.b32.xlu0 %v437, 32
    %v440 = vpop.permute.xlu0 %439
    %v442 = vadd.f32 %v432, %v440
    %v443 = vtanh.pop %v442
    %445 = vrot.lane.b32.xlu0 %v443, 64
    %v446 = vpop.permute.xlu0 %445
    %v448 = vmul.f32 %v431, %v446
    %v449 = vpack.c.bf16 %v448, %v448
    %451 = vrot.lane.b32.xlu0 %v449, 32
    %v452 = vpop.permute.xlu0 %451
    %v454 = vsel %vm384, %v452, 0
    %456 = vmatprep.subr.bf16.mxu0 0
    %457 = vmatpush1.bf16.msra.mxu0 %v380
    %458 = vmatprep.subr.bf16.mxu0 0
    %459 = vmatpush1.bf16.msra.mxu0 %v381
    %460 = vmatprep.subr.bf16.mxu0 0
    %461 = vmatpush1.bf16.msra.mxu0 0
    %462 = vmatprep.subr.bf16.mxu0 0
    %463 = vmatpush1.bf16.msra.mxu0 0
    %464 = vmatprep.subr.bf16.mxu0 0
    %465 = vmatpush1.bf16.msra.mxu0 0
    %466 = vmatprep.subr.bf16.mxu0 0
    %467 = vmatpush1.bf16.msra.mxu0 0
    %468 = vmatprep.subr.bf16.mxu0 0
    %469 = vmatpush1.bf16.msra.mxu0 0
    %470 = vmatprep.subr.bf16.mxu0 0
    %471 = vmatpush1.bf16.msra.mxu0 0
    %472 = vmatprep.subr.bf16.mxu0 0
    %473 = vmatpush1.bf16.msra.mxu0 0
    %474 = vmatprep.subr.bf16.mxu0 0
    %475 = vmatpush1.bf16.msra.mxu0 0
    %476 = vmatprep.subr.bf16.mxu0 0
    %477 = vmatpush1.bf16.msra.mxu0 0
    %478 = vmatprep.subr.bf16.mxu0 0
    %479 = vmatpush1.bf16.msra.mxu0 0
    %480 = vmatprep.subr.bf16.mxu0 0
    %481 = vmatpush1.bf16.msra.mxu0 0
    %482 = vmatprep.subr.bf16.mxu0 0
    %483 = vmatpush1.bf16.msra.mxu0 0
    %484 = vmatprep.subr.bf16.mxu0 0
    %485 = vmatpush1.bf16.msra.mxu0 0
    %486 = vmatprep.subr.bf16.mxu0 0
    %487 = vmatpush1.bf16.msra.mxu0 0
    %488 = vmatprep.mubr.bf16.mxu0 0
    %489 = vmatmul.mubr.bf16.gmra.mrb[0].mxu0 %v454
    %v490 = vpop.f32.mrb[0].mxu0
    %v491 = vadd.f32 0.0, %v490
    %v492 = vpop.f32.mrb[0].mxu0
    %v493 = vpop.f32.mrb[0].mxu0
    %v494 = vpop.f32.mrb[0].mxu0
    %495 = vdwg.mxu0
    %v496 = vadd.f32 %v245, %v491
    %v497 = vtanh.pop %v496
    %v498 = vmul.f32 %v497, 0.5
    %v499 = vadd.f32 %v498, 0.5
    %v500 = vmul.f32 %v499, %v442
    %502 = vrot.lane.b32.xlu0 %v497, 64
    %v503 = vpop.permute.xlu0 %502
    %v505 = vmul.f32 %v499, %v503
    %507 = vrot.lane.b32.xlu0 %v505, 32
    %v508 = vpop.permute.xlu0 %507
    %v510 = vadd.f32 %v500, %v508
    %v511 = vtanh.pop %v510
    %513 = vrot.lane.b32.xlu0 %v511, 64
    %v514 = vpop.permute.xlu0 %513
    %v516 = vmul.f32 %v499, %v514
    %v517 = vpack.c.bf16 %v516, %v516
    %519 = vrot.lane.b32.xlu0 %v517, 32
    %v520 = vpop.permute.xlu0 %519
    %v522 = vsel %vm384, %v520, 0
    %524 = vmatprep.subr.bf16.mxu0 0
    %525 = vmatpush1.bf16.msra.mxu0 %v380
    %526 = vmatprep.subr.bf16.mxu0 0
    %527 = vmatpush1.bf16.msra.mxu0 %v381
    %528 = vmatprep.subr.bf16.mxu0 0
    %529 = vmatpush1.bf16.msra.mxu0 0
    %530 = vmatprep.subr.bf16.mxu0 0
    %531 = vmatpush1.bf16.msra.mxu0 0
    %532 = vmatprep.subr.bf16.mxu0 0
    %533 = vmatpush1.bf16.msra.mxu0 0
    %534 = vmatprep.subr.bf16.mxu0 0
    %535 = vmatpush1.bf16.msra.mxu0 0
    %536 = vmatprep.subr.bf16.mxu0 0
    %537 = vmatpush1.bf16.msra.mxu0 0
    %538 = vmatprep.subr.bf16.mxu0 0
    %539 = vmatpush1.bf16.msra.mxu0 0
    %540 = vmatprep.subr.bf16.mxu0 0
    %541 = vmatpush1.bf16.msra.mxu0 0
    %542 = vmatprep.subr.bf16.mxu0 0
    %543 = vmatpush1.bf16.msra.mxu0 0
    %544 = vmatprep.subr.bf16.mxu0 0
    %545 = vmatpush1.bf16.msra.mxu0 0
    %546 = vmatprep.subr.bf16.mxu0 0
    %547 = vmatpush1.bf16.msra.mxu0 0
    %548 = vmatprep.subr.bf16.mxu0 0
    %549 = vmatpush1.bf16.msra.mxu0 0
    %550 = vmatprep.subr.bf16.mxu0 0
    %551 = vmatpush1.bf16.msra.mxu0 0
    %552 = vmatprep.subr.bf16.mxu0 0
    %553 = vmatpush1.bf16.msra.mxu0 0
    %554 = vmatprep.subr.bf16.mxu0 0
    %555 = vmatpush1.bf16.msra.mxu0 0
    %556 = vmatprep.mubr.bf16.mxu0 0
    %557 = vmatmul.mubr.bf16.gmra.mrb[0].mxu0 %v522
    %v558 = vpop.f32.mrb[0].mxu0
    %v559 = vadd.f32 0.0, %v558
    %v560 = vpop.f32.mrb[0].mxu0
    %v561 = vpop.f32.mrb[0].mxu0
    %v562 = vpop.f32.mrb[0].mxu0
    %563 = vdwg.mxu0
    %v564 = vadd.f32 %v284, %v559
    %v565 = vtanh.pop %v564
    %v566 = vmul.f32 %v565, 0.5
    %v567 = vadd.f32 %v566, 0.5
    %v568 = vmul.f32 %v567, %v510
    %570 = vrot.lane.b32.xlu0 %v565, 64
    %v571 = vpop.permute.xlu0 %570
    %v573 = vmul.f32 %v567, %v571
    %575 = vrot.lane.b32.xlu0 %v573, 32
    %v576 = vpop.permute.xlu0 %575
    %v578 = vadd.f32 %v568, %v576
    %v579 = vtanh.pop %v578
    %581 = vrot.lane.b32.xlu0 %v579, 64
    %v582 = vpop.permute.xlu0 %581
    %v584 = vmul.f32 %v567, %v582
    %v585 = vpack.c.bf16 %v584, %v584
    %587 = vrot.lane.b32.xlu0 %v585, 32
    %v588 = vpop.permute.xlu0 %587
    %v590 = vsel %vm384, %v588, 0
    %592 = vmatprep.subr.bf16.mxu0 0
    %593 = vmatpush1.bf16.msra.mxu0 %v380
    %594 = vmatprep.subr.bf16.mxu0 0
    %595 = vmatpush1.bf16.msra.mxu0 %v381
    %596 = vmatprep.subr.bf16.mxu0 0
    %597 = vmatpush1.bf16.msra.mxu0 0
    %598 = vmatprep.subr.bf16.mxu0 0
    %599 = vmatpush1.bf16.msra.mxu0 0
    %600 = vmatprep.subr.bf16.mxu0 0
    %601 = vmatpush1.bf16.msra.mxu0 0
    %602 = vmatprep.subr.bf16.mxu0 0
    %603 = vmatpush1.bf16.msra.mxu0 0
    %604 = vmatprep.subr.bf16.mxu0 0
    %605 = vmatpush1.bf16.msra.mxu0 0
    %606 = vmatprep.subr.bf16.mxu0 0
    %607 = vmatpush1.bf16.msra.mxu0 0
    %608 = vmatprep.subr.bf16.mxu0 0
    %609 = vmatpush1.bf16.msra.mxu0 0
    %610 = vmatprep.subr.bf16.mxu0 0
    %611 = vmatpush1.bf16.msra.mxu0 0
    %612 = vmatprep.subr.bf16.mxu0 0
    %613 = vmatpush1.bf16.msra.mxu0 0
    %614 = vmatprep.subr.bf16.mxu0 0
    %615 = vmatpush1.bf16.msra.mxu0 0
    %616 = vmatprep.subr.bf16.mxu0 0
    %617 = vmatpush1.bf16.msra.mxu0 0
    %618 = vmatprep.subr.bf16.mxu0 0
    %619 = vmatpush1.bf16.msra.mxu0 0
    %620 = vmatprep.subr.bf16.mxu0 0
    %621 = vmatpush1.bf16.msra.mxu0 0
    %622 = vmatprep.subr.bf16.mxu0 0
    %623 = vmatpush1.bf16.msra.mxu0 0
    %624 = vmatprep.mubr.bf16.mxu0 0
    %625 = vmatmul.mubr.bf16.gmra.mrb[0].mxu0 %v590
    %v626 = vpop.f32.mrb[0].mxu0
    %v627 = vadd.f32 0.0, %v626
    %v628 = vpop.f32.mrb[0].mxu0
    %v629 = vpop.f32.mrb[0].mxu0
    %v630 = vpop.f32.mrb[0].mxu0
    %631 = vdwg.mxu0
    %v632 = vadd.f32 %v286, %v627
    %v633 = vtanh.pop %v632
    %v634 = vmul.f32 %v633, 0.5
    %v635 = vadd.f32 %v634, 0.5
    %v636 = vmul.f32 %v635, %v578
    %638 = vrot.lane.b32.xlu0 %v633, 64
    %v639 = vpop.permute.xlu0 %638
    %v641 = vmul.f32 %v635, %v639
    %643 = vrot.lane.b32.xlu0 %v641, 32
    %v644 = vpop.permute.xlu0 %643
    %v646 = vadd.f32 %v636, %v644
    %v647 = vtanh.pop %v646
    %649 = vrot.lane.b32.xlu0 %v647, 64
    %v650 = vpop.permute.xlu0 %649
    %v652 = vmul.f32 %v635, %v650
    %v653 = vpack.c.bf16 %v652, %v652
    %655 = vrot.lane.b32.xlu0 %v653, 32
    %v656 = vpop.permute.xlu0 %655
    %v658 = vsel %vm384, %v656, 0
    %660 = vmatprep.subr.bf16.mxu0 0
    %661 = vmatpush1.bf16.msra.mxu0 %v380
    %662 = vmatprep.subr.bf16.mxu0 0
    %663 = vmatpush1.bf16.msra.mxu0 %v381
    %664 = vmatprep.subr.bf16.mxu0 0
    %665 = vmatpush1.bf16.msra.mxu0 0
    %666 = vmatprep.subr.bf16.mxu0 0
    %667 = vmatpush1.bf16.msra.mxu0 0
    %668 = vmatprep.subr.bf16.mxu0 0
    %669 = vmatpush1.bf16.msra.mxu0 0
    %670 = vmatprep.subr.bf16.mxu0 0
    %671 = vmatpush1.bf16.msra.mxu0 0
    %672 = vmatprep.subr.bf16.mxu0 0
    %673 = vmatpush1.bf16.msra.mxu0 0
    %674 = vmatprep.subr.bf16.mxu0 0
    %675 = vmatpush1.bf16.msra.mxu0 0
    %676 = vmatprep.subr.bf16.mxu0 0
    %677 = vmatpush1.bf16.msra.mxu0 0
    %678 = vmatprep.subr.bf16.mxu0 0
    %679 = vmatpush1.bf16.msra.mxu0 0
    %680 = vmatprep.subr.bf16.mxu0 0
    %681 = vmatpush1.bf16.msra.mxu0 0
    %682 = vmatprep.subr.bf16.mxu0 0
    %683 = vmatpush1.bf16.msra.mxu0 0
    %684 = vmatprep.subr.bf16.mxu0 0
    %685 = vmatpush1.bf16.msra.mxu0 0
    %686 = vmatprep.subr.bf16.mxu0 0
    %687 = vmatpush1.bf16.msra.mxu0 0
    %688 = vmatprep.subr.bf16.mxu0 0
    %689 = vmatpush1.bf16.msra.mxu0 0
    %690 = vmatprep.subr.bf16.mxu0 0
    %691 = vmatpush1.bf16.msra.mxu0 0
    %692 = vmatprep.mubr.bf16.mxu0 0
    %693 = vmatmul.mubr.bf16.gmra.mrb[0].mxu0 %v658
    %v694 = vpop.f32.mrb[0].mxu0
    %v695 = vadd.f32 0.0, %v694
    %v696 = vpop.f32.mrb[0].mxu0
    %v697 = vpop.f32.mrb[0].mxu0
    %v698 = vpop.f32.mrb[0].mxu0
    %699 = vdwg.mxu0
    %v700 = vadd.f32 %v325, %v695
    %v701 = vtanh.pop %v700
    %v702 = vmul.f32 %v701, 0.5
    %v703 = vadd.f32 %v702, 0.5
    %v704 = vmul.f32 %v703, %v646
    %706 = vrot.lane.b32.xlu0 %v701, 64
    %v707 = vpop.permute.xlu0 %706
    %v709 = vmul.f32 %v703, %v707
    %711 = vrot.lane.b32.xlu0 %v709, 32
    %v712 = vpop.permute.xlu0 %711
    %v714 = vadd.f32 %v704, %v712
    %v715 = vtanh.pop %v714
    %717 = vrot.lane.b32.xlu0 %v715, 64
    %v718 = vpop.permute.xlu0 %717
    %v720 = vmul.f32 %v703, %v718
    %v721 = vpack.c.bf16 %v720, %v720
    %723 = vrot.lane.b32.xlu0 %v721, 32
    %v724 = vpop.permute.xlu0 %723
    %v726 = vsel %vm384, %v724, 0
    %728 = vmatprep.subr.bf16.mxu0 0
    %729 = vmatpush1.bf16.msra.mxu0 %v380
    %730 = vmatprep.subr.bf16.mxu0 0
    %731 = vmatpush1.bf16.msra.mxu0 %v381
    %732 = vmatprep.subr.bf16.mxu0 0
    %733 = vmatpush1.bf16.msra.mxu0 0
    %734 = vmatprep.subr.bf16.mxu0 0
    %735 = vmatpush1.bf16.msra.mxu0 0
    %736 = vmatprep.subr.bf16.mxu0 0
    %737 = vmatpush1.bf16.msra.mxu0 0
    %738 = vmatprep.subr.bf16.mxu0 0
    %739 = vmatpush1.bf16.msra.mxu0 0
    %740 = vmatprep.subr.bf16.mxu0 0
    %741 = vmatpush1.bf16.msra.mxu0 0
    %742 = vmatprep.subr.bf16.mxu0 0
    %743 = vmatpush1.bf16.msra.mxu0 0
    %744 = vmatprep.subr.bf16.mxu0 0
    %745 = vmatpush1.bf16.msra.mxu0 0
    %746 = vmatprep.subr.bf16.mxu0 0
    %747 = vmatpush1.bf16.msra.mxu0 0
    %748 = vmatprep.subr.bf16.mxu0 0
    %749 = vmatpush1.bf16.msra.mxu0 0
    %750 = vmatprep.subr.bf16.mxu0 0
    %751 = vmatpush1.bf16.msra.mxu0 0
    %752 = vmatprep.subr.bf16.mxu0 0
    %753 = vmatpush1.bf16.msra.mxu0 0
    %754 = vmatprep.subr.bf16.mxu0 0
    %755 = vmatpush1.bf16.msra.mxu0 0
    %756 = vmatprep.subr.bf16.mxu0 0
    %757 = vmatpush1.bf16.msra.mxu0 0
    %758 = vmatprep.subr.bf16.mxu0 0
    %759 = vmatpush1.bf16.msra.mxu0 0
    %760 = vmatprep.mubr.bf16.mxu0 0
    %761 = vmatmul.mubr.bf16.gmra.mrb[0].mxu0 %v726
    %v762 = vpop.f32.mrb[0].mxu0
    %v763 = vadd.f32 0.0, %v762
    %v764 = vpop.f32.mrb[0].mxu0
    %v765 = vpop.f32.mrb[0].mxu0
    %v766 = vpop.f32.mrb[0].mxu0
    %767 = vdwg.mxu0
    %v768 = vadd.f32 %v327, %v763
    %v769 = vtanh.pop %v768
    %v770 = vmul.f32 %v769, 0.5
    %v771 = vadd.f32 %v770, 0.5
    %v772 = vmul.f32 %v771, %v714
    %774 = vrot.lane.b32.xlu0 %v769, 64
    %v775 = vpop.permute.xlu0 %774
    %v777 = vmul.f32 %v771, %v775
    %779 = vrot.lane.b32.xlu0 %v777, 32
    %v780 = vpop.permute.xlu0 %779
    %v782 = vadd.f32 %v772, %v780
    %v783 = vtanh.pop %v782
    %785 = vrot.lane.b32.xlu0 %v783, 64
    %v786 = vpop.permute.xlu0 %785
    %v788 = vmul.f32 %v771, %v786
    %v789 = vpack.c.bf16 %v788, %v788
    %791 = vrot.lane.b32.xlu0 %v789, 32
    %v792 = vpop.permute.xlu0 %791
    %v794 = vsel %vm384, %v792, 0
    %796 = vmatprep.subr.bf16.mxu0 0
    %797 = vmatpush1.bf16.msra.mxu0 %v380
    %798 = vmatprep.subr.bf16.mxu0 0
    %799 = vmatpush1.bf16.msra.mxu0 %v381
    %800 = vmatprep.subr.bf16.mxu0 0
    %801 = vmatpush1.bf16.msra.mxu0 0
    %802 = vmatprep.subr.bf16.mxu0 0
    %803 = vmatpush1.bf16.msra.mxu0 0
    %804 = vmatprep.subr.bf16.mxu0 0
    %805 = vmatpush1.bf16.msra.mxu0 0
    %806 = vmatprep.subr.bf16.mxu0 0
    %807 = vmatpush1.bf16.msra.mxu0 0
    %808 = vmatprep.subr.bf16.mxu0 0
    %809 = vmatpush1.bf16.msra.mxu0 0
    %810 = vmatprep.subr.bf16.mxu0 0
    %811 = vmatpush1.bf16.msra.mxu0 0
    %812 = vmatprep.subr.bf16.mxu0 0
    %813 = vmatpush1.bf16.msra.mxu0 0
    %814 = vmatprep.subr.bf16.mxu0 0
    %815 = vmatpush1.bf16.msra.mxu0 0
    %816 = vmatprep.subr.bf16.mxu0 0
    %817 = vmatpush1.bf16.msra.mxu0 0
    %818 = vmatprep.subr.bf16.mxu0 0
    %819 = vmatpush1.bf16.msra.mxu0 0
    %820 = vmatprep.subr.bf16.mxu0 0
    %821 = vmatpush1.bf16.msra.mxu0 0
    %822 = vmatprep.subr.bf16.mxu0 0
    %823 = vmatpush1.bf16.msra.mxu0 0
    %824 = vmatprep.subr.bf16.mxu0 0
    %825 = vmatpush1.bf16.msra.mxu0 0
    %826 = vmatprep.subr.bf16.mxu0 0
    %827 = vmatpush1.bf16.msra.mxu0 0
    %828 = vmatprep.mubr.bf16.mxu0 0
    %829 = vmatmul.mubr.bf16.gmra.mrb[0].mxu0 %v794
    %v830 = vpop.f32.mrb[0].mxu0
    %v831 = vadd.f32 0.0, %v830
    %v832 = vpop.f32.mrb[0].mxu0
    %v833 = vpop.f32.mrb[0].mxu0
    %v834 = vpop.f32.mrb[0].mxu0
    %835 = vdwg.mxu0
    %v836 = vadd.f32 %v366, %v831
    %v837 = vtanh.pop %v836
    %v838 = vmul.f32 %v837, 0.5
    %v839 = vadd.f32 %v838, 0.5
    %v840 = vmul.f32 %v839, %v782
    %842 = vrot.lane.b32.xlu0 %v837, 64
    %v843 = vpop.permute.xlu0 %842
    %v845 = vmul.f32 %v839, %v843
    %847 = vrot.lane.b32.xlu0 %v845, 32
    %v848 = vpop.permute.xlu0 %847
    %v850 = vadd.f32 %v840, %v848
    %v851 = vtanh.pop %v850
    %853 = vrot.lane.b32.xlu0 %v851, 64
    %v854 = vpop.permute.xlu0 %853
    %v856 = vmul.f32 %v839, %v854
    %v857 = vpack.c.bf16 %v856, %v856
    %859 = vrot.lane.b32.xlu0 %v857, 32
    %v860 = vpop.permute.xlu0 %859
    %v862 = vsel %vm384, %v860, 0
    %864 = vmatprep.subr.bf16.mxu0 0
    %865 = vmatpush1.bf16.msra.mxu0 %v380
    %866 = vmatprep.subr.bf16.mxu0 0
    %867 = vmatpush1.bf16.msra.mxu0 %v381
    %868 = vmatprep.subr.bf16.mxu0 0
    %869 = vmatpush1.bf16.msra.mxu0 0
    %870 = vmatprep.subr.bf16.mxu0 0
    %871 = vmatpush1.bf16.msra.mxu0 0
    %872 = vmatprep.subr.bf16.mxu0 0
    %873 = vmatpush1.bf16.msra.mxu0 0
    %874 = vmatprep.subr.bf16.mxu0 0
    %875 = vmatpush1.bf16.msra.mxu0 0
    %876 = vmatprep.subr.bf16.mxu0 0
    %877 = vmatpush1.bf16.msra.mxu0 0
    %878 = vmatprep.subr.bf16.mxu0 0
    %879 = vmatpush1.bf16.msra.mxu0 0
    %880 = vmatprep.subr.bf16.mxu0 0
    %881 = vmatpush1.bf16.msra.mxu0 0
    %882 = vmatprep.subr.bf16.mxu0 0
    %883 = vmatpush1.bf16.msra.mxu0 0
    %884 = vmatprep.subr.bf16.mxu0 0
    %885 = vmatpush1.bf16.msra.mxu0 0
    %886 = vmatprep.subr.bf16.mxu0 0
    %887 = vmatpush1.bf16.msra.mxu0 0
    %888 = vmatprep.subr.bf16.mxu0 0
    %889 = vmatpush1.bf16.msra.mxu0 0
    %890 = vmatprep.subr.bf16.mxu0 0
    %891 = vmatpush1.bf16.msra.mxu0 0
    %892 = vmatprep.subr.bf16.mxu0 0
    %893 = vmatpush1.bf16.msra.mxu0 0
    %894 = vmatprep.subr.bf16.mxu0 0
    %895 = vmatpush1.bf16.msra.mxu0 0
    %896 = vmatprep.mubr.bf16.mxu0 0
    %897 = vmatmul.mubr.bf16.gmra.mrb[0].mxu0 %v862
    %v898 = vpop.f32.mrb[0].mxu0
    %v899 = vadd.f32 0.0, %v898
    %v900 = vpop.f32.mrb[0].mxu0
    %v901 = vpop.f32.mrb[0].mxu0
    %v902 = vpop.f32.mrb[0].mxu0
    %903 = vdwg.mxu0
    %v904 = vadd.f32 %v368, %v899
    %v905 = vtanh.pop %v904
    %v906 = vmul.f32 %v905, 0.5
    %v907 = vadd.f32 %v906, 0.5
    %v908 = vmul.f32 %v907, %v850
    %910 = vrot.lane.b32.xlu0 %v905, 64
    %v911 = vpop.permute.xlu0 %910
    %v913 = vmul.f32 %v907, %v911
    %915 = vrot.lane.b32.xlu0 %v913, 32
    %v916 = vpop.permute.xlu0 %915
    %v918 = vadd.f32 %v908, %v916
    %v919 = vtanh.pop %v918
    %921 = vrot.lane.b32.xlu0 %v919, 64
    %v922 = vpop.permute.xlu0 %921
    %v924 = vmul.f32 %v907, %v922
    %v925 = vpack.c.bf16 %v924, %v924
    %927 = vrot.lane.b32.xlu0 %v86, 114
    %v928 = vpop.permute.xlu0 %927
    %930 = vrot.lane.b32.xlu0 %v925, 34
    %v931 = vpop.permute.xlu0 %930
    %vm932 = vcmask 15360
    %v935 = vsel %vm932, %v928, %v931
    %v941 = vunpack.c.l.b16 %v91
    %v942 = vunpack.c.l.b16 %v92
    %v943 = vunpack.c.l.b16 %v93
    %v944 = vunpack.c.l.b16 %v94
    %v945 = vunpack.c.l.b16 %v95
    %v946 = vpack.c.b16 %v942, %v941
    %v947 = vpack.c.b16 %v944, %v943
    %v948 = vpack.c.b16 %v945, %v945
    %vm951 = vcmask 277504
    %v952 = vsel %vm951, %v935, 0
    %vm954 = vcmask 1040384
    %v956 = vsel %vm954, %v948, 0
    %958 = vmatprep.subr.bf16.mxu0 0
    %959 = vmatpush1.bf16.msra.mxu0 %v946
    %960 = vmatprep.subr.bf16.mxu0 0
    %961 = vmatpush1.bf16.msra.mxu0 %v947
    %962 = vmatprep.subr.bf16.mxu0 0
    %963 = vmatpush1.bf16.msra.mxu0 %v956
    %964 = vmatprep.subr.bf16.mxu0 0
    %965 = vmatpush1.bf16.msra.mxu0 0
    %966 = vmatprep.subr.bf16.mxu0 0
    %967 = vmatpush1.bf16.msra.mxu0 0
    %968 = vmatprep.subr.bf16.mxu0 0
    %969 = vmatpush1.bf16.msra.mxu0 0
    %970 = vmatprep.subr.bf16.mxu0 0
    %971 = vmatpush1.bf16.msra.mxu0 0
    %972 = vmatprep.subr.bf16.mxu0 0
    %973 = vmatpush1.bf16.msra.mxu0 0
    %974 = vmatprep.subr.bf16.mxu0 0
    %975 = vmatpush1.bf16.msra.mxu0 0
    %976 = vmatprep.subr.bf16.mxu0 0
    %977 = vmatpush1.bf16.msra.mxu0 0
    %978 = vmatprep.subr.bf16.mxu0 0
    %979 = vmatpush1.bf16.msra.mxu0 0
    %980 = vmatprep.subr.bf16.mxu0 0
    %981 = vmatpush1.bf16.msra.mxu0 0
    %982 = vmatprep.subr.bf16.mxu0 0
    %983 = vmatpush1.bf16.msra.mxu0 0
    %984 = vmatprep.subr.bf16.mxu0 0
    %985 = vmatpush1.bf16.msra.mxu0 0
    %986 = vmatprep.subr.bf16.mxu0 0
    %987 = vmatpush1.bf16.msra.mxu0 0
    %988 = vmatprep.subr.bf16.mxu0 0
    %989 = vmatpush1.bf16.msra.mxu0 0
    %990 = vmatprep.mubr.bf16.mxu0 0
    %991 = vmatmul.mubr.bf16.gmra.mrb[0].mxu0 %v952
    %v992 = vpop.f32.mrb[0].mxu0
    %v993 = vadd.f32 %v105, %v992
    %v994 = vpop.f32.mrb[0].mxu0
    %v995 = vpop.f32.mrb[0].mxu0
    %v996 = vpop.f32.mrb[0].mxu0
    %997 = vdwg.mxu0
    %v998 = vtanh.pop %v993
    %v999 = vmul.f32 %v998, 0.5
    %v1000 = vadd.f32 %v999, 0.5
    %v1001 = vmul.f32 %v1000, 0.0
    %1003 = vrot.lane.b32.xlu0 %v998, 64
    %v1004 = vpop.permute.xlu0 %1003
    %v1006 = vmul.f32 %v1000, %v1004
    %1008 = vrot.lane.b32.xlu0 %v1006, 32
    %v1009 = vpop.permute.xlu0 %1008
    %v1011 = vadd.f32 %v1001, %v1009
    %v1012 = vtanh.pop %v1011
    %1014 = vrot.lane.b32.xlu0 %v1012, 64
    %v1015 = vpop.permute.xlu0 %1014
    %v1017 = vmul.f32 %v1000, %v1015
    %v1018 = vpack.c.bf16 %v1017, %v1017
    %1020 = vrot.lane.b32.xlu0 %v1018, 32
    %v1021 = vpop.permute.xlu0 %1020
    %v1026 = vunpack.c.l.b16 %v96
    %v1027 = vunpack.c.l.b16 %v97
    %v1028 = vunpack.c.l.b16 %v98
    %v1029 = vunpack.c.l.b16 %v99
    %v1030 = vpack.c.b16 %v1027, %v1026
    %v1031 = vpack.c.b16 %v1029, %v1028
    %v1035 = vsel %vm384, %v1021, 0
    %1037 = vmatprep.subr.bf16.mxu0 0
    %1038 = vmatpush1.bf16.msra.mxu0 %v1030
    %1039 = vmatprep.subr.bf16.mxu0 0
    %1040 = vmatpush1.bf16.msra.mxu0 %v1031
    %1041 = vmatprep.subr.bf16.mxu0 0
    %1042 = vmatpush1.bf16.msra.mxu0 0
    %1043 = vmatprep.subr.bf16.mxu0 0
    %1044 = vmatpush1.bf16.msra.mxu0 0
    %1045 = vmatprep.subr.bf16.mxu0 0
    %1046 = vmatpush1.bf16.msra.mxu0 0
    %1047 = vmatprep.subr.bf16.mxu0 0
    %1048 = vmatpush1.bf16.msra.mxu0 0
    %1049 = vmatprep.subr.bf16.mxu0 0
    %1050 = vmatpush1.bf16.msra.mxu0 0
    %1051 = vmatprep.subr.bf16.mxu0 0
    %1052 = vmatpush1.bf16.msra.mxu0 0
    %1053 = vmatprep.subr.bf16.mxu0 0
    %1054 = vmatpush1.bf16.msra.mxu0 0
    %1055 = vmatprep.subr.bf16.mxu0 0
    %1056 = vmatpush1.bf16.msra.mxu0 0
    %1057 = vmatprep.subr.bf16.mxu0 0
    %1058 = vmatpush1.bf16.msra.mxu0 0
    %1059 = vmatprep.subr.bf16.mxu0 0
    %1060 = vmatpush1.bf16.msra.mxu0 0
    %1061 = vmatprep.subr.bf16.mxu0 0
    %1062 = vmatpush1.bf16.msra.mxu0 0
    %1063 = vmatprep.subr.bf16.mxu0 0
    %1064 = vmatpush1.bf16.msra.mxu0 0
    %1065 = vmatprep.subr.bf16.mxu0 0
    %1066 = vmatpush1.bf16.msra.mxu0 0
    %1067 = vmatprep.subr.bf16.mxu0 0
    %1068 = vmatpush1.bf16.msra.mxu0 0
    %1069 = vmatprep.mubr.bf16.mxu0 0
    %1070 = vmatmul.mubr.bf16.gmra.mrb[0].mxu0 %v1035
    %v1071 = vpop.f32.mrb[0].mxu0
    %v1072 = vadd.f32 %v112, %v1071
    %v1073 = vpop.f32.mrb[0].mxu0
    %v1074 = vpop.f32.mrb[0].mxu0
    %v1075 = vpop.f32.mrb[0].mxu0
    %1076 = vdwg.mxu0
    %v1077 = vmax.f32 %v1072, 0.0
    %v1078 = vld [vmem:[#allocation2] sm:$0xff]
    %v1079 = vmul.f32 %v1077, %v1078
    %1080 = vst.msk [vmem:[#allocation10] sm:$0xff] %vm932, %v1079
    %v1081 = vpack.c.bf16 %v1079, %v1079
    %1082 = vrot.lane.b32.xlu0 %v1018, 34
    %v1083 = vpop.permute.xlu0 %1082
    %v1086 = vsel %vm932, %v1081, %v1083
    %v1087 = vsel %vm951, %v1086, 0
    %1089 = vmatprep.subr.bf16.mxu0 0
    %1090 = vmatpush1.bf16.msra.mxu0 %v946
    %1091 = vmatprep.subr.bf16.mxu0 0
    %1092 = vmatpush1.bf16.msra.mxu0 %v947
    %1093 = vmatprep.subr.bf16.mxu0 0
    %1094 = vmatpush1.bf16.msra.mxu0 %v956
    %1095 = vmatprep.subr.bf16.mxu0 0
    %1096 = vmatpush1.bf16.msra.mxu0 0
    %1097 = vmatprep.subr.bf16.mxu0 0
    %1098 = vmatpush1.bf16.msra.mxu0 0
    %1099 = vmatprep.subr.bf16.mxu0 0
    %1100 = vmatpush1.bf16.msra.mxu0 0
    %1101 = vmatprep.subr.bf16.mxu0 0
    %1102 = vmatpush1.bf16.msra.mxu0 0
    %1103 = vmatprep.subr.bf16.mxu0 0
    %1104 = vmatpush1.bf16.msra.mxu0 0
    %1105 = vmatprep.subr.bf16.mxu0 0
    %1106 = vmatpush1.bf16.msra.mxu0 0
    %1107 = vmatprep.subr.bf16.mxu0 0
    %1108 = vmatpush1.bf16.msra.mxu0 0
    %1109 = vmatprep.subr.bf16.mxu0 0
    %1110 = vmatpush1.bf16.msra.mxu0 0
    %1111 = vmatprep.subr.bf16.mxu0 0
    %1112 = vmatpush1.bf16.msra.mxu0 0
    %1113 = vmatprep.subr.bf16.mxu0 0
    %1114 = vmatpush1.bf16.msra.mxu0 0
    %1115 = vmatprep.subr.bf16.mxu0 0
    %1116 = vmatpush1.bf16.msra.mxu0 0
    %1117 = vmatprep.subr.bf16.mxu0 0
    %1118 = vmatpush1.bf16.msra.mxu0 0
    %1119 = vmatprep.subr.bf16.mxu0 0
    %1120 = vmatpush1.bf16.msra.mxu0 0
    %1121 = vmatprep.mubr.bf16.mxu0 0
    %1122 = vmatmul.mubr.bf16.gmra.mrb[0].mxu0 %v1087
    %v1123 = vpop.f32.mrb[0].mxu0
    %v1124 = vadd.f32 %v105, %v1123
    %v1125 = vpop.f32.mrb[0].mxu0
    %v1126 = vpop.f32.mrb[0].mxu0
    %v1127 = vpop.f32.mrb[0].mxu0
    %1128 = vdwg.mxu0
    %v1129 = vtanh.pop %v1124
    %v1130 = vmul.f32 %v1129, 0.5
    %v1131 = vadd.f32 %v1130, 0.5
    %v1132 = vmul.f32 %v1131, %v1011
    %1134 = vrot.lane.b32.xlu0 %v1129, 64
    %v1135 = vpop.permute.xlu0 %1134
    %v1137 = vmul.f32 %v1131, %v1135
    %1139 = vrot.lane.b32.xlu0 %v1137, 32
    %v1140 = vpop.permute.xlu0 %1139
    %v1142 = vadd.f32 %v1132, %v1140
    %v1143 = vtanh.pop %v1142
    %1145 = vrot.lane.b32.xlu0 %v1143, 64
    %v1146 = vpop.permute.xlu0 %1145
    %v1148 = vmul.f32 %v1131, %v1146
    %v1149 = vpack.c.bf16 %v1148, %v1148
    %1151 = vrot.lane.b32.xlu0 %v1149, 32
    %v1152 = vpop.permute.xlu0 %1151
    %v1154 = vsel %vm384, %v1152, 0
    %1156 = vmatprep.subr.bf16.mxu0 0
    %1157 = vmatpush1.bf16.msra.mxu0 %v1030
    %1158 = vmatprep.subr.bf16.mxu0 0
    %1159 = vmatpush1.bf16.msra.mxu0 %v1031
    %1160 = vmatprep.subr.bf16.mxu0 0
    %1161 = vmatpush1.bf16.msra.mxu0 0
    %1162 = vmatprep.subr.bf16.mxu0 0
    %1163 = vmatpush1.bf16.msra.mxu0 0
    %1164 = vmatprep.subr.bf16.mxu0 0
    %1165 = vmatpush1.bf16.msra.mxu0 0
    %1166 = vmatprep.subr.bf16.mxu0 0
    %1167 = vmatpush1.bf16.msra.mxu0 0
    %1168 = vmatprep.subr.bf16.mxu0 0
    %1169 = vmatpush1.bf16.msra.mxu0 0
    %1170 = vmatprep.subr.bf16.mxu0 0
    %1171 = vmatpush1.bf16.msra.mxu0 0
    %1172 = vmatprep.subr.bf16.mxu0 0
    %1173 = vmatpush1.bf16.msra.mxu0 0
    %1174 = vmatprep.subr.bf16.mxu0 0
    %1175 = vmatpush1.bf16.msra.mxu0 0
    %1176 = vmatprep.subr.bf16.mxu0 0
    %1177 = vmatpush1.bf16.msra.mxu0 0
    %1178 = vmatprep.subr.bf16.mxu0 0
    %1179 = vmatpush1.bf16.msra.mxu0 0
    %1180 = vmatprep.subr.bf16.mxu0 0
    %1181 = vmatpush1.bf16.msra.mxu0 0
    %1182 = vmatprep.subr.bf16.mxu0 0
    %1183 = vmatpush1.bf16.msra.mxu0 0
    %1184 = vmatprep.subr.bf16.mxu0 0
    %1185 = vmatpush1.bf16.msra.mxu0 0
    %1186 = vmatprep.subr.bf16.mxu0 0
    %1187 = vmatpush1.bf16.msra.mxu0 0
    %1188 = vmatprep.mubr.bf16.mxu0 0
    %1189 = vmatmul.mubr.bf16.gmra.mrb[0].mxu0 %v1154
    %v1190 = vpop.f32.mrb[0].mxu0
    %v1191 = vadd.f32 %v112, %v1190
    %v1192 = vpop.f32.mrb[0].mxu0
    %v1193 = vpop.f32.mrb[0].mxu0
    %v1194 = vpop.f32.mrb[0].mxu0
    %1195 = vdwg.mxu0
    %v1196 = vmax.f32 %v1191, 0.0
    %v1197 = vld [vmem:[#allocation2] sm:$0xff]
    %1199 = vrot.lane.b32.xlu0 %v1197, 126
    %v1200 = vpop.permute.xlu0 %1199
    %v1202 = vmul.f32 %v1196, %v1200
    %1204 = vrot.lane.b32.xlu0 %v1202, 2
    %v1205 = vpop.permute.xlu0 %1204
    %vm1207 = vcmask 31760
    %1208 = vst.msk [vmem:[#allocation10] sm:$0xff] %vm1207, %v1205
    %v1209 = vpack.c.bf16 %v1202, %v1202
    %1210 = vrot.lane.b32.xlu0 %v1149, 34
    %v1211 = vpop.permute.xlu0 %1210
    %v1214 = vsel %vm932, %v1209, %v1211
    %v1215 = vsel %vm951, %v1214, 0
    %1217 = vmatprep.subr.bf16.mxu0 0
    %1218 = vmatpush1.bf16.msra.mxu0 %v946
    %1219 = vmatprep.subr.bf16.mxu0 0
    %1220 = vmatpush1.bf16.msra.mxu0 %v947
    %1221 = vmatprep.subr.bf16.mxu0 0
    %1222 = vmatpush1.bf16.msra.mxu0 %v956
    %1223 = vmatprep.subr.bf16.mxu0 0
    %1224 = vmatpush1.bf16.msra.mxu0 0
    %1225 = vmatprep.subr.bf16.mxu0 0
    %1226 = vmatpush1.bf16.msra.mxu0 0
    %1227 = vmatprep.subr.bf16.mxu0 0
    %1228 = vmatpush1.bf16.msra.mxu0 0
    %1229 = vmatprep.subr.bf16.mxu0 0
    %1230 = vmatpush1.bf16.msra.mxu0 0
    %1231 = vmatprep.subr.bf16.mxu0 0
    %1232 = vmatpush1.bf16.msra.mxu0 0
    %1233 = vmatprep.subr.bf16.mxu0 0
    %1234 = vmatpush1.bf16.msra.mxu0 0
    %1235 = vmatprep.subr.bf16.mxu0 0
    %1236 = vmatpush1.bf16.msra.mxu0 0
    %1237 = vmatprep.subr.bf16.mxu0 0
    %1238 = vmatpush1.bf16.msra.mxu0 0
    %1239 = vmatprep.subr.bf16.mxu0 0
    %1240 = vmatpush1.bf16.msra.mxu0 0
    %1241 = vmatprep.subr.bf16.mxu0 0
    %1242 = vmatpush1.bf16.msra.mxu0 0
    %1243 = vmatprep.subr.bf16.mxu0 0
    %1244 = vmatpush1.bf16.msra.mxu0 0
    %1245 = vmatprep.subr.bf16.mxu0 0
    %1246 = vmatpush1.bf16.msra.mxu0 0
    %1247 = vmatprep.subr.bf16.mxu0 0
    %1248 = vmatpush1.bf16.msra.mxu0 0
    %1249 = vmatprep.mubr.bf16.mxu0 0
    %1250 = vmatmul.mubr.bf16.gmra.mrb[0].mxu0 %v1215
    %v1251 = vpop.f32.mrb[0].mxu0
    %v1252 = vadd.f32 %v105, %v1251
    %v1253 = vpop.f32.mrb[0].mxu0
    %v1254 = vpop.f32.mrb[0].mxu0
    %v1255 = vpop.f32.mrb[0].mxu0
    %1256 = vdwg.mxu0
    %v1257 = vtanh.pop %v1252
    %v1258 = vmul.f32 %v1257, 0.5
    %v1259 = vadd.f32 %v1258, 0.5
    %v1260 = vmul.f32 %v1259, %v1142
    %1262 = vrot.lane.b32.xlu0 %v1257, 64
    %v1263 = vpop.permute.xlu0 %1262
    %v1265 = vmul.f32 %v1259, %v1263
    %1267 = vrot.lane.b32.xlu0 %v1265, 32
    %v1268 = vpop.permute.xlu0 %1267
    %v1270 = vadd.f32 %v1260, %v1268
    %v1271 = vtanh.pop %v1270
    %1273 = vrot.lane.b32.xlu0 %v1271, 64
    %v1274 = vpop.permute.xlu0 %1273
    %v1276 = vmul.f32 %v1259, %v1274
    %v1277 = vpack.c.bf16 %v1276, %v1276
    %1279 = vrot.lane.b32.xlu0 %v1277, 32
    %v1280 = vpop.permute.xlu0 %1279
    %v1282 = vsel %vm384, %v1280, 0
    %1284 = vmatprep.subr.bf16.mxu0 0
    %1285 = vmatpush1.bf16.msra.mxu0 %v1030
    %1286 = vmatprep.subr.bf16.mxu0 0
    %1287 = vmatpush1.bf16.msra.mxu0 %v1031
    %1288 = vmatprep.subr.bf16.mxu0 0
    %1289 = vmatpush1.bf16.msra.mxu0 0
    %1290 = vmatprep.subr.bf16.mxu0 0
    %1291 = vmatpush1.bf16.msra.mxu0 0
    %1292 = vmatprep.subr.bf16.mxu0 0
    %1293 = vmatpush1.bf16.msra.mxu0 0
    %1294 = vmatprep.subr.bf16.mxu0 0
    %1295 = vmatpush1.bf16.msra.mxu0 0
    %1296 = vmatprep.subr.bf16.mxu0 0
    %1297 = vmatpush1.bf16.msra.mxu0 0
    %1298 = vmatprep.subr.bf16.mxu0 0
    %1299 = vmatpush1.bf16.msra.mxu0 0
    %1300 = vmatprep.subr.bf16.mxu0 0
    %1301 = vmatpush1.bf16.msra.mxu0 0
    %1302 = vmatprep.subr.bf16.mxu0 0
    %1303 = vmatpush1.bf16.msra.mxu0 0
    %1304 = vmatprep.subr.bf16.mxu0 0
    %1305 = vmatpush1.bf16.msra.mxu0 0
    %1306 = vmatprep.subr.bf16.mxu0 0
    %1307 = vmatpush1.bf16.msra.mxu0 0
    %1308 = vmatprep.subr.bf16.mxu0 0
    %1309 = vmatpush1.bf16.msra.mxu0 0
    %1310 = vmatprep.subr.bf16.mxu0 0
    %1311 = vmatpush1.bf16.msra.mxu0 0
    %1312 = vmatprep.subr.bf16.mxu0 0
    %1313 = vmatpush1.bf16.msra.mxu0 0
    %1314 = vmatprep.subr.bf16.mxu0 0
    %1315 = vmatpush1.bf16.msra.mxu0 0
    %1316 = vmatprep.mubr.bf16.mxu0 0
    %1317 = vmatmul.mubr.bf16.gmra.mrb[0].mxu0 %v1282
    %v1318 = vpop.f32.mrb[0].mxu0
    %v1319 = vadd.f32 %v112, %v1318
    %v1320 = vpop.f32.mrb[0].mxu0
    %v1321 = vpop.f32.mrb[0].mxu0
    %v1322 = vpop.f32.mrb[0].mxu0
    %1323 = vdwg.mxu0
    %v1324 = vmax.f32 %v1319, 0.0
    %v1325 = vld [vmem:[#allocation2] sm:$0xff]
    %1327 = vrot.lane.b32.xlu0 %v1325, 124
    %v1328 = vpop.permute.xlu0 %1327
    %v1330 = vmul.f32 %v1324, %v1328
    %1332 = vrot.lane.b32.xlu0 %v1330, 4
    %v1333 = vpop.permute.xlu0 %1332
    %vm1335 = vcmask 48160
    %1336 = vst.msk [vmem:[#allocation10] sm:$0xff] %vm1335, %v1333
    %v1337 = vpack.c.bf16 %v1330, %v1330
    %1338 = vrot.lane.b32.xlu0 %v1277, 34
    %v1339 = vpop.permute.xlu0 %1338
    %v1342 = vsel %vm932, %v1337, %v1339
    %v1343 = vsel %vm951, %v1342, 0
    %1345 = vmatprep.subr.bf16.mxu0 0
    %1346 = vmatpush1.bf16.msra.mxu0 %v946
    %1347 = vmatprep.subr.bf16.mxu0 0
    %1348 = vmatpush1.bf16.msra.mxu0 %v947
    %1349 = vmatprep.subr.bf16.mxu0 0
    %1350 = vmatpush1.bf16.msra.mxu0 %v956
    %1351 = vmatprep.subr.bf16.mxu0 0
    %1352 = vmatpush1.bf16.msra.mxu0 0
    %1353 = vmatprep.subr.bf16.mxu0 0
    %1354 = vmatpush1.bf16.msra.mxu0 0
    %1355 = vmatprep.subr.bf16.mxu0 0
    %1356 = vmatpush1.bf16.msra.mxu0 0
    %1357 = vmatprep.subr.bf16.mxu0 0
    %1358 = vmatpush1.bf16.msra.mxu0 0
    %1359 = vmatprep.subr.bf16.mxu0 0
    %1360 = vmatpush1.bf16.msra.mxu0 0
    %1361 = vmatprep.subr.bf16.mxu0 0
    %1362 = vmatpush1.bf16.msra.mxu0 0
    %1363 = vmatprep.subr.bf16.mxu0 0
    %1364 = vmatpush1.bf16.msra.mxu0 0
    %1365 = vmatprep.subr.bf16.mxu0 0
    %1366 = vmatpush1.bf16.msra.mxu0 0
    %1367 = vmatprep.subr.bf16.mxu0 0
    %1368 = vmatpush1.bf16.msra.mxu0 0
    %1369 = vmatprep.subr.bf16.mxu0 0
    %1370 = vmatpush1.bf16.msra.mxu0 0
    %1371 = vmatprep.subr.bf16.mxu0 0
    %1372 = vmatpush1.bf16.msra.mxu0 0
    %1373 = vmatprep.subr.bf16.mxu0 0
    %1374 = vmatpush1.bf16.msra.mxu0 0
    %1375 = vmatprep.subr.bf16.mxu0 0
    %1376 = vmatpush1.bf16.msra.mxu0 0
    %1377 = vmatprep.mubr.bf16.mxu0 0
    %1378 = vmatmul.mubr.bf16.gmra.mrb[0].mxu0 %v1343
    %v1379 = vpop.f32.mrb[0].mxu0
    %v1380 = vadd.f32 %v105, %v1379
    %v1381 = vpop.f32.mrb[0].mxu0
    %v1382 = vpop.f32.mrb[0].mxu0
    %v1383 = vpop.f32.mrb[0].mxu0
    %1384 = vdwg.mxu0
    %v1385 = vtanh.pop %v1380
    %v1386 = vmul.f32 %v1385, 0.5
    %v1387 = vadd.f32 %v1386, 0.5
    %v1388 = vmul.f32 %v1387, %v1270
    %1390 = vrot.lane.b32.xlu0 %v1385, 64
    %v1391 = vpop.permute.xlu0 %1390
    %v1393 = vmul.f32 %v1387, %v1391
    %1395 = vrot.lane.b32.xlu0 %v1393, 32
    %v1396 = vpop.permute.xlu0 %1395
    %v1398 = vadd.f32 %v1388, %v1396
    %v1399 = vtanh.pop %v1398
    %1401 = vrot.lane.b32.xlu0 %v1399, 64
    %v1402 = vpop.permute.xlu0 %1401
    %v1404 = vmul.f32 %v1387, %v1402
    %v1405 = vpack.c.bf16 %v1404, %v1404
    %1407 = vrot.lane.b32.xlu0 %v1405, 32
    %v1408 = vpop.permute.xlu0 %1407
    %v1410 = vsel %vm384, %v1408, 0
    %1412 = vmatprep.subr.bf16.mxu0 0
    %1413 = vmatpush1.bf16.msra.mxu0 %v1030
    %1414 = vmatprep.subr.bf16.mxu0 0
    %1415 = vmatpush1.bf16.msra.mxu0 %v1031
    %1416 = vmatprep.subr.bf16.mxu0 0
    %1417 = vmatpush1.bf16.msra.mxu0 0
    %1418 = vmatprep.subr.bf16.mxu0 0
    %1419 = vmatpush1.bf16.msra.mxu0 0
    %1420 = vmatprep.subr.bf16.mxu0 0
    %1421 = vmatpush1.bf16.msra.mxu0 0
    %1422 = vmatprep.subr.bf16.mxu0 0
    %1423 = vmatpush1.bf16.msra.mxu0 0
    %1424 = vmatprep.subr.bf16.mxu0 0
    %1425 = vmatpush1.bf16.msra.mxu0 0
    %1426 = vmatprep.subr.bf16.mxu0 0
    %1427 = vmatpush1.bf16.msra.mxu0 0
    %1428 = vmatprep.subr.bf16.mxu0 0
    %1429 = vmatpush1.bf16.msra.mxu0 0
    %1430 = vmatprep.subr.bf16.mxu0 0
    %1431 = vmatpush1.bf16.msra.mxu0 0
    %1432 = vmatprep.subr.bf16.mxu0 0
    %1433 = vmatpush1.bf16.msra.mxu0 0
    %1434 = vmatprep.subr.bf16.mxu0 0
    %1435 = vmatpush1.bf16.msra.mxu0 0
    %1436 = vmatprep.subr.bf16.mxu0 0
    %1437 = vmatpush1.bf16.msra.mxu0 0
    %1438 = vmatprep.subr.bf16.mxu0 0
    %1439 = vmatpush1.bf16.msra.mxu0 0
    %1440 = vmatprep.subr.bf16.mxu0 0
    %1441 = vmatpush1.bf16.msra.mxu0 0
    %1442 = vmatprep.subr.bf16.mxu0 0
    %1443 = vmatpush1.bf16.msra.mxu0 0
    %1444 = vmatprep.mubr.bf16.mxu0 0
    %1445 = vmatmul.mubr.bf16.gmra.mrb[0].mxu0 %v1410
    %v1446 = vpop.f32.mrb[0].mxu0
    %v1447 = vadd.f32 %v112, %v1446
    %v1448 = vpop.f32.mrb[0].mxu0
    %v1449 = vpop.f32.mrb[0].mxu0
    %v1450 = vpop.f32.mrb[0].mxu0
    %1451 = vdwg.mxu0
    %v1452 = vmax.f32 %v1447, 0.0
    %v1453 = vld [vmem:[#allocation2] sm:$0xff]
    %1455 = vrot.lane.b32.xlu0 %v1453, 122
    %v1456 = vpop.permute.xlu0 %1455
    %v1458 = vmul.f32 %v1452, %v1456
    %1460 = vrot.lane.b32.xlu0 %v1458, 6
    %v1461 = vpop.permute.xlu0 %1460
    %vm1463 = vcmask 64560
    %1464 = vst.msk [vmem:[#allocation10] sm:$0xff] %vm1463, %v1461
    %v1465 = vpack.c.bf16 %v1458, %v1458
    %1466 = vrot.lane.b32.xlu0 %v1405, 34
    %v1467 = vpop.permute.xlu0 %1466
    %v1470 = vsel %vm932, %v1465, %v1467
    %v1471 = vsel %vm951, %v1470, 0
    %1473 = vmatprep.subr.bf16.mxu0 0
    %1474 = vmatpush1.bf16.msra.mxu0 %v946
    %1475 = vmatprep.subr.bf16.mxu0 0
    %1476 = vmatpush1.bf16.msra.mxu0 %v947
    %1477 = vmatprep.subr.bf16.mxu0 0
    %1478 = vmatpush1.bf16.msra.mxu0 %v956
    %1479 = vmatprep.subr.bf16.mxu0 0
    %1480 = vmatpush1.bf16.msra.mxu0 0
    %1481 = vmatprep.subr.bf16.mxu0 0
    %1482 = vmatpush1.bf16.msra.mxu0 0
    %1483 = vmatprep.subr.bf16.mxu0 0
    %1484 = vmatpush1.bf16.msra.mxu0 0
    %1485 = vmatprep.subr.bf16.mxu0 0
    %1486 = vmatpush1.bf16.msra.mxu0 0
    %1487 = vmatprep.subr.bf16.mxu0 0
    %1488 = vmatpush1.bf16.msra.mxu0 0
    %1489 = vmatprep.subr.bf16.mxu0 0
    %1490 = vmatpush1.bf16.msra.mxu0 0
    %1491 = vmatprep.subr.bf16.mxu0 0
    %1492 = vmatpush1.bf16.msra.mxu0 0
    %1493 = vmatprep.subr.bf16.mxu0 0
    %1494 = vmatpush1.bf16.msra.mxu0 0
    %1495 = vmatprep.subr.bf16.mxu0 0
    %1496 = vmatpush1.bf16.msra.mxu0 0
    %1497 = vmatprep.subr.bf16.mxu0 0
    %1498 = vmatpush1.bf16.msra.mxu0 0
    %1499 = vmatprep.subr.bf16.mxu0 0
    %1500 = vmatpush1.bf16.msra.mxu0 0
    %1501 = vmatprep.subr.bf16.mxu0 0
    %1502 = vmatpush1.bf16.msra.mxu0 0
    %1503 = vmatprep.subr.bf16.mxu0 0
    %1504 = vmatpush1.bf16.msra.mxu0 0
    %1505 = vmatprep.mubr.bf16.mxu0 0
    %1506 = vmatmul.mubr.bf16.gmra.mrb[0].mxu0 %v1471
    %v1507 = vpop.f32.mrb[0].mxu0
    %v1508 = vadd.f32 %v105, %v1507
    %v1509 = vpop.f32.mrb[0].mxu0
    %v1510 = vpop.f32.mrb[0].mxu0
    %v1511 = vpop.f32.mrb[0].mxu0
    %1512 = vdwg.mxu0
    %v1513 = vtanh.pop %v1508
    %v1514 = vmul.f32 %v1513, 0.5
    %v1515 = vadd.f32 %v1514, 0.5
    %v1516 = vmul.f32 %v1515, %v1398
    %1518 = vrot.lane.b32.xlu0 %v1513, 64
    %v1519 = vpop.permute.xlu0 %1518
    %v1521 = vmul.f32 %v1515, %v1519
    %1523 = vrot.lane.b32.xlu0 %v1521, 32
    %v1524 = vpop.permute.xlu0 %1523
    %v1526 = vadd.f32 %v1516, %v1524
    %v1527 = vtanh.pop %v1526
    %1529 = vrot.lane.b32.xlu0 %v1527, 64
    %v1530 = vpop.permute.xlu0 %1529
    %v1532 = vmul.f32 %v1515, %v1530
    %v1533 = vpack.c.bf16 %v1532, %v1532
    %1535 = vrot.lane.b32.xlu0 %v1533, 32
    %v1536 = vpop.permute.xlu0 %1535
    %v1538 = vsel %vm384, %v1536, 0
    %1540 = vmatprep.subr.bf16.mxu0 0
    %1541 = vmatpush1.bf16.msra.mxu0 %v1030
    %1542 = vmatprep.subr.bf16.mxu0 0
    %1543 = vmatpush1.bf16.msra.mxu0 %v1031
    %1544 = vmatprep.subr.bf16.mxu0 0
    %1545 = vmatpush1.bf16.msra.mxu0 0
    %1546 = vmatprep.subr.bf16.mxu0 0
    %1547 = vmatpush1.bf16.msra.mxu0 0
    %1548 = vmatprep.subr.bf16.mxu0 0
    %1549 = vmatpush1.bf16.msra.mxu0 0
    %1550 = vmatprep.subr.bf16.mxu0 0
    %1551 = vmatpush1.bf16.msra.mxu0 0
    %1552 = vmatprep.subr.bf16.mxu0 0
    %1553 = vmatpush1.bf16.msra.mxu0 0
    %1554 = vmatprep.subr.bf16.mxu0 0
    %1555 = vmatpush1.bf16.msra.mxu0 0
    %1556 = vmatprep.subr.bf16.mxu0 0
    %1557 = vmatpush1.bf16.msra.mxu0 0
    %1558 = vmatprep.subr.bf16.mxu0 0
    %1559 = vmatpush1.bf16.msra.mxu0 0
    %1560 = vmatprep.subr.bf16.mxu0 0
    %1561 = vmatpush1.bf16.msra.mxu0 0
    %1562 = vmatprep.subr.bf16.mxu0 0
    %1563 = vmatpush1.bf16.msra.mxu0 0
    %1564 = vmatprep.subr.bf16.mxu0 0
    %1565 = vmatpush1.bf16.msra.mxu0 0
    %1566 = vmatprep.subr.bf16.mxu0 0
    %1567 = vmatpush1.bf16.msra.mxu0 0
    %1568 = vmatprep.subr.bf16.mxu0 0
    %1569 = vmatpush1.bf16.msra.mxu0 0
    %1570 = vmatprep.subr.bf16.mxu0 0
    %1571 = vmatpush1.bf16.msra.mxu0 0
    %1572 = vmatprep.mubr.bf16.mxu0 0
    %1573 = vmatmul.mubr.bf16.gmra.mrb[0].mxu0 %v1538
    %v1574 = vpop.f32.mrb[0].mxu0
    %v1575 = vadd.f32 %v112, %v1574
    %v1576 = vpop.f32.mrb[0].mxu0
    %v1577 = vpop.f32.mrb[0].mxu0
    %v1578 = vpop.f32.mrb[0].mxu0
    %1579 = vdwg.mxu0
    %v1580 = vmax.f32 %v1575, 0.0
    %v1581 = vld [vmem:[#allocation2] sm:$0xff]
    %1583 = vrot.lane.b32.xlu0 %v1581, 120
    %v1584 = vpop.permute.xlu0 %1583
    %v1586 = vmul.f32 %v1580, %v1584
    %1588 = vrot.lane.b32.xlu0 %v1586, 8
    %v1589 = vpop.permute.xlu0 %1588
    %vm1591 = vcmask 80960
    %1592 = vst.msk [vmem:[#allocation10] sm:$0xff] %vm1591, %v1589
    %v1593 = vpack.c.bf16 %v1586, %v1586
    %1594 = vrot.lane.b32.xlu0 %v1533, 34
    %v1595 = vpop.permute.xlu0 %1594
    %v1598 = vsel %vm932, %v1593, %v1595
    %v1599 = vsel %vm951, %v1598, 0
    %1601 = vmatprep.subr.bf16.mxu0 0
    %1602 = vmatpush1.bf16.msra.mxu0 %v946
    %1603 = vmatprep.subr.bf16.mxu0 0
    %1604 = vmatpush1.bf16.msra.mxu0 %v947
    %1605 = vmatprep.subr.bf16.mxu0 0
    %1606 = vmatpush1.bf16.msra.mxu0 %v956
    %1607 = vmatprep.subr.bf16.mxu0 0
    %1608 = vmatpush1.bf16.msra.mxu0 0
    %1609 = vmatprep.subr.bf16.mxu0 0
    %1610 = vmatpush1.bf16.msra.mxu0 0
    %1611 = vmatprep.subr.bf16.mxu0 0
    %1612 = vmatpush1.bf16.msra.mxu0 0
    %1613 = vmatprep.subr.bf16.mxu0 0
    %1614 = vmatpush1.bf16.msra.mxu0 0
    %1615 = vmatprep.subr.bf16.mxu0 0
    %1616 = vmatpush1.bf16.msra.mxu0 0
    %1617 = vmatprep.subr.bf16.mxu0 0
    %1618 = vmatpush1.bf16.msra.mxu0 0
    %1619 = vmatprep.subr.bf16.mxu0 0
    %1620 = vmatpush1.bf16.msra.mxu0 0
    %1621 = vmatprep.subr.bf16.mxu0 0
    %1622 = vmatpush1.bf16.msra.mxu0 0
    %1623 = vmatprep.subr.bf16.mxu0 0
    %1624 = vmatpush1.bf16.msra.mxu0 0
    %1625 = vmatprep.subr.bf16.mxu0 0
    %1626 = vmatpush1.bf16.msra.mxu0 0
    %1627 = vmatprep.subr.bf16.mxu0 0
    %1628 = vmatpush1.bf16.msra.mxu0 0
    %1629 = vmatprep.subr.bf16.mxu0 0
    %1630 = vmatpush1.bf16.msra.mxu0 0
    %1631 = vmatprep.subr.bf16.mxu0 0
    %1632 = vmatpush1.bf16.msra.mxu0 0
    %1633 = vmatprep.mubr.bf16.mxu0 0
    %1634 = vmatmul.mubr.bf16.gmra.mrb[0].mxu0 %v1599
    %v1635 = vpop.f32.mrb[0].mxu0
    %v1636 = vadd.f32 %v105, %v1635
    %v1637 = vpop.f32.mrb[0].mxu0
    %v1638 = vpop.f32.mrb[0].mxu0
    %v1639 = vpop.f32.mrb[0].mxu0
    %1640 = vdwg.mxu0
    %v1641 = vtanh.pop %v1636
    %v1642 = vmul.f32 %v1641, 0.5
    %v1643 = vadd.f32 %v1642, 0.5
    %v1644 = vmul.f32 %v1643, %v1526
    %1646 = vrot.lane.b32.xlu0 %v1641, 64
    %v1647 = vpop.permute.xlu0 %1646
    %v1649 = vmul.f32 %v1643, %v1647
    %1651 = vrot.lane.b32.xlu0 %v1649, 32
    %v1652 = vpop.permute.xlu0 %1651
    %v1654 = vadd.f32 %v1644, %v1652
    %v1655 = vtanh.pop %v1654
    %1657 = vrot.lane.b32.xlu0 %v1655, 64
    %v1658 = vpop.permute.xlu0 %1657
    %v1660 = vmul.f32 %v1643, %v1658
    %v1661 = vpack.c.bf16 %v1660, %v1660
    %1663 = vrot.lane.b32.xlu0 %v1661, 32
    %v1664 = vpop.permute.xlu0 %1663
    %v1666 = vsel %vm384, %v1664, 0
    %1668 = vmatprep.subr.bf16.mxu0 0
    %1669 = vmatpush1.bf16.msra.mxu0 %v1030
    %1670 = vmatprep.subr.bf16.mxu0 0
    %1671 = vmatpush1.bf16.msra.mxu0 %v1031
    %1672 = vmatprep.subr.bf16.mxu0 0
    %1673 = vmatpush1.bf16.msra.mxu0 0
    %1674 = vmatprep.subr.bf16.mxu0 0
    %1675 = vmatpush1.bf16.msra.mxu0 0
    %1676 = vmatprep.subr.bf16.mxu0 0
    %1677 = vmatpush1.bf16.msra.mxu0 0
    %1678 = vmatprep.subr.bf16.mxu0 0
    %1679 = vmatpush1.bf16.msra.mxu0 0
    %1680 = vmatprep.subr.bf16.mxu0 0
    %1681 = vmatpush1.bf16.msra.mxu0 0
    %1682 = vmatprep.subr.bf16.mxu0 0
    %1683 = vmatpush1.bf16.msra.mxu0 0
    %1684 = vmatprep.subr.bf16.mxu0 0
    %1685 = vmatpush1.bf16.msra.mxu0 0
    %1686 = vmatprep.subr.bf16.mxu0 0
    %1687 = vmatpush1.bf16.msra.mxu0 0
    %1688 = vmatprep.subr.bf16.mxu0 0
    %1689 = vmatpush1.bf16.msra.mxu0 0
    %1690 = vmatprep.subr.bf16.mxu0 0
    %1691 = vmatpush1.bf16.msra.mxu0 0
    %1692 = vmatprep.subr.bf16.mxu0 0
    %1693 = vmatpush1.bf16.msra.mxu0 0
    %1694 = vmatprep.subr.bf16.mxu0 0
    %1695 = vmatpush1.bf16.msra.mxu0 0
    %1696 = vmatprep.subr.bf16.mxu0 0
    %1697 = vmatpush1.bf16.msra.mxu0 0
    %1698 = vmatprep.subr.bf16.mxu0 0
    %1699 = vmatpush1.bf16.msra.mxu0 0
    %1700 = vmatprep.mubr.bf16.mxu0 0
    %1701 = vmatmul.mubr.bf16.gmra.mrb[0].mxu0 %v1666
    %v1702 = vpop.f32.mrb[0].mxu0
    %v1703 = vadd.f32 %v112, %v1702
    %v1704 = vpop.f32.mrb[0].mxu0
    %v1705 = vpop.f32.mrb[0].mxu0
    %v1706 = vpop.f32.mrb[0].mxu0
    %1707 = vdwg.mxu0
    %v1708 = vmax.f32 %v1703, 0.0
    %v1709 = vld [vmem:[#allocation2] sm:$0xff]
    %1711 = vrot.lane.b32.xlu0 %v1709, 118
    %v1712 = vpop.permute.xlu0 %1711
    %v1714 = vmul.f32 %v1708, %v1712
    %1716 = vrot.lane.b32.xlu0 %v1714, 10
    %v1717 = vpop.permute.xlu0 %1716
    %vm1719 = vcmask 97360
    %1720 = vst.msk [vmem:[#allocation10] sm:$0xff] %vm1719, %v1717
    %v1721 = vpack.c.bf16 %v1714, %v1714
    %1722 = vrot.lane.b32.xlu0 %v1661, 34
    %v1723 = vpop.permute.xlu0 %1722
    %v1726 = vsel %vm932, %v1721, %v1723
    %v1727 = vsel %vm951, %v1726, 0
    %1729 = vmatprep.subr.bf16.mxu0 0
    %1730 = vmatpush1.bf16.msra.mxu0 %v946
    %1731 = vmatprep.subr.bf16.mxu0 0
    %1732 = vmatpush1.bf16.msra.mxu0 %v947
    %1733 = vmatprep.subr.bf16.mxu0 0
    %1734 = vmatpush1.bf16.msra.mxu0 %v956
    %1735 = vmatprep.subr.bf16.mxu0 0
    %1736 = vmatpush1.bf16.msra.mxu0 0
    %1737 = vmatprep.subr.bf16.mxu0 0
    %1738 = vmatpush1.bf16.msra.mxu0 0
    %1739 = vmatprep.subr.bf16.mxu0 0
    %1740 = vmatpush1.bf16.msra.mxu0 0
    %1741 = vmatprep.subr.bf16.mxu0 0
    %1742 = vmatpush1.bf16.msra.mxu0 0
    %1743 = vmatprep.subr.bf16.mxu0 0
    %1744 = vmatpush1.bf16.msra.mxu0 0
    %1745 = vmatprep.subr.bf16.mxu0 0
    %1746 = vmatpush1.bf16.msra.mxu0 0
    %1747 = vmatprep.subr.bf16.mxu0 0
    %1748 = vmatpush1.bf16.msra.mxu0 0
    %1749 = vmatprep.subr.bf16.mxu0 0
    %1750 = vmatpush1.bf16.msra.mxu0 0
    %1751 = vmatprep.subr.bf16.mxu0 0
    %1752 = vmatpush1.bf16.msra.mxu0 0
    %1753 = vmatprep.subr.bf16.mxu0 0
    %1754 = vmatpush1.bf16.msra.mxu0 0
    %1755 = vmatprep.subr.bf16.mxu0 0
    %1756 = vmatpush1.bf16.msra.mxu0 0
    %1757 = vmatprep.subr.bf16.mxu0 0
    %1758 = vmatpush1.bf16.msra.mxu0 0
    %1759 = vmatprep.subr.bf16.mxu0 0
    %1760 = vmatpush1.bf16.msra.mxu0 0
    %1761 = vmatprep.mubr.bf16.mxu0 0
    %1762 = vmatmul.mubr.bf16.gmra.mrb[0].mxu0 %v1727
    %v1763 = vpop.f32.mrb[0].mxu0
    %v1764 = vadd.f32 %v105, %v1763
    %v1765 = vpop.f32.mrb[0].mxu0
    %v1766 = vpop.f32.mrb[0].mxu0
    %v1767 = vpop.f32.mrb[0].mxu0
    %1768 = vdwg.mxu0
    %v1769 = vtanh.pop %v1764
    %v1770 = vmul.f32 %v1769, 0.5
    %v1771 = vadd.f32 %v1770, 0.5
    %v1772 = vmul.f32 %v1771, %v1654
    %1774 = vrot.lane.b32.xlu0 %v1769, 64
    %v1775 = vpop.permute.xlu0 %1774
    %v1777 = vmul.f32 %v1771, %v1775
    %1779 = vrot.lane.b32.xlu0 %v1777, 32
    %v1780 = vpop.permute.xlu0 %1779
    %v1782 = vadd.f32 %v1772, %v1780
    %v1783 = vtanh.pop %v1782
    %1785 = vrot.lane.b32.xlu0 %v1783, 64
    %v1786 = vpop.permute.xlu0 %1785
    %v1788 = vmul.f32 %v1771, %v1786
    %v1789 = vpack.c.bf16 %v1788, %v1788
    %1791 = vrot.lane.b32.xlu0 %v1789, 32
    %v1792 = vpop.permute.xlu0 %1791
    %v1794 = vsel %vm384, %v1792, 0
    %1796 = vmatprep.subr.bf16.mxu0 0
    %1797 = vmatpush1.bf16.msra.mxu0 %v1030
    %1798 = vmatprep.subr.bf16.mxu0 0
    %1799 = vmatpush1.bf16.msra.mxu0 %v1031
    %1800 = vmatprep.subr.bf16.mxu0 0
    %1801 = vmatpush1.bf16.msra.mxu0 0
    %1802 = vmatprep.subr.bf16.mxu0 0
    %1803 = vmatpush1.bf16.msra.mxu0 0
    %1804 = vmatprep.subr.bf16.mxu0 0
    %1805 = vmatpush1.bf16.msra.mxu0 0
    %1806 = vmatprep.subr.bf16.mxu0 0
    %1807 = vmatpush1.bf16.msra.mxu0 0
    %1808 = vmatprep.subr.bf16.mxu0 0
    %1809 = vmatpush1.bf16.msra.mxu0 0
    %1810 = vmatprep.subr.bf16.mxu0 0
    %1811 = vmatpush1.bf16.msra.mxu0 0
    %1812 = vmatprep.subr.bf16.mxu0 0
    %1813 = vmatpush1.bf16.msra.mxu0 0
    %1814 = vmatprep.subr.bf16.mxu0 0
    %1815 = vmatpush1.bf16.msra.mxu0 0
    %1816 = vmatprep.subr.bf16.mxu0 0
    %1817 = vmatpush1.bf16.msra.mxu0 0
    %1818 = vmatprep.subr.bf16.mxu0 0
    %1819 = vmatpush1.bf16.msra.mxu0 0
    %1820 = vmatprep.subr.bf16.mxu0 0
    %1821 = vmatpush1.bf16.msra.mxu0 0
    %1822 = vmatprep.subr.bf16.mxu0 0
    %1823 = vmatpush1.bf16.msra.mxu0 0
    %1824 = vmatprep.subr.bf16.mxu0 0
    %1825 = vmatpush1.bf16.msra.mxu0 0
    %1826 = vmatprep.subr.bf16.mxu0 0
    %1827 = vmatpush1.bf16.msra.mxu0 0
    %1828 = vmatprep.mubr.bf16.mxu0 0
    %1829 = vmatmul.mubr.bf16.gmra.mrb[0].mxu0 %v1794
    %v1830 = vpop.f32.mrb[0].mxu0
    %v1831 = vadd.f32 %v112, %v1830
    %v1832 = vpop.f32.mrb[0].mxu0
    %v1833 = vpop.f32.mrb[0].mxu0
    %v1834 = vpop.f32.mrb[0].mxu0
    %1835 = vdwg.mxu0
    %v1836 = vmax.f32 %v1831, 0.0
    %v1837 = vld [vmem:[#allocation2] sm:$0xff]
    %1839 = vrot.lane.b32.xlu0 %v1837, 116
    %v1840 = vpop.permute.xlu0 %1839
    %v1842 = vmul.f32 %v1836, %v1840
    %1844 = vrot.lane.b32.xlu0 %v1842, 12
    %v1845 = vpop.permute.xlu0 %1844
    %vm1847 = vcmask 113760
    %1848 = vst.msk [vmem:[#allocation10] sm:$0xff] %vm1847, %v1845
    %v1849 = vpack.c.bf16 %v1842, %v1842
    %1850 = vrot.lane.b32.xlu0 %v1789, 34
    %v1851 = vpop.permute.xlu0 %1850
    %v1854 = vsel %vm932, %v1849, %v1851
    %v1855 = vsel %vm951, %v1854, 0
    %1857 = vmatprep.subr.bf16.mxu0 0
    %1858 = vmatpush1.bf16.msra.mxu0 %v946
    %1859 = vmatprep.subr.bf16.mxu0 0
    %1860 = vmatpush1.bf16.msra.mxu0 %v947
    %1861 = vmatprep.subr.bf16.mxu0 0
    %1862 = vmatpush1.bf16.msra.mxu0 %v956
    %1863 = vmatprep.subr.bf16.mxu0 0
    %1864 = vmatpush1.bf16.msra.mxu0 0
    %1865 = vmatprep.subr.bf16.mxu0 0
    %1866 = vmatpush1.bf16.msra.mxu0 0
    %1867 = vmatprep.subr.bf16.mxu0 0
    %1868 = vmatpush1.bf16.msra.mxu0 0
    %1869 = vmatprep.subr.bf16.mxu0 0
    %1870 = vmatpush1.bf16.msra.mxu0 0
    %1871 = vmatprep.subr.bf16.mxu0 0
    %1872 = vmatpush1.bf16.msra.mxu0 0
    %1873 = vmatprep.subr.bf16.mxu0 0
    %1874 = vmatpush1.bf16.msra.mxu0 0
    %1875 = vmatprep.subr.bf16.mxu0 0
    %1876 = vmatpush1.bf16.msra.mxu0 0
    %1877 = vmatprep.subr.bf16.mxu0 0
    %1878 = vmatpush1.bf16.msra.mxu0 0
    %1879 = vmatprep.subr.bf16.mxu0 0
    %1880 = vmatpush1.bf16.msra.mxu0 0
    %1881 = vmatprep.subr.bf16.mxu0 0
    %1882 = vmatpush1.bf16.msra.mxu0 0
    %1883 = vmatprep.subr.bf16.mxu0 0
    %1884 = vmatpush1.bf16.msra.mxu0 0
    %1885 = vmatprep.subr.bf16.mxu0 0
    %1886 = vmatpush1.bf16.msra.mxu0 0
    %1887 = vmatprep.subr.bf16.mxu0 0
    %1888 = vmatpush1.bf16.msra.mxu0 0
    %1889 = vmatprep.mubr.bf16.mxu0 0
    %1890 = vmatmul.mubr.bf16.gmra.mrb[0].mxu0 %v1855
    %v1891 = vpop.f32.mrb[0].mxu0
    %v1892 = vadd.f32 %v105, %v1891
    %v1893 = vpop.f32.mrb[0].mxu0
    %v1894 = vpop.f32.mrb[0].mxu0
    %v1895 = vpop.f32.mrb[0].mxu0
    %1896 = vdwg.mxu0
    %v1897 = vtanh.pop %v1892
    %v1898 = vmul.f32 %v1897, 0.5
    %v1899 = vadd.f32 %v1898, 0.5
    %v1900 = vmul.f32 %v1899, %v1782
    %1902 = vrot.lane.b32.xlu0 %v1897, 64
    %v1903 = vpop.permute.xlu0 %1902
    %v1905 = vmul.f32 %v1899, %v1903
    %1907 = vrot.lane.b32.xlu0 %v1905, 32
    %v1908 = vpop.permute.xlu0 %1907
    %v1910 = vadd.f32 %v1900, %v1908
    %v1911 = vtanh.pop %v1910
    %1913 = vrot.lane.b32.xlu0 %v1911, 64
    %v1914 = vpop.permute.xlu0 %1913
    %v1916 = vmul.f32 %v1899, %v1914
    %v1917 = vpack.c.bf16 %v1916, %v1916
    %1919 = vrot.lane.b32.xlu0 %v1917, 32
    %v1920 = vpop.permute.xlu0 %1919
    %v1922 = vsel %vm384, %v1920, 0
    %1924 = vmatprep.subr.bf16.mxu0 0
    %1925 = vmatpush1.bf16.msra.mxu0 %v1030
    %1926 = vmatprep.subr.bf16.mxu0 0
    %1927 = vmatpush1.bf16.msra.mxu0 %v1031
    %1928 = vmatprep.subr.bf16.mxu0 0
    %1929 = vmatpush1.bf16.msra.mxu0 0
    %1930 = vmatprep.subr.bf16.mxu0 0
    %1931 = vmatpush1.bf16.msra.mxu0 0
    %1932 = vmatprep.subr.bf16.mxu0 0
    %1933 = vmatpush1.bf16.msra.mxu0 0
    %1934 = vmatprep.subr.bf16.mxu0 0
    %1935 = vmatpush1.bf16.msra.mxu0 0
    %1936 = vmatprep.subr.bf16.mxu0 0
    %1937 = vmatpush1.bf16.msra.mxu0 0
    %1938 = vmatprep.subr.bf16.mxu0 0
    %1939 = vmatpush1.bf16.msra.mxu0 0
    %1940 = vmatprep.subr.bf16.mxu0 0
    %1941 = vmatpush1.bf16.msra.mxu0 0
    %1942 = vmatprep.subr.bf16.mxu0 0
    %1943 = vmatpush1.bf16.msra.mxu0 0
    %1944 = vmatprep.subr.bf16.mxu0 0
    %1945 = vmatpush1.bf16.msra.mxu0 0
    %1946 = vmatprep.subr.bf16.mxu0 0
    %1947 = vmatpush1.bf16.msra.mxu0 0
    %1948 = vmatprep.subr.bf16.mxu0 0
    %1949 = vmatpush1.bf16.msra.mxu0 0
    %1950 = vmatprep.subr.bf16.mxu0 0
    %1951 = vmatpush1.bf16.msra.mxu0 0
    %1952 = vmatprep.subr.bf16.mxu0 0
    %1953 = vmatpush1.bf16.msra.mxu0 0
    %1954 = vmatprep.subr.bf16.mxu0 0
    %1955 = vmatpush1.bf16.msra.mxu0 0
    %1956 = vmatprep.mubr.bf16.mxu0 0
    %1957 = vmatmul.mubr.bf16.gmra.mrb[0].mxu0 %v1922
    %v1958 = vpop.f32.mrb[0].mxu0
    %v1959 = vadd.f32 %v112, %v1958
    %v1960 = vpop.f32.mrb[0].mxu0
    %v1961 = vpop.f32.mrb[0].mxu0
    %v1962 = vpop.f32.mrb[0].mxu0
    %1963 = vdwg.mxu0
    %v1964 = vmax.f32 %v1959, 0.0
    %v1965 = vld [vmem:[#allocation2] sm:$0xff]
    %1967 = vrot.lane.b32.xlu0 %v1965, 114
    %v1968 = vpop.permute.xlu0 %1967
    %v1970 = vmul.f32 %v1964, %v1968
    %1972 = vrot.lane.b32.xlu0 %v1970, 14
    %v1973 = vpop.permute.xlu0 %1972
    %vm1975 = vcmask 130160
    %1976 = vst.msk [vmem:[#allocation10] sm:$0xff] %vm1975, %v1973
    %v1977 = vpack.c.bf16 %v1970, %v1970
    %1978 = vrot.lane.b32.xlu0 %v1917, 34
    %v1979 = vpop.permute.xlu0 %1978
    %v1982 = vsel %vm932, %v1977, %v1979
    %v1983 = vsel %vm951, %v1982, 0
    %1985 = vmatprep.subr.bf16.mxu0 0
    %1986 = vmatpush1.bf16.msra.mxu0 %v946
    %1987 = vmatprep.subr.bf16.mxu0 0
    %1988 = vmatpush1.bf16.msra.mxu0 %v947
    %1989 = vmatprep.subr.bf16.mxu0 0
    %1990 = vmatpush1.bf16.msra.mxu0 %v956
    %1991 = vmatprep.subr.bf16.mxu0 0
    %1992 = vmatpush1.bf16.msra.mxu0 0
    %1993 = vmatprep.subr.bf16.mxu0 0
    %1994 = vmatpush1.bf16.msra.mxu0 0
    %1995 = vmatprep.subr.bf16.mxu0 0
    %1996 = vmatpush1.bf16.msra.mxu0 0
    %1997 = vmatprep.subr.bf16.mxu0 0
    %1998 = vmatpush1.bf16.msra.mxu0 0
    %1999 = vmatprep.subr.bf16.mxu0 0
    %2000 = vmatpush1.bf16.msra.mxu0 0
    %2001 = vmatprep.subr.bf16.mxu0 0
    %2002 = vmatpush1.bf16.msra.mxu0 0
    %2003 = vmatprep.subr.bf16.mxu0 0
    %2004 = vmatpush1.bf16.msra.mxu0 0
    %2005 = vmatprep.subr.bf16.mxu0 0
    %2006 = vmatpush1.bf16.msra.mxu0 0
    %2007 = vmatprep.subr.bf16.mxu0 0
    %2008 = vmatpush1.bf16.msra.mxu0 0
    %2009 = vmatprep.subr.bf16.mxu0 0
    %2010 = vmatpush1.bf16.msra.mxu0 0
    %2011 = vmatprep.subr.bf16.mxu0 0
    %2012 = vmatpush1.bf16.msra.mxu0 0
    %2013 = vmatprep.subr.bf16.mxu0 0
    %2014 = vmatpush1.bf16.msra.mxu0 0
    %2015 = vmatprep.subr.bf16.mxu0 0
    %2016 = vmatpush1.bf16.msra.mxu0 0
    %2017 = vmatprep.mubr.bf16.mxu0 0
    %2018 = vmatmul.mubr.bf16.gmra.mrb[0].mxu0 %v1983
    %v2019 = vpop.f32.mrb[0].mxu0
    %v2020 = vadd.f32 %v105, %v2019
    %v2021 = vpop.f32.mrb[0].mxu0
    %v2022 = vpop.f32.mrb[0].mxu0
    %v2023 = vpop.f32.mrb[0].mxu0
    %2024 = vdwg.mxu0
    %v2025 = vtanh.pop %v2020
    %v2026 = vmul.f32 %v2025, 0.5
    %v2027 = vadd.f32 %v2026, 0.5
    %v2028 = vmul.f32 %v2027, %v1910
    %2030 = vrot.lane.b32.xlu0 %v2025, 64
    %v2031 = vpop.permute.xlu0 %2030
    %v2033 = vmul.f32 %v2027, %v2031
    %2035 = vrot.lane.b32.xlu0 %v2033, 32
    %v2036 = vpop.permute.xlu0 %2035
    %v2038 = vadd.f32 %v2028, %v2036
    %v2039 = vtanh.pop %v2038
    %2041 = vrot.lane.b32.xlu0 %v2039, 64
    %v2042 = vpop.permute.xlu0 %2041
    %v2044 = vmul.f32 %v2027, %v2042
    %v2045 = vpack.c.bf16 %v2044, %v2044
    %2047 = vrot.lane.b32.xlu0 %v2045, 32
    %v2048 = vpop.permute.xlu0 %2047
    %v2050 = vsel %vm384, %v2048, 0
    %2052 = vmatprep.subr.bf16.mxu0 0
    %2053 = vmatpush1.bf16.msra.mxu0 %v1030
    %2054 = vmatprep.subr.bf16.mxu0 0
    %2055 = vmatpush1.bf16.msra.mxu0 %v1031
    %2056 = vmatprep.subr.bf16.mxu0 0
    %2057 = vmatpush1.bf16.msra.mxu0 0
    %2058 = vmatprep.subr.bf16.mxu0 0
    %2059 = vmatpush1.bf16.msra.mxu0 0
    %2060 = vmatprep.subr.bf16.mxu0 0
    %2061 = vmatpush1.bf16.msra.mxu0 0
    %2062 = vmatprep.subr.bf16.mxu0 0
    %2063 = vmatpush1.bf16.msra.mxu0 0
    %2064 = vmatprep.subr.bf16.mxu0 0
    %2065 = vmatpush1.bf16.msra.mxu0 0
    %2066 = vmatprep.subr.bf16.mxu0 0
    %2067 = vmatpush1.bf16.msra.mxu0 0
    %2068 = vmatprep.subr.bf16.mxu0 0
    %2069 = vmatpush1.bf16.msra.mxu0 0
    %2070 = vmatprep.subr.bf16.mxu0 0
    %2071 = vmatpush1.bf16.msra.mxu0 0
    %2072 = vmatprep.subr.bf16.mxu0 0
    %2073 = vmatpush1.bf16.msra.mxu0 0
    %2074 = vmatprep.subr.bf16.mxu0 0
    %2075 = vmatpush1.bf16.msra.mxu0 0
    %2076 = vmatprep.subr.bf16.mxu0 0
    %2077 = vmatpush1.bf16.msra.mxu0 0
    %2078 = vmatprep.subr.bf16.mxu0 0
    %2079 = vmatpush1.bf16.msra.mxu0 0
    %2080 = vmatprep.subr.bf16.mxu0 0
    %2081 = vmatpush1.bf16.msra.mxu0 0
    %2082 = vmatprep.subr.bf16.mxu0 0
    %2083 = vmatpush1.bf16.msra.mxu0 0
    %2084 = vmatprep.mubr.bf16.mxu0 0
    %2085 = vmatmul.mubr.bf16.gmra.mrb[0].mxu0 %v2050
    %v2086 = vpop.f32.mrb[0].mxu0
    %v2087 = vadd.f32 %v112, %v2086
    %v2088 = vpop.f32.mrb[0].mxu0
    %v2089 = vpop.f32.mrb[0].mxu0
    %v2090 = vpop.f32.mrb[0].mxu0
    %2091 = vdwg.mxu0
    %v2092 = vmax.f32 %v2087, 0.0
    %v2093 = vld [vmem:[#allocation2] sm:$0xff]
    %2095 = vrot.lane.b32.xlu0 %v2093, 112
    %v2096 = vpop.permute.xlu0 %2095
    %v2098 = vmul.f32 %v2092, %v2096
    %2100 = vrot.lane.b32.xlu0 %v2098, 16
    %v2101 = vpop.permute.xlu0 %2100
    %vm2103 = vcmask 146560
    %2104 = vst.msk [vmem:[#allocation10] sm:$0xff] %vm2103, %v2101
    %v2105 = vpack.c.bf16 %v2098, %v2098
    %2106 = vrot.lane.b32.xlu0 %v2045, 34
    %v2107 = vpop.permute.xlu0 %2106
    %v2110 = vsel %vm932, %v2105, %v2107
    %v2111 = vsel %vm951, %v2110, 0
    %2113 = vmatprep.subr.bf16.mxu0 0
    %2114 = vmatpush1.bf16.msra.mxu0 %v946
    %2115 = vmatprep.subr.bf16.mxu0 0
    %2116 = vmatpush1.bf16.msra.mxu0 %v947
    %2117 = vmatprep.subr.bf16.mxu0 0
    %2118 = vmatpush1.bf16.msra.mxu0 %v956
    %2119 = vmatprep.subr.bf16.mxu0 0
    %2120 = vmatpush1.bf16.msra.mxu0 0
    %2121 = vmatprep.subr.bf16.mxu0 0
    %2122 = vmatpush1.bf16.msra.mxu0 0
    %2123 = vmatprep.subr.bf16.mxu0 0
    %2124 = vmatpush1.bf16.msra.mxu0 0
    %2125 = vmatprep.subr.bf16.mxu0 0
    %2126 = vmatpush1.bf16.msra.mxu0 0
    %2127 = vmatprep.subr.bf16.mxu0 0
    %2128 = vmatpush1.bf16.msra.mxu0 0
    %2129 = vmatprep.subr.bf16.mxu0 0
    %2130 = vmatpush1.bf16.msra.mxu0 0
    %2131 = vmatprep.subr.bf16.mxu0 0
    %2132 = vmatpush1.bf16.msra.mxu0 0
    %2133 = vmatprep.subr.bf16.mxu0 0
    %2134 = vmatpush1.bf16.msra.mxu0 0
    %2135 = vmatprep.subr.bf16.mxu0 0
    %2136 = vmatpush1.bf16.msra.mxu0 0
    %2137 = vmatprep.subr.bf16.mxu0 0
    %2138 = vmatpush1.bf16.msra.mxu0 0
    %2139 = vmatprep.subr.bf16.mxu0 0
    %2140 = vmatpush1.bf16.msra.mxu0 0
    %2141 = vmatprep.subr.bf16.mxu0 0
    %2142 = vmatpush1.bf16.msra.mxu0 0
    %2143 = vmatprep.subr.bf16.mxu0 0
    %2144 = vmatpush1.bf16.msra.mxu0 0
    %2145 = vmatprep.mubr.bf16.mxu0 0
    %2146 = vmatmul.mubr.bf16.gmra.mrb[0].mxu0 %v2111
    %v2147 = vpop.f32.mrb[0].mxu0
    %v2148 = vadd.f32 %v105, %v2147
    %v2149 = vpop.f32.mrb[0].mxu0
    %v2150 = vpop.f32.mrb[0].mxu0
    %v2151 = vpop.f32.mrb[0].mxu0
    %2152 = vdwg.mxu0
    %v2153 = vtanh.pop %v2148
    %v2154 = vmul.f32 %v2153, 0.5
    %v2155 = vadd.f32 %v2154, 0.5
    %v2156 = vmul.f32 %v2155, %v2038
    %2158 = vrot.lane.b32.xlu0 %v2153, 64
    %v2159 = vpop.permute.xlu0 %2158
    %v2161 = vmul.f32 %v2155, %v2159
    %2163 = vrot.lane.b32.xlu0 %v2161, 32
    %v2164 = vpop.permute.xlu0 %2163
    %v2166 = vadd.f32 %v2156, %v2164
    %v2167 = vtanh.pop %v2166
    %2169 = vrot.lane.b32.xlu0 %v2167, 64
    %v2170 = vpop.permute.xlu0 %2169
    %v2172 = vmul.f32 %v2155, %v2170
    %v2173 = vpack.c.bf16 %v2172, %v2172
    %2175 = vrot.lane.b32.xlu0 %v2173, 32
    %v2176 = vpop.permute.xlu0 %2175
    %v2178 = vsel %vm384, %v2176, 0
    %2180 = vmatprep.subr.bf16.mxu0 0
    %2181 = vmatpush1.bf16.msra.mxu0 %v1030
    %2182 = vmatprep.subr.bf16.mxu0 0
    %2183 = vmatpush1.bf16.msra.mxu0 %v1031
    %2184 = vmatprep.subr.bf16.mxu0 0
    %2185 = vmatpush1.bf16.msra.mxu0 0
    %2186 = vmatprep.subr.bf16.mxu0 0
    %2187 = vmatpush1.bf16.msra.mxu0 0
    %2188 = vmatprep.subr.bf16.mxu0 0
    %2189 = vmatpush1.bf16.msra.mxu0 0
    %2190 = vmatprep.subr.bf16.mxu0 0
    %2191 = vmatpush1.bf16.msra.mxu0 0
    %2192 = vmatprep.subr.bf16.mxu0 0
    %2193 = vmatpush1.bf16.msra.mxu0 0
    %2194 = vmatprep.subr.bf16.mxu0 0
    %2195 = vmatpush1.bf16.msra.mxu0 0
    %2196 = vmatprep.subr.bf16.mxu0 0
    %2197 = vmatpush1.bf16.msra.mxu0 0
    %2198 = vmatprep.subr.bf16.mxu0 0
    %2199 = vmatpush1.bf16.msra.mxu0 0
    %2200 = vmatprep.subr.bf16.mxu0 0
    %2201 = vmatpush1.bf16.msra.mxu0 0
    %2202 = vmatprep.subr.bf16.mxu0 0
    %2203 = vmatpush1.bf16.msra.mxu0 0
    %2204 = vmatprep.subr.bf16.mxu0 0
    %2205 = vmatpush1.bf16.msra.mxu0 0
    %2206 = vmatprep.subr.bf16.mxu0 0
    %2207 = vmatpush1.bf16.msra.mxu0 0
    %2208 = vmatprep.subr.bf16.mxu0 0
    %2209 = vmatpush1.bf16.msra.mxu0 0
    %2210 = vmatprep.subr.bf16.mxu0 0
    %2211 = vmatpush1.bf16.msra.mxu0 0
    %2212 = vmatprep.mubr.bf16.mxu0 0
    %2213 = vmatmul.mubr.bf16.gmra.mrb[0].mxu0 %v2178
    %v2214 = vpop.f32.mrb[0].mxu0
    %v2215 = vadd.f32 %v112, %v2214
    %v2216 = vpop.f32.mrb[0].mxu0
    %v2217 = vpop.f32.mrb[0].mxu0
    %v2218 = vpop.f32.mrb[0].mxu0
    %2219 = vdwg.mxu0
    %v2220 = vmax.f32 %v2215, 0.0
    %v2221 = vld [vmem:[#allocation2] sm:$0xff]
    %2223 = vrot.lane.b32.xlu0 %v2221, 110
    %v2224 = vpop.permute.xlu0 %2223
    %v2226 = vmul.f32 %v2220, %v2224
    %2228 = vrot.lane.b32.xlu0 %v2226, 18
    %v2229 = vpop.permute.xlu0 %2228
    %vm2231 = vcmask 162960
    %2232 = vst.msk [vmem:[#allocation10] sm:$0xff] %vm2231, %v2229
    %v2233 = vpack.c.bf16 %v2226, %v2226
    %2234 = vrot.lane.b32.xlu0 %v2173, 34
    %v2235 = vpop.permute.xlu0 %2234
    %v2238 = vsel %vm932, %v2233, %v2235
    %v2239 = vsel %vm951, %v2238, 0
    %2241 = vmatprep.subr.bf16.mxu0 0
    %2242 = vmatpush1.bf16.msra.mxu0 %v946
    %2243 = vmatprep.subr.bf16.mxu0 0
    %2244 = vmatpush1.bf16.msra.mxu0 %v947
    %2245 = vmatprep.subr.bf16.mxu0 0
    %2246 = vmatpush1.bf16.msra.mxu0 %v956
    %2247 = vmatprep.subr.bf16.mxu0 0
    %2248 = vmatpush1.bf16.msra.mxu0 0
    %2249 = vmatprep.subr.bf16.mxu0 0
    %2250 = vmatpush1.bf16.msra.mxu0 0
    %2251 = vmatprep.subr.bf16.mxu0 0
    %2252 = vmatpush1.bf16.msra.mxu0 0
    %2253 = vmatprep.subr.bf16.mxu0 0
    %2254 = vmatpush1.bf16.msra.mxu0 0
    %2255 = vmatprep.subr.bf16.mxu0 0
    %2256 = vmatpush1.bf16.msra.mxu0 0
    %2257 = vmatprep.subr.bf16.mxu0 0
    %2258 = vmatpush1.bf16.msra.mxu0 0
    %2259 = vmatprep.subr.bf16.mxu0 0
    %2260 = vmatpush1.bf16.msra.mxu0 0
    %2261 = vmatprep.subr.bf16.mxu0 0
    %2262 = vmatpush1.bf16.msra.mxu0 0
    %2263 = vmatprep.subr.bf16.mxu0 0
    %2264 = vmatpush1.bf16.msra.mxu0 0
    %2265 = vmatprep.subr.bf16.mxu0 0
    %2266 = vmatpush1.bf16.msra.mxu0 0
    %2267 = vmatprep.subr.bf16.mxu0 0
    %2268 = vmatpush1.bf16.msra.mxu0 0
    %2269 = vmatprep.subr.bf16.mxu0 0
    %2270 = vmatpush1.bf16.msra.mxu0 0
    %2271 = vmatprep.subr.bf16.mxu0 0
    %2272 = vmatpush1.bf16.msra.mxu0 0
    %2273 = vmatprep.mubr.bf16.mxu0 0
    %2274 = vmatmul.mubr.bf16.gmra.mrb[0].mxu0 %v2239
    %v2275 = vpop.f32.mrb[0].mxu0
    %v2276 = vadd.f32 %v105, %v2275
    %v2277 = vpop.f32.mrb[0].mxu0
    %v2278 = vpop.f32.mrb[0].mxu0
    %v2279 = vpop.f32.mrb[0].mxu0
    %2280 = vdwg.mxu0
    %v2281 = vtanh.pop %v2276
    %v2282 = vmul.f32 %v2281, 0.5
    %v2283 = vadd.f32 %v2282, 0.5
    %v2284 = vmul.f32 %v2283, %v2166
    %2286 = vrot.lane.b32.xlu0 %v2281, 64
    %v2287 = vpop.permute.xlu0 %2286
    %v2289 = vmul.f32 %v2283, %v2287
    %2291 = vrot.lane.b32.xlu0 %v2289, 32
    %v2292 = vpop.permute.xlu0 %2291
    %v2294 = vadd.f32 %v2284, %v2292
    %v2295 = vtanh.pop %v2294
    %2297 = vrot.lane.b32.xlu0 %v2295, 64
    %v2298 = vpop.permute.xlu0 %2297
    %v2300 = vmul.f32 %v2283, %v2298
    %v2301 = vpack.c.bf16 %v2300, %v2300
    %2303 = vrot.lane.b32.xlu0 %v2301, 32
    %v2304 = vpop.permute.xlu0 %2303
    %v2306 = vsel %vm384, %v2304, 0
    %2308 = vmatprep.subr.bf16.mxu0 0
    %2309 = vmatpush1.bf16.msra.mxu0 %v1030
    %2310 = vmatprep.subr.bf16.mxu0 0
    %2311 = vmatpush1.bf16.msra.mxu0 %v1031
    %2312 = vmatprep.subr.bf16.mxu0 0
    %2313 = vmatpush1.bf16.msra.mxu0 0
    %2314 = vmatprep.subr.bf16.mxu0 0
    %2315 = vmatpush1.bf16.msra.mxu0 0
    %2316 = vmatprep.subr.bf16.mxu0 0
    %2317 = vmatpush1.bf16.msra.mxu0 0
    %2318 = vmatprep.subr.bf16.mxu0 0
    %2319 = vmatpush1.bf16.msra.mxu0 0
    %2320 = vmatprep.subr.bf16.mxu0 0
    %2321 = vmatpush1.bf16.msra.mxu0 0
    %2322 = vmatprep.subr.bf16.mxu0 0
    %2323 = vmatpush1.bf16.msra.mxu0 0
    %2324 = vmatprep.subr.bf16.mxu0 0
    %2325 = vmatpush1.bf16.msra.mxu0 0
    %2326 = vmatprep.subr.bf16.mxu0 0
    %2327 = vmatpush1.bf16.msra.mxu0 0
    %2328 = vmatprep.subr.bf16.mxu0 0
    %2329 = vmatpush1.bf16.msra.mxu0 0
    %2330 = vmatprep.subr.bf16.mxu0 0
    %2331 = vmatpush1.bf16.msra.mxu0 0
    %2332 = vmatprep.subr.bf16.mxu0 0
    %2333 = vmatpush1.bf16.msra.mxu0 0
    %2334 = vmatprep.subr.bf16.mxu0 0
    %2335 = vmatpush1.bf16.msra.mxu0 0
    %2336 = vmatprep.subr.bf16.mxu0 0
    %2337 = vmatpush1.bf16.msra.mxu0 0
    %2338 = vmatprep.subr.bf16.mxu0 0
    %2339 = vmatpush1.bf16.msra.mxu0 0
    %2340 = vmatprep.mubr.bf16.mxu0 0
    %2341 = vmatmul.mubr.bf16.gmra.mrb[0].mxu0 %v2306
    %v2342 = vpop.f32.mrb[0].mxu0
    %v2343 = vadd.f32 %v112, %v2342
    %v2344 = vpop.f32.mrb[0].mxu0
    %v2345 = vpop.f32.mrb[0].mxu0
    %v2346 = vpop.f32.mrb[0].mxu0
    %2347 = vdwg.mxu0
    %v2348 = vmax.f32 %v2343, 0.0
    %v2349 = vld [vmem:[#allocation2] sm:$0xff]
    %2351 = vrot.lane.b32.xlu0 %v2349, 108
    %v2352 = vpop.permute.xlu0 %2351
    %v2354 = vmul.f32 %v2348, %v2352
    %2356 = vrot.lane.b32.xlu0 %v2354, 20
    %v2357 = vpop.permute.xlu0 %2356
    %vm2359 = vcmask 179360
    %2360 = vst.msk [vmem:[#allocation10] sm:$0xff] %vm2359, %v2357
    %v2361 = vpack.c.bf16 %v2354, %v2354
    %2362 = vrot.lane.b32.xlu0 %v2301, 34
    %v2363 = vpop.permute.xlu0 %2362
    %v2366 = vsel %vm932, %v2361, %v2363
    %v2367 = vsel %vm951, %v2366, 0
    %2369 = vmatprep.subr.bf16.mxu0 0
    %2370 = vmatpush1.bf16.msra.mxu0 %v946
    %2371 = vmatprep.subr.bf16.mxu0 0
    %2372 = vmatpush1.bf16.msra.mxu0 %v947
    %2373 = vmatprep.subr.bf16.mxu0 0
    %2374 = vmatpush1.bf16.msra.mxu0 %v956
    %2375 = vmatprep.subr.bf16.mxu0 0
    %2376 = vmatpush1.bf16.msra.mxu0 0
    %2377 = vmatprep.subr.bf16.mxu0 0
    %2378 = vmatpush1.bf16.msra.mxu0 0
    %2379 = vmatprep.subr.bf16.mxu0 0
    %2380 = vmatpush1.bf16.msra.mxu0 0
    %2381 = vmatprep.subr.bf16.mxu0 0
    %2382 = vmatpush1.bf16.msra.mxu0 0
    %2383 = vmatprep.subr.bf16.mxu0 0
    %2384 = vmatpush1.bf16.msra.mxu0 0
    %2385 = vmatprep.subr.bf16.mxu0 0
    %2386 = vmatpush1.bf16.msra.mxu0 0
    %2387 = vmatprep.subr.bf16.mxu0 0
    %2388 = vmatpush1.bf16.msra.mxu0 0
    %2389 = vmatprep.subr.bf16.mxu0 0
    %2390 = vmatpush1.bf16.msra.mxu0 0
    %2391 = vmatprep.subr.bf16.mxu0 0
    %2392 = vmatpush1.bf16.msra.mxu0 0
    %2393 = vmatprep.subr.bf16.mxu0 0
    %2394 = vmatpush1.bf16.msra.mxu0 0
    %2395 = vmatprep.subr.bf16.mxu0 0
    %2396 = vmatpush1.bf16.msra.mxu0 0
    %2397 = vmatprep.subr.bf16.mxu0 0
    %2398 = vmatpush1.bf16.msra.mxu0 0
    %2399 = vmatprep.subr.bf16.mxu0 0
    %2400 = vmatpush1.bf16.msra.mxu0 0
    %2401 = vmatprep.mubr.bf16.mxu0 0
    %2402 = vmatmul.mubr.bf16.gmra.mrb[0].mxu0 %v2367
    %v2403 = vpop.f32.mrb[0].mxu0
    %v2404 = vadd.f32 %v105, %v2403
    %v2405 = vpop.f32.mrb[0].mxu0
    %v2406 = vpop.f32.mrb[0].mxu0
    %v2407 = vpop.f32.mrb[0].mxu0
    %2408 = vdwg.mxu0
    %v2409 = vtanh.pop %v2404
    %v2410 = vmul.f32 %v2409, 0.5
    %v2411 = vadd.f32 %v2410, 0.5
    %v2412 = vmul.f32 %v2411, %v2294
    %2414 = vrot.lane.b32.xlu0 %v2409, 64
    %v2415 = vpop.permute.xlu0 %2414
    %v2417 = vmul.f32 %v2411, %v2415
    %2419 = vrot.lane.b32.xlu0 %v2417, 32
    %v2420 = vpop.permute.xlu0 %2419
    %v2422 = vadd.f32 %v2412, %v2420
    %v2423 = vtanh.pop %v2422
    %2425 = vrot.lane.b32.xlu0 %v2423, 64
    %v2426 = vpop.permute.xlu0 %2425
    %v2428 = vmul.f32 %v2411, %v2426
    %v2429 = vpack.c.bf16 %v2428, %v2428
    %2431 = vrot.lane.b32.xlu0 %v2429, 32
    %v2432 = vpop.permute.xlu0 %2431
    %v2434 = vsel %vm384, %v2432, 0
    %2436 = vmatprep.subr.bf16.mxu0 0
    %2437 = vmatpush1.bf16.msra.mxu0 %v1030
    %2438 = vmatprep.subr.bf16.mxu0 0
    %2439 = vmatpush1.bf16.msra.mxu0 %v1031
    %2440 = vmatprep.subr.bf16.mxu0 0
    %2441 = vmatpush1.bf16.msra.mxu0 0
    %2442 = vmatprep.subr.bf16.mxu0 0
    %2443 = vmatpush1.bf16.msra.mxu0 0
    %2444 = vmatprep.subr.bf16.mxu0 0
    %2445 = vmatpush1.bf16.msra.mxu0 0
    %2446 = vmatprep.subr.bf16.mxu0 0
    %2447 = vmatpush1.bf16.msra.mxu0 0
    %2448 = vmatprep.subr.bf16.mxu0 0
    %2449 = vmatpush1.bf16.msra.mxu0 0
    %2450 = vmatprep.subr.bf16.mxu0 0
    %2451 = vmatpush1.bf16.msra.mxu0 0
    %2452 = vmatprep.subr.bf16.mxu0 0
    %2453 = vmatpush1.bf16.msra.mxu0 0
    %2454 = vmatprep.subr.bf16.mxu0 0
    %2455 = vmatpush1.bf16.msra.mxu0 0
    %2456 = vmatprep.subr.bf16.mxu0 0
    %2457 = vmatpush1.bf16.msra.mxu0 0
    %2458 = vmatprep.subr.bf16.mxu0 0
    %2459 = vmatpush1.bf16.msra.mxu0 0
    %2460 = vmatprep.subr.bf16.mxu0 0
    %2461 = vmatpush1.bf16.msra.mxu0 0
    %2462 = vmatprep.subr.bf16.mxu0 0
    %2463 = vmatpush1.bf16.msra.mxu0 0
    %2464 = vmatprep.subr.bf16.mxu0 0
    %2465 = vmatpush1.bf16.msra.mxu0 0
    %2466 = vmatprep.subr.bf16.mxu0 0
    %2467 = vmatpush1.bf16.msra.mxu0 0
    %2468 = vmatprep.mubr.bf16.mxu0 0
    %2469 = vmatmul.mubr.bf16.gmra.mrb[0].mxu0 %v2434
    %v2470 = vpop.f32.mrb[0].mxu0
    %v2471 = vadd.f32 %v112, %v2470
    %v2472 = vpop.f32.mrb[0].mxu0
    %v2473 = vpop.f32.mrb[0].mxu0
    %v2474 = vpop.f32.mrb[0].mxu0
    %2475 = vdwg.mxu0
    %v2476 = vmax.f32 %v2471, 0.0
    %v2477 = vld [vmem:[#allocation2] sm:$0xff]
    %2479 = vrot.lane.b32.xlu0 %v2477, 106
    %v2480 = vpop.permute.xlu0 %2479
    %v2482 = vmul.f32 %v2476, %v2480
    %2484 = vrot.lane.b32.xlu0 %v2482, 22
    %v2485 = vpop.permute.xlu0 %2484
    %vm2487 = vcmask 195760
    %2488 = vst.msk [vmem:[#allocation10] sm:$0xff] %vm2487, %v2485
    // Predicated region
    $region54: #{tpu_custom_call.1} parent=1 // pred_check
      _
    $region55: #{tpu_custom_call.1} parent=1 // pred_check_branch
      %2490 = sbr.rel (0) target = $region57
    $region56: #{tpu_custom_call.1} parent=1 // pred_region
      %s2492 = ssub.s32 128, 128
      %2493 = vsyncadd [#allocation4], %s2492
      %s2495 = sshll.u32 [#allocation10], 4
      %s2496 = int_to_ptr.vmem [resolvable:$true] %s2495
      %2498 = dma.vmem_to_hbm [thread:$0]  %s2496, 128, %s9, [#allocation4]
    $region57: #{tpu_custom_call.1} parent=1 // pred_fallthru
      _
    // Predicated region
    $region58: #{tpu_custom_call.1} parent=1 // pred_check
      _
    $region59: #{tpu_custom_call.1} parent=1 // pred_check_branch
      %2500 = sbr.rel (0) target = $region61
    $region60: #{tpu_custom_call.1} parent=1 // pred_region
      %2501 = dma.done [#allocation4], 128
    $region61: #{tpu_custom_call.1} parent=1 // pred_fallthru
      _
    %2502 = vsyncpa [#allocation3], 1
    %2503 = vsyncpa [#allocation6], 1
    %2504 = vsyncpa [#allocation9], 1
    %2505 = vsyncpa [#allocation4], 1

</llo_original>
